<compile_context>
chip_gen: v7x
topology: tpu7x:2x2x1
jax: 0.10.0
libtpu: 0.0.40
codegen_flags: <defaults>
</compile_context>

<pallas_src>
import functools

import jax
import jax.numpy as jnp
import numpy as np
from jax import lax
from jax.experimental import pallas as pl
from jax.experimental.pallas import tpu as pltpu


# ------------------------------ small helpers ------------------------------

def _round_up(x, m):
    return (x + m - 1) // m * m


def _sigmoid(x):
    # sigmoid(x) = 0.5*(tanh(0.5x)+1): one EUP transcendental instead of exp + reciprocal.
    return 0.5 * jnp.tanh(0.5 * x) + 0.5


def _pad_gate_cols(w, h, h_pad):
    """(rows, 4*h) -> (rows, 4*h_pad): zero-pad each PyTorch gate block (i,f,g,o) separately."""
    rows = w.shape[0]
    w4 = jnp.pad(w.reshape(rows, 4, h), ((0, 0), (0, 0), (0, h_pad - h)))
    return w4.reshape(rows, 4 * h_pad)


def _pad_rows(w, r, r_pad):
    return jnp.pad(w, ((0, r_pad - r), (0, 0)))


def _auto_time_block(T, B, d_in, H):
    """Pick the time block so gx + double-buffered x / h_seq blocks fit ~24 MiB."""
    per_t = B * (4 * H * 2 + 2 * d_in * 2 + 2 * H * 2)
    return int(max(1, min(T, (24 << 20) // max(per_t, 1))))


def _vmem_limit_bytes(rows, d_in, H, B, C):
    """Working-set estimate for one layer call (2x margin + slack, clamped)."""
    gx = rows * 4 * H * 2                       # bf16 gx scratch
    x_in = 2 * rows * d_in * 2                  # double-buffered x block (bf16)
    if C is None:
        out = 2 * rows * H * 2                  # double-buffered h_seq block (bf16)
        dec_w = 0
    else:
        out = 2 * B * C * 4                     # logits block (f32)
        dec_w = H * C * 2 + C * 4               # decoder weights
    weights = d_in * 4 * H * 2 + H * 4 * H * 2 + 4 * H * 4 + dec_w
    state = 2 * B * H * 4 + B * 4               # h/c scratch + lengths
    total = gx + x_in + out + weights + state
    return int(min(100 << 20, max(16 << 20, 2 * total + (8 << 20))))


def _invariant_spec(shape):
    """Grid-invariant operand: same block every grid step, single-buffered (saves VMEM)."""
    zero = (0,) * len(shape)
    return pl.BlockSpec(shape, lambda t, n: zero, pipeline_mode=pl.Buffered(1))


# ----------------------------- Pallas kernel ------------------------------

def _lstm_layer_kernel(*refs, fuse_decoder: bool):
    """One time block of one LSTM layer.

    refs layout (after the scalar-prefetch ref):
      fuse_decoder=False: (nsteps, x, lengths, W_ih^T, W_hh^T, bias, h_seq_out, gx, h, c)
      fuse_decoder=True : (nsteps, x, lengths, W_ih^T, W_hh^T, bias, W_dec^T, b_dec,
                           logits_out, gx, h, c)

    x is a time-major 2-D block (Tt*B, D_in) bf16 with row = t_local*B + b.  h/c scratch persist
    across grid steps, carrying the recurrence across time blocks.
    """
    if fuse_decoder:
        (nsteps_ref, x_ref, len_ref, wih_ref, whh_ref, b_ref,
         wdec_ref, bdec_ref, out_ref, gx_sc, h_sc, c_sc) = refs
    else:
        (nsteps_ref, x_ref, len_ref, wih_ref, whh_ref, b_ref,
         out_ref, gx_sc, h_sc, c_sc) = refs

    B = len_ref.shape[0]
    H = whh_ref.shape[0]
    t_block = x_ref.shape[0] // B

    t_blk = pl.program_id(0)
    n_blk = pl.num_programs(0)
    t_start = t_blk * t_block
    max_len = nsteps_ref[0]                       # longest sequence (scalar prefetch, SMEM)

    @pl.when(t_blk == 0)
    def _init():
        h_sc[...] = jnp.zeros_like(h_sc)
        c_sc[...] = jnp.zeros_like(c_sc)

    # Skip whole time blocks that lie entirely past the longest sequence.
    @pl.when(t_start < max_len)
    def _block():
        # Phase 1: non-recurrent input projection, one big bf16 MXU matmul over Tt*B rows.
        gx_sc[...] = (jnp.dot(x_ref[...], wih_ref[...],
                              preferred_element_type=jnp.float32)
                      + b_ref[...]).astype(gx_sc.dtype)       # (Tt*B, 4H) bf16, gates i,f,g,o

        lengths = len_ref[...]                                # (B, 1) int32

        # Phase 2: sequential recurrence; only h @ W_hh^T is on the serial critical path.
        def step(tl, carry):
            h, c = carry                                      # (B, H) f32
            row = pl.multiple_of(tl * B, B)                   # B is a multiple of 16 -> aligned
            gates = (gx_sc[pl.ds(row, B), :].astype(jnp.float32)
                     + jnp.dot(h.astype(jnp.bfloat16), whh_ref[...],
                               preferred_element_type=jnp.float32))   # (B, 4H) f32

            i_g = _sigmoid(gates[:, 0 * H:1 * H])
            f_g = _sigmoid(gates[:, 1 * H:2 * H])
            g_g = jnp.tanh(gates[:, 2 * H:3 * H])
            o_g = _sigmoid(gates[:, 3 * H:4 * H])

            c_new = f_g * c + i_g * g_g
            h_new = o_g * jnp.tanh(c_new)

            # pack_padded_sequence semantics: freeze state once t >= length[b].
            live = (t_start + tl) < lengths                   # (B, 1) bool
            h = jnp.where(live, h_new, h)
            c = jnp.where(live, c_new, c)

            if not fuse_decoder:
                out_ref[pl.ds(row, B), :] = h.astype(out_ref.dtype)   # bf16 hidden sequence
            return h, c

        unroll = t_block if t_block <= 8 else 8
        h_n, c_n = lax.fori_loop(0, t_block, step, (h_sc[...], c_sc[...]), unroll=unroll)
        h_sc[...] = h_n
        c_sc[...] = c_n

    if fuse_decoder:
        @pl.when(t_blk == n_blk - 1)
        def _decode():
            out_ref[...] = (jnp.dot(h_sc[...].astype(jnp.bfloat16), wdec_ref[...],
                                    preferred_element_type=jnp.float32)
                            + bdec_ref[...])


# ------------------------------ layer wrapper -------------------------------

def _lstm_layer_call(x2d, lengths, nsteps, layer, *, t_block, w_dec_t=None, b_dec=None):
    """Run one LSTM layer (optionally with the fused decoder) as a single pallas_call."""
    TB, d_in = x2d.shape
    B = lengths.shape[0]
    H = layer["whh_t"].shape[0]
    T = TB // B
    n_blk = T // t_block
    rows = t_block * B
    fuse = w_dec_t is not None
    C = w_dec_t.shape[1] if fuse else None

    in_specs = [
        pl.BlockSpec((rows, d_in), lambda t, n: (t, 0)),      # x block (double-buffered DMA)
        _invariant_spec((B, 1)),                              # lengths
        _invariant_spec((d_in, 4 * H)),                       # W_ih^T (bf16)
        _invariant_spec((H, 4 * H)),                          # W_hh^T (bf16)
        _invariant_spec((1, 4 * H)),                          # fused bias (f32)
    ]
    args = [nsteps, x2d, lengths, layer["wih_t"], layer["whh_t"], layer["bias"]]
    if fuse:
        in_specs += [_invariant_spec((H, C)), _invariant_spec((1, C))]
        args += [w_dec_t, b_dec]
        out_spec = pl.BlockSpec((B, C), lambda t, n: (0, 0))
        out_shape = jax.ShapeDtypeStruct((B, C), jnp.float32)
    else:
        out_spec = pl.BlockSpec((rows, H), lambda t, n: (t, 0))
        out_shape = jax.ShapeDtypeStruct((TB, H), jnp.bfloat16)

    grid_spec = pltpu.PrefetchScalarGridSpec(
        num_scalar_prefetch=1,                   # max sequence length -> SMEM
        grid=(n_blk,),
        in_specs=in_specs,
        out_specs=out_spec,
        scratch_shapes=[
            pltpu.VMEM((rows, 4 * H), jnp.bfloat16),   # gx: precomputed input projection
            pltpu.VMEM((B, H), jnp.float32),           # h (persists across time blocks)
            pltpu.VMEM((B, H), jnp.float32),           # c (persists across time blocks)
        ],
    )
    kernel = functools.partial(_lstm_layer_kernel, fuse_decoder=fuse)
    return pl.pallas_call(
        kernel,
        out_shape=out_shape,
        grid_spec=grid_spec,
        compiler_params=pltpu.CompilerParams(
            dimension_semantics=("arbitrary",),          # sequential recurrence over time blocks
            vmem_limit_bytes=_vmem_limit_bytes(rows, d_in, H, B, C),
        ),
    )(*args)


# --------------------------- Model (glue + params) -------------------------

def init_params(key, vocab, embed_size, hidden_size, n_layers, class_num):
    """Weights stored pre-padded: B-independent dims to lane multiples (exact zero padding)."""
    E, H, C = embed_size, hidden_size, class_num
    E_pad, H_pad, C_pad = _round_up(E, 128), _round_up(H, 128), _round_up(C, 128)

    keys = jax.random.split(key, 2 + n_layers)
    k = 1.0 / np.sqrt(hidden_size)

    embed = jax.random.normal(keys[0], (vocab, E), jnp.float32)
    params = {
        "embed": jnp.pad(embed, ((0, 0), (0, E_pad - E))).astype(jnp.bfloat16),
    }

    layers = []
    for l in range(n_layers):
        d_in, d_in_pad = (E, E_pad) if l == 0 else (H, H_pad)
        k0, k1, k2, k3 = jax.random.split(keys[1 + l], 4)
        w_ih = jax.random.uniform(k0, (4 * H, d_in), jnp.float32, -k, k)
        w_hh = jax.random.uniform(k1, (4 * H, H), jnp.float32, -k, k)
        b_ih = jax.random.uniform(k2, (4 * H,), jnp.float32, -k, k)
        b_hh = jax.random.uniform(k3, (4 * H,), jnp.float32, -k, k)
        wih_t = _pad_rows(_pad_gate_cols(w_ih.T, H, H_pad), d_in, d_in_pad)
        whh_t = _pad_rows(_pad_gate_cols(w_hh.T, H, H_pad), H, H_pad)
        bias = _pad_gate_cols((b_ih + b_hh).reshape(1, 4 * H), H, H_pad)
        layers.append(dict(
            wih_t=wih_t.astype(jnp.bfloat16),        # (D_in_pad, 4*H_pad) bf16 (MXU native)
            whh_t=whh_t.astype(jnp.bfloat16),        # (H_pad,   4*H_pad) bf16
            bias=bias,                               # (1,       4*H_pad) f32
        ))
    params["layers"] = layers

    kd0, kd1 = jax.random.split(keys[-1], 2)
    w_dec = jax.random.uniform(kd0, (C, H), jnp.float32, -k, k)     # torch Linear layout (C, H)
    b_dec = jax.random.uniform(kd1, (C,), jnp.float32, -k, k)
    params["w_dec_t"] = jnp.pad(w_dec.T, ((0, H_pad - H), (0, C_pad - C))).astype(jnp.bfloat16)
    params["b_dec"] = jnp.pad(b_dec.reshape(1, C), ((0, 0), (0, C_pad - C)))
    return params


@functools.partial(jax.jit, static_argnames=("class_num", "time_block"))
def lstm_forward(params, x_idx, x_length, *, class_num, time_block=None):
    B, T = x_idx.shape
    E_pad = params["embed"].shape[1]
    H_pad = params["layers"][0]["whh_t"].shape[0]

    B_pad = _round_up(B, 16)                       # 16: bf16 sublane packing -> aligned slices
    if time_block is None:
        time_block = _auto_time_block(T, B_pad, max(E_pad, H_pad), H_pad)
    T_pad = _round_up(T, time_block)

    # Pad tokens / lengths; padded rows get length 0 so their state stays frozen at zero.
    idx = jnp.zeros((B_pad, T_pad), jnp.int32).at[:B, :T].set(x_idx.astype(jnp.int32))
    lengths = jnp.zeros((B_pad, 1), jnp.int32).at[:B, 0].set(x_length.astype(jnp.int32))
    nsteps = jnp.max(lengths).reshape(1)           # (1,) int32 scalar prefetch: longest sequence

    # Frozen bf16 embedding gather, emitted directly as the time-major slab (row = t*B + b).
    x2d = jnp.take(params["embed"], idx.T.reshape(-1), axis=0)    # (T_pad*B_pad, E_pad) bf16

    n_layers = len(params["layers"])
    logits = None
    for li, layer in enumerate(params["layers"]):
        if li < n_layers - 1:
            x2d = _lstm_layer_call(x2d, lengths, nsteps, layer, t_block=time_block)
        else:
            logits = _lstm_layer_call(x2d, lengths, nsteps, layer, t_block=time_block,
                                      w_dec_t=params["w_dec_t"], b_dec=params["b_dec"])
    return logits[:B, :class_num]


# Pure-JAX reference (same math / same bf16 casts & rounding) for the correctness check.
def lstm_forward_ref(params, x_idx, x_length, *, class_num):
    B, T = x_idx.shape
    B_pad = _round_up(B, 16)
    idx = jnp.zeros((B_pad, T), jnp.int32).at[:B, :].set(x_idx.astype(jnp.int32))
    lengths = jnp.zeros((B_pad, 1), jnp.int32).at[:B, 0].set(x_length.astype(jnp.int32))

    x_seq = jnp.transpose(jnp.take(params["embed"], idx, axis=0), (1, 0, 2))   # (T, B_pad, E_pad)
    h_n = None
    for layer in params["layers"]:
        H = layer["whh_t"].shape[0]
        h = jnp.zeros((B_pad, H), jnp.float32)
        c = jnp.zeros((B_pad, H), jnp.float32)
        outs = []
        for t in range(T):
            gx = (jnp.dot(x_seq[t].astype(jnp.bfloat16), layer["wih_t"],
                          preferred_element_type=jnp.float32)
                  + layer["bias"]).astype(jnp.bfloat16).astype(jnp.float32)
            gates = gx + jnp.dot(h.astype(jnp.bfloat16), layer["whh_t"],
                                 preferred_element_type=jnp.float32)
            i_g = _sigmoid(gates[:, 0 * H:1 * H])
            f_g = _sigmoid(gates[:, 1 * H:2 * H])
            g_g = jnp.tanh(gates[:, 2 * H:3 * H])
            o_g = _sigmoid(gates[:, 3 * H:4 * H])
            c_new = f_g * c + i_g * g_g
            h_new = o_g * jnp.tanh(c_new)
            live = t < lengths
            h = jnp.where(live, h_new, h)
            c = jnp.where(live, c_new, c)
            outs.append(h.astype(jnp.bfloat16))
        x_seq = jnp.stack(outs, axis=0)
        h_n = h
    logits = (jnp.dot(h_n.astype(jnp.bfloat16), params["w_dec_t"],
                      preferred_element_type=jnp.float32) + params["b_dec"])
    return logits[:B, :class_num]


if __name__ == "__main__":
    # Small config consistent with the module's forward.
    vocab, embed_size, hidden_size = 20, 32, 32
    n_layers, class_num = 2, 4
    batch, max_length = 8, 8

    key = jax.random.PRNGKey(0)
    k_params, k_idx = jax.random.split(key)
    params = init_params(k_params, vocab, embed_size, hidden_size, n_layers, class_num)

    x = jax.random.randint(k_idx, (batch, max_length), 0, vocab, dtype=jnp.int32)
    # max length 6 < T=8 so with time_block=2 the last time block is fully dead (exercises skip).
    x_length = jnp.array([6, 5, 4, 3, 6, 2, 6, 4], dtype=jnp.int32)

    prob = lstm_forward(params, x, x_length, class_num=class_num, time_block=2)
    prob = jax.block_until_ready(prob)

    ref = lstm_forward_ref(params, x, x_length, class_num=class_num)
    np.testing.assert_allclose(np.asarray(prob), np.asarray(ref), rtol=1e-2, atol=1e-2)
    assert prob.shape == (batch, class_num)
    print("KERNEL_OK")
</pallas_src>

<mosaic_0001>
module attributes {stable_mosaic.version = 11 : i64} {
  func.func @_lstm_layer_kernel(%arg0: i32, %arg1: memref<1xi32, #tpu.memory_space<smem>>, %arg2: memref<32x128xbf16, #tpu.memory_space<vmem>>, %arg3: memref<16x1xi32, #tpu.memory_space<vmem>>, %arg4: memref<128x512xbf16, #tpu.memory_space<vmem>>, %arg5: memref<128x512xbf16, #tpu.memory_space<vmem>>, %arg6: memref<1x512xf32, #tpu.memory_space<vmem>>, %arg7: memref<128x128xbf16, #tpu.memory_space<vmem>>, %arg8: memref<1x128xf32, #tpu.memory_space<vmem>>, %arg9: memref<16x128xf32, #tpu.memory_space<vmem>>, %arg10: memref<32x512xbf16, #tpu.memory_space<vmem>>, %arg11: memref<16x128xf32, #tpu.memory_space<vmem>>, %arg12: memref<16x128xf32, #tpu.memory_space<vmem>>) attributes {dimension_semantics = [#tpu.dimension_semantics<arbitrary>], iteration_bounds = array<i64: 4>, scalar_prefetch = 1 : i64, scratch_operands = 3 : i64, tpu.core_type = #tpu.core_type<tc>, window_params = [{transform_indices = @transform_0, window_bounds = array<i64: 32, 128>}, {pipeline_mode = #tpu.pipeline_mode<synchronous>, transform_indices = @transform_1, window_bounds = array<i64: 16, 1>}, {pipeline_mode = #tpu.pipeline_mode<synchronous>, transform_indices = @transform_2, window_bounds = array<i64: 128, 512>}, {pipeline_mode = #tpu.pipeline_mode<synchronous>, transform_indices = @transform_3, window_bounds = array<i64: 128, 512>}, {pipeline_mode = #tpu.pipeline_mode<synchronous>, transform_indices = @transform_4, window_bounds = array<i64: 1, 512>}, {pipeline_mode = #tpu.pipeline_mode<synchronous>, transform_indices = @transform_5, window_bounds = array<i64: 128, 128>}, {pipeline_mode = #tpu.pipeline_mode<synchronous>, transform_indices = @transform_6, window_bounds = array<i64: 1, 128>}, {pipeline_mode = #tpu.pipeline_mode<synchronous>, transform_indices = @transform_7, window_bounds = array<i64: 16, 128>}]} {
    %c2_i32 = arith.constant 2 : i32
    %0 = arith.muli %arg0, %c2_i32 : i32
    %c0 = arith.constant 0 : index
    %1 = memref.load %arg1[%c0] : memref<1xi32, #tpu.memory_space<smem>>
    %c0_i32 = arith.constant 0 : i32
    %2 = arith.cmpi eq, %arg0, %c0_i32 : i32
    %3 = arith.extui %2 : i1 to i32
    %c0_i32_0 = arith.constant 0 : i32
    %4 = arith.cmpi ne, %3, %c0_i32_0 : i32
    scf.if %4 {
      %cst = arith.constant 0.000000e+00 : f32
      %11 = vector.broadcast %cst : f32 to vector<16x128xf32>
      %c0_3 = arith.constant 0 : index
      %c0_4 = arith.constant 0 : index
      %12 = vector.load %arg11[%c0_3, %c0_4] : memref<16x128xf32, #tpu.memory_space<vmem>>, vector<16x128xf32>
      tpu.vector_store %arg11[%c0_3, %c0_4], %11 {strides = array<i32>} : memref<16x128xf32, #tpu.memory_space<vmem>>, vector<16x128xf32>,
      %cst_5 = arith.constant 0.000000e+00 : f32
      %13 = vector.broadcast %cst_5 : f32 to vector<16x128xf32>
      %c0_6 = arith.constant 0 : index
      %c0_7 = arith.constant 0 : index
      %14 = vector.load %arg12[%c0_6, %c0_7] : memref<16x128xf32, #tpu.memory_space<vmem>>, vector<16x128xf32>
      tpu.vector_store %arg12[%c0_6, %c0_7], %13 {strides = array<i32>} : memref<16x128xf32, #tpu.memory_space<vmem>>, vector<16x128xf32>,
    } else {
    }
    %5 = arith.cmpi slt, %0, %1 : i32
    %6 = arith.extui %5 : i1 to i32
    %c0_i32_1 = arith.constant 0 : i32
    %7 = arith.cmpi ne, %6, %c0_i32_1 : i32
    scf.if %7 {
      %c0_3 = arith.constant 0 : index
      %c0_4 = arith.constant 0 : index
      %11 = vector.load %arg2[%c0_3, %c0_4] : memref<32x128xbf16, #tpu.memory_space<vmem>>, vector<32x128xbf16>
      %c0_5 = arith.constant 0 : index
      %c0_6 = arith.constant 0 : index
      %12 = vector.load %arg4[%c0_5, %c0_6] : memref<128x512xbf16, #tpu.memory_space<vmem>>, vector<128x512xbf16>
      %cst = arith.constant dense<0.000000e+00> : vector<32x512xf32>
      %13 = tpu.matmul %11, %12, %cst {dimension_numbers = #tpu.dot_dimension_numbers<[1], [0], [0], [1], [0, 0, 1, 1], [], []>} : vector<32x128xbf16>, vector<128x512xbf16>, vector<32x512xf32> -> vector<32x512xf32>
      %c0_7 = arith.constant 0 : index
      %c0_8 = arith.constant 0 : index
      %14 = vector.load %arg6[%c0_7, %c0_8] : memref<1x512xf32, #tpu.memory_space<vmem>>, vector<1x512xf32>
      %15 = vector.broadcast %14 : vector<1x512xf32> to vector<32x512xf32>
      %16 = arith.addf %13, %15 : vector<32x512xf32>
      %17 = arith.truncf %16 : vector<32x512xf32> to vector<32x512xbf16>
      %c0_9 = arith.constant 0 : index
      %c0_10 = arith.constant 0 : index
      %18 = vector.load %arg10[%c0_9, %c0_10] : memref<32x512xbf16, #tpu.memory_space<vmem>>, vector<32x512xbf16>
      tpu.vector_store %arg10[%c0_9, %c0_10], %17 {strides = array<i32>} : memref<32x512xbf16, #tpu.memory_space<vmem>>, vector<32x512xbf16>,
      %c0_11 = arith.constant 0 : index
      %c0_12 = arith.constant 0 : index
      %19 = vector.load %arg3[%c0_11, %c0_12] : memref<16x1xi32, #tpu.memory_space<vmem>>, vector<16x1xi32>
      %c0_13 = arith.constant 0 : index
      %c0_14 = arith.constant 0 : index
      %20 = vector.load %arg11[%c0_13, %c0_14] : memref<16x128xf32, #tpu.memory_space<vmem>>, vector<16x128xf32>
      %c0_15 = arith.constant 0 : index
      %c0_16 = arith.constant 0 : index
      %21 = vector.load %arg12[%c0_15, %c0_16] : memref<16x128xf32, #tpu.memory_space<vmem>>, vector<16x128xf32>
      %c0_i32_17 = arith.constant 0 : i32
      %c16_i32 = arith.constant 16 : i32
      %22 = arith.muli %c0_i32_17, %c16_i32 : i32
      %23 = tpu.assume_multiple %22, 16 : i32
      %24 = arith.index_cast %23 : i32 to index
      %c0_18 = arith.constant 0 : index
      %25 = vector.load %arg10[%24, %c0_18] : memref<32x512xbf16, #tpu.memory_space<vmem>>, vector<16x512xbf16>
      %26 = arith.extf %25 : vector<16x512xbf16> to vector<16x512xf32>
      %27 = arith.truncf %20 : vector<16x128xf32> to vector<16x128xbf16>
      %c0_19 = arith.constant 0 : index
      %c0_20 = arith.constant 0 : index
      %28 = vector.load %arg5[%c0_19, %c0_20] : memref<128x512xbf16, #tpu.memory_space<vmem>>, vector<128x512xbf16>
      %cst_21 = arith.constant dense<0.000000e+00> : vector<16x512xf32>
      %29 = tpu.matmul %27, %28, %cst_21 {dimension_numbers = #tpu.dot_dimension_numbers<[1], [0], [0], [1], [0, 0, 1, 1], [], []>} : vector<16x128xbf16>, vector<128x512xbf16>, vector<16x512xf32> -> vector<16x512xf32>
      %30 = arith.addf %26, %29 : vector<16x512xf32>
      %31 = vector.extract_strided_slice %30 {offsets = [0, 0], sizes = [16, 128], strides = [1, 1]} : vector<16x512xf32> to vector<16x128xf32>
      %cst_22 = arith.constant 5.000000e-01 : f32
      %32 = vector.broadcast %cst_22 : f32 to vector<16x128xf32>
      %33 = arith.mulf %32, %31 : vector<16x128xf32>
      %34 = math.tanh %33 : vector<16x128xf32>
      %cst_23 = arith.constant 5.000000e-01 : f32
      %35 = vector.broadcast %cst_23 : f32 to vector<16x128xf32>
      %36 = arith.mulf %35, %34 : vector<16x128xf32>
      %cst_24 = arith.constant 5.000000e-01 : f32
      %37 = vector.broadcast %cst_24 : f32 to vector<16x128xf32>
      %38 = arith.addf %36, %37 : vector<16x128xf32>
      %39 = vector.extract_strided_slice %30 {offsets = [0, 128], sizes = [16, 128], strides = [1, 1]} : vector<16x512xf32> to vector<16x128xf32>
      %cst_25 = arith.constant 5.000000e-01 : f32
      %40 = vector.broadcast %cst_25 : f32 to vector<16x128xf32>
      %41 = arith.mulf %40, %39 : vector<16x128xf32>
      %42 = math.tanh %41 : vector<16x128xf32>
      %cst_26 = arith.constant 5.000000e-01 : f32
      %43 = vector.broadcast %cst_26 : f32 to vector<16x128xf32>
      %44 = arith.mulf %43, %42 : vector<16x128xf32>
      %cst_27 = arith.constant 5.000000e-01 : f32
      %45 = vector.broadcast %cst_27 : f32 to vector<16x128xf32>
      %46 = arith.addf %44, %45 : vector<16x128xf32>
      %47 = vector.extract_strided_slice %30 {offsets = [0, 256], sizes = [16, 128], strides = [1, 1]} : vector<16x512xf32> to vector<16x128xf32>
      %48 = math.tanh %47 : vector<16x128xf32>
      %49 = vector.extract_strided_slice %30 {offsets = [0, 384], sizes = [16, 128], strides = [1, 1]} : vector<16x512xf32> to vector<16x128xf32>
      %cst_28 = arith.constant 5.000000e-01 : f32
      %50 = vector.broadcast %cst_28 : f32 to vector<16x128xf32>
      %51 = arith.mulf %50, %49 : vector<16x128xf32>
      %52 = math.tanh %51 : vector<16x128xf32>
      %cst_29 = arith.constant 5.000000e-01 : f32
      %53 = vector.broadcast %cst_29 : f32 to vector<16x128xf32>
      %54 = arith.mulf %53, %52 : vector<16x128xf32>
      %cst_30 = arith.constant 5.000000e-01 : f32
      %55 = vector.broadcast %cst_30 : f32 to vector<16x128xf32>
      %56 = arith.addf %54, %55 : vector<16x128xf32>
      %57 = arith.mulf %46, %21 : vector<16x128xf32>
      %58 = arith.mulf %38, %48 : vector<16x128xf32>
      %59 = arith.addf %57, %58 : vector<16x128xf32>
      %60 = math.tanh %59 : vector<16x128xf32>
      %61 = arith.mulf %56, %60 : vector<16x128xf32>
      %62 = arith.addi %0, %c0_i32_17 : i32
      %63 = vector.broadcast %62 : i32 to vector<16x1xi32>
      %64 = arith.cmpi slt, %63, %19 : vector<16x1xi32>
      %65 = vector.shape_cast %64 : vector<16x1xi1> to vector<16x1xi1>
      %66 = vector.broadcast %65 : vector<16x1xi1> to vector<16x128xi1>
      %67 = arith.select %66, %61, %20 : vector<16x128xi1>, vector<16x128xf32>
      %68 = vector.shape_cast %64 : vector<16x1xi1> to vector<16x1xi1>
      %69 = vector.broadcast %68 : vector<16x1xi1> to vector<16x128xi1>
      %70 = arith.select %69, %59, %21 : vector<16x128xi1>, vector<16x128xf32>
      %c1_i32 = arith.constant 1 : i32
      %c16_i32_31 = arith.constant 16 : i32
      %71 = arith.muli %c1_i32, %c16_i32_31 : i32
      %72 = tpu.assume_multiple %71, 16 : i32
      %73 = arith.index_cast %72 : i32 to index
      %c0_32 = arith.constant 0 : index
      %74 = vector.load %arg10[%73, %c0_32] : memref<32x512xbf16, #tpu.memory_space<vmem>>, vector<16x512xbf16>
      %75 = arith.extf %74 : vector<16x512xbf16> to vector<16x512xf32>
      %76 = arith.truncf %67 : vector<16x128xf32> to vector<16x128xbf16>
      %c0_33 = arith.constant 0 : index
      %c0_34 = arith.constant 0 : index
      %77 = vector.load %arg5[%c0_33, %c0_34] : memref<128x512xbf16, #tpu.memory_space<vmem>>, vector<128x512xbf16>
      %cst_35 = arith.constant dense<0.000000e+00> : vector<16x512xf32>
      %78 = tpu.matmul %76, %77, %cst_35 {dimension_numbers = #tpu.dot_dimension_numbers<[1], [0], [0], [1], [0, 0, 1, 1], [], []>} : vector<16x128xbf16>, vector<128x512xbf16>, vector<16x512xf32> -> vector<16x512xf32>
      %79 = arith.addf %75, %78 : vector<16x512xf32>
      %80 = vector.extract_strided_slice %79 {offsets = [0, 0], sizes = [16, 128], strides = [1, 1]} : vector<16x512xf32> to vector<16x128xf32>
      %cst_36 = arith.constant 5.000000e-01 : f32
      %81 = vector.broadcast %cst_36 : f32 to vector<16x128xf32>
      %82 = arith.mulf %81, %80 : vector<16x128xf32>
      %83 = math.tanh %82 : vector<16x128xf32>
      %cst_37 = arith.constant 5.000000e-01 : f32
      %84 = vector.broadcast %cst_37 : f32 to vector<16x128xf32>
      %85 = arith.mulf %84, %83 : vector<16x128xf32>
      %cst_38 = arith.constant 5.000000e-01 : f32
      %86 = vector.broadcast %cst_38 : f32 to vector<16x128xf32>
      %87 = arith.addf %85, %86 : vector<16x128xf32>
      %88 = vector.extract_strided_slice %79 {offsets = [0, 128], sizes = [16, 128], strides = [1, 1]} : vector<16x512xf32> to vector<16x128xf32>
      %cst_39 = arith.constant 5.000000e-01 : f32
      %89 = vector.broadcast %cst_39 : f32 to vector<16x128xf32>
      %90 = arith.mulf %89, %88 : vector<16x128xf32>
      %91 = math.tanh %90 : vector<16x128xf32>
      %cst_40 = arith.constant 5.000000e-01 : f32
      %92 = vector.broadcast %cst_40 : f32 to vector<16x128xf32>
      %93 = arith.mulf %92, %91 : vector<16x128xf32>
      %cst_41 = arith.constant 5.000000e-01 : f32
      %94 = vector.broadcast %cst_41 : f32 to vector<16x128xf32>
      %95 = arith.addf %93, %94 : vector<16x128xf32>
      %96 = vector.extract_strided_slice %79 {offsets = [0, 256], sizes = [16, 128], strides = [1, 1]} : vector<16x512xf32> to vector<16x128xf32>
      %97 = math.tanh %96 : vector<16x128xf32>
      %98 = vector.extract_strided_slice %79 {offsets = [0, 384], sizes = [16, 128], strides = [1, 1]} : vector<16x512xf32> to vector<16x128xf32>
      %cst_42 = arith.constant 5.000000e-01 : f32
      %99 = vector.broadcast %cst_42 : f32 to vector<16x128xf32>
      %100 = arith.mulf %99, %98 : vector<16x128xf32>
      %101 = math.tanh %100 : vector<16x128xf32>
      %cst_43 = arith.constant 5.000000e-01 : f32
      %102 = vector.broadcast %cst_43 : f32 to vector<16x128xf32>
      %103 = arith.mulf %102, %101 : vector<16x128xf32>
      %cst_44 = arith.constant 5.000000e-01 : f32
      %104 = vector.broadcast %cst_44 : f32 to vector<16x128xf32>
      %105 = arith.addf %103, %104 : vector<16x128xf32>
      %106 = arith.mulf %95, %70 : vector<16x128xf32>
      %107 = arith.mulf %87, %97 : vector<16x128xf32>
      %108 = arith.addf %106, %107 : vector<16x128xf32>
      %109 = math.tanh %108 : vector<16x128xf32>
      %110 = arith.mulf %105, %109 : vector<16x128xf32>
      %111 = arith.addi %0, %c1_i32 : i32
      %112 = vector.broadcast %111 : i32 to vector<16x1xi32>
      %113 = arith.cmpi slt, %112, %19 : vector<16x1xi32>
      %114 = vector.shape_cast %113 : vector<16x1xi1> to vector<16x1xi1>
      %115 = vector.broadcast %114 : vector<16x1xi1> to vector<16x128xi1>
      %116 = arith.select %115, %110, %67 : vector<16x128xi1>, vector<16x128xf32>
      %117 = vector.shape_cast %113 : vector<16x1xi1> to vector<16x1xi1>
      %118 = vector.broadcast %117 : vector<16x1xi1> to vector<16x128xi1>
      %119 = arith.select %118, %108, %70 : vector<16x128xi1>, vector<16x128xf32>
      %c2_i32_45 = arith.constant 2 : i32
      %c0_46 = arith.constant 0 : index
      %c0_47 = arith.constant 0 : index
      %120 = vector.load %arg11[%c0_46, %c0_47] : memref<16x128xf32, #tpu.memory_space<vmem>>, vector<16x128xf32>
      tpu.vector_store %arg11[%c0_46, %c0_47], %116 {strides = array<i32>} : memref<16x128xf32, #tpu.memory_space<vmem>>, vector<16x128xf32>,
      %c0_48 = arith.constant 0 : index
      %c0_49 = arith.constant 0 : index
      %121 = vector.load %arg12[%c0_48, %c0_49] : memref<16x128xf32, #tpu.memory_space<vmem>>, vector<16x128xf32>
      tpu.vector_store %arg12[%c0_48, %c0_49], %119 {strides = array<i32>} : memref<16x128xf32, #tpu.memory_space<vmem>>, vector<16x128xf32>,
    } else {
    }
    %c3_i32 = arith.constant 3 : i32
    %8 = arith.cmpi eq, %arg0, %c3_i32 : i32
    %9 = arith.extui %8 : i1 to i32
    %c0_i32_2 = arith.constant 0 : i32
    %10 = arith.cmpi ne, %9, %c0_i32_2 : i32
    scf.if %10 {
      %c0_3 = arith.constant 0 : index
      %c0_4 = arith.constant 0 : index
      %11 = vector.load %arg11[%c0_3, %c0_4] : memref<16x128xf32, #tpu.memory_space<vmem>>, vector<16x128xf32>
      %12 = arith.truncf %11 : vector<16x128xf32> to vector<16x128xbf16>
      %c0_5 = arith.constant 0 : index
      %c0_6 = arith.constant 0 : index
      %13 = vector.load %arg7[%c0_5, %c0_6] : memref<128x128xbf16, #tpu.memory_space<vmem>>, vector<128x128xbf16>
      %cst = arith.constant dense<0.000000e+00> : vector<16x128xf32>
      %14 = tpu.matmul %12, %13, %cst {dimension_numbers = #tpu.dot_dimension_numbers<[1], [0], [0], [1], [0, 0, 1, 1], [], []>} : vector<16x128xbf16>, vector<128x128xbf16>, vector<16x128xf32> -> vector<16x128xf32>
      %c0_7 = arith.constant 0 : index
      %c0_8 = arith.constant 0 : index
      %15 = vector.load %arg8[%c0_7, %c0_8] : memref<1x128xf32, #tpu.memory_space<vmem>>, vector<1x128xf32>
      %16 = vector.broadcast %15 : vector<1x128xf32> to vector<16x128xf32>
      %17 = arith.addf %14, %16 : vector<16x128xf32>
      %c0_9 = arith.constant 0 : index
      %c0_10 = arith.constant 0 : index
      %18 = vector.load %arg9[%c0_9, %c0_10] : memref<16x128xf32, #tpu.memory_space<vmem>>, vector<16x128xf32>
      tpu.vector_store %arg9[%c0_9, %c0_10], %17 {strides = array<i32>} : memref<16x128xf32, #tpu.memory_space<vmem>>, vector<16x128xf32>,
    } else {
    }
    return
  }
  func.func @transform_0(%arg0: i32, %arg1: memref<1xi32, #tpu.memory_space<smem>>) -> (i32, i32) {
    %c0_i32 = arith.constant 0 : i32
    %c0_i32_0 = arith.constant 0 : i32
    return %arg0, %c0_i32 : i32, i32
  }
  func.func @transform_1(%arg0: i32, %arg1: memref<1xi32, #tpu.memory_space<smem>>) -> (i32, i32) {
    %c0_i32 = arith.constant 0 : i32
    %c0_i32_0 = arith.constant 0 : i32
    %c0_i32_1 = arith.constant 0 : i32
    return %c0_i32, %c0_i32_0 : i32, i32
  }
  func.func @transform_2(%arg0: i32, %arg1: memref<1xi32, #tpu.memory_space<smem>>) -> (i32, i32) {
    %c0_i32 = arith.constant 0 : i32
    %c0_i32_0 = arith.constant 0 : i32
    %c0_i32_1 = arith.constant 0 : i32
    return %c0_i32, %c0_i32_0 : i32, i32
  }
  func.func @transform_3(%arg0: i32, %arg1: memref<1xi32, #tpu.memory_space<smem>>) -> (i32, i32) {
    %c0_i32 = arith.constant 0 : i32
    %c0_i32_0 = arith.constant 0 : i32
    %c0_i32_1 = arith.constant 0 : i32
    return %c0_i32, %c0_i32_0 : i32, i32
  }
  func.func @transform_4(%arg0: i32, %arg1: memref<1xi32, #tpu.memory_space<smem>>) -> (i32, i32) {
    %c0_i32 = arith.constant 0 : i32
    %c0_i32_0 = arith.constant 0 : i32
    %c0_i32_1 = arith.constant 0 : i32
    return %c0_i32, %c0_i32_0 : i32, i32
  }
  func.func @transform_5(%arg0: i32, %arg1: memref<1xi32, #tpu.memory_space<smem>>) -> (i32, i32) {
    %c0_i32 = arith.constant 0 : i32
    %c0_i32_0 = arith.constant 0 : i32
    %c0_i32_1 = arith.constant 0 : i32
    return %c0_i32, %c0_i32_0 : i32, i32
  }
  func.func @transform_6(%arg0: i32, %arg1: memref<1xi32, #tpu.memory_space<smem>>) -> (i32, i32) {
    %c0_i32 = arith.constant 0 : i32
    %c0_i32_0 = arith.constant 0 : i32
    %c0_i32_1 = arith.constant 0 : i32
    return %c0_i32, %c0_i32_0 : i32, i32
  }
  func.func @transform_7(%arg0: i32, %arg1: memref<1xi32, #tpu.memory_space<smem>>) -> (i32, i32) {
    %c0_i32 = arith.constant 0 : i32
    %c0_i32_0 = arith.constant 0 : i32
    %c0_i32_1 = arith.constant 0 : i32
    return %c0_i32, %c0_i32_0 : i32, i32
  }
}

module attributes {stable_mosaic.version = 11 : i64} {
  func.func @_lstm_layer_kernel(%arg0: i32, %arg1: memref<1xi32, #tpu.memory_space<smem>>, %arg2: memref<32x128xbf16, #tpu.memory_space<vmem>>, %arg3: memref<16x1xi32, #tpu.memory_space<vmem>>, %arg4: memref<128x512xbf16, #tpu.memory_space<vmem>>, %arg5: memref<128x512xbf16, #tpu.memory_space<vmem>>, %arg6: memref<1x512xf32, #tpu.memory_space<vmem>>, %arg7: memref<32x128xbf16, #tpu.memory_space<vmem>>, %arg8: memref<32x512xbf16, #tpu.memory_space<vmem>>, %arg9: memref<16x128xf32, #tpu.memory_space<vmem>>, %arg10: memref<16x128xf32, #tpu.memory_space<vmem>>) attributes {dimension_semantics = [#tpu.dimension_semantics<arbitrary>], iteration_bounds = array<i64: 4>, scalar_prefetch = 1 : i64, scratch_operands = 3 : i64, tpu.core_type = #tpu.core_type<tc>, window_params = [{transform_indices = @transform_0, window_bounds = array<i64: 32, 128>}, {pipeline_mode = #tpu.pipeline_mode<synchronous>, transform_indices = @transform_1, window_bounds = array<i64: 16, 1>}, {pipeline_mode = #tpu.pipeline_mode<synchronous>, transform_indices = @transform_2, window_bounds = array<i64: 128, 512>}, {pipeline_mode = #tpu.pipeline_mode<synchronous>, transform_indices = @transform_3, window_bounds = array<i64: 128, 512>}, {pipeline_mode = #tpu.pipeline_mode<synchronous>, transform_indices = @transform_4, window_bounds = array<i64: 1, 512>}, {transform_indices = @transform_5, window_bounds = array<i64: 32, 128>}]} {
    %c2_i32 = arith.constant 2 : i32
    %0 = arith.muli %arg0, %c2_i32 : i32
    %c0 = arith.constant 0 : index
    %1 = memref.load %arg1[%c0] : memref<1xi32, #tpu.memory_space<smem>>
    %c0_i32 = arith.constant 0 : i32
    %2 = arith.cmpi eq, %arg0, %c0_i32 : i32
    %3 = arith.extui %2 : i1 to i32
    %c0_i32_0 = arith.constant 0 : i32
    %4 = arith.cmpi ne, %3, %c0_i32_0 : i32
    scf.if %4 {
      %cst = arith.constant 0.000000e+00 : f32
      %8 = vector.broadcast %cst : f32 to vector<16x128xf32>
      %c0_2 = arith.constant 0 : index
      %c0_3 = arith.constant 0 : index
      %9 = vector.load %arg9[%c0_2, %c0_3] : memref<16x128xf32, #tpu.memory_space<vmem>>, vector<16x128xf32>
      tpu.vector_store %arg9[%c0_2, %c0_3], %8 {strides = array<i32>} : memref<16x128xf32, #tpu.memory_space<vmem>>, vector<16x128xf32>,
      %cst_4 = arith.constant 0.000000e+00 : f32
      %10 = vector.broadcast %cst_4 : f32 to vector<16x128xf32>
      %c0_5 = arith.constant 0 : index
      %c0_6 = arith.constant 0 : index
      %11 = vector.load %arg10[%c0_5, %c0_6] : memref<16x128xf32, #tpu.memory_space<vmem>>, vector<16x128xf32>
      tpu.vector_store %arg10[%c0_5, %c0_6], %10 {strides = array<i32>} : memref<16x128xf32, #tpu.memory_space<vmem>>, vector<16x128xf32>,
    } else {
    }
    %5 = arith.cmpi slt, %0, %1 : i32
    %6 = arith.extui %5 : i1 to i32
    %c0_i32_1 = arith.constant 0 : i32
    %7 = arith.cmpi ne, %6, %c0_i32_1 : i32
    scf.if %7 {
      %c0_2 = arith.constant 0 : index
      %c0_3 = arith.constant 0 : index
      %8 = vector.load %arg2[%c0_2, %c0_3] : memref<32x128xbf16, #tpu.memory_space<vmem>>, vector<32x128xbf16>
      %c0_4 = arith.constant 0 : index
      %c0_5 = arith.constant 0 : index
      %9 = vector.load %arg4[%c0_4, %c0_5] : memref<128x512xbf16, #tpu.memory_space<vmem>>, vector<128x512xbf16>
      %cst = arith.constant dense<0.000000e+00> : vector<32x512xf32>
      %10 = tpu.matmul %8, %9, %cst {dimension_numbers = #tpu.dot_dimension_numbers<[1], [0], [0], [1], [0, 0, 1, 1], [], []>} : vector<32x128xbf16>, vector<128x512xbf16>, vector<32x512xf32> -> vector<32x512xf32>
      %c0_6 = arith.constant 0 : index
      %c0_7 = arith.constant 0 : index
      %11 = vector.load %arg6[%c0_6, %c0_7] : memref<1x512xf32, #tpu.memory_space<vmem>>, vector<1x512xf32>
      %12 = vector.broadcast %11 : vector<1x512xf32> to vector<32x512xf32>
      %13 = arith.addf %10, %12 : vector<32x512xf32>
      %14 = arith.truncf %13 : vector<32x512xf32> to vector<32x512xbf16>
      %c0_8 = arith.constant 0 : index
      %c0_9 = arith.constant 0 : index
      %15 = vector.load %arg8[%c0_8, %c0_9] : memref<32x512xbf16, #tpu.memory_space<vmem>>, vector<32x512xbf16>
      tpu.vector_store %arg8[%c0_8, %c0_9], %14 {strides = array<i32>} : memref<32x512xbf16, #tpu.memory_space<vmem>>, vector<32x512xbf16>,
      %c0_10 = arith.constant 0 : index
      %c0_11 = arith.constant 0 : index
      %16 = vector.load %arg3[%c0_10, %c0_11] : memref<16x1xi32, #tpu.memory_space<vmem>>, vector<16x1xi32>
      %c0_12 = arith.constant 0 : index
      %c0_13 = arith.constant 0 : index
      %17 = vector.load %arg9[%c0_12, %c0_13] : memref<16x128xf32, #tpu.memory_space<vmem>>, vector<16x128xf32>
      %c0_14 = arith.constant 0 : index
      %c0_15 = arith.constant 0 : index
      %18 = vector.load %arg10[%c0_14, %c0_15] : memref<16x128xf32, #tpu.memory_space<vmem>>, vector<16x128xf32>
      %c0_i32_16 = arith.constant 0 : i32
      %c16_i32 = arith.constant 16 : i32
      %19 = arith.muli %c0_i32_16, %c16_i32 : i32
      %20 = tpu.assume_multiple %19, 16 : i32
      %21 = arith.index_cast %20 : i32 to index
      %c0_17 = arith.constant 0 : index
      %22 = vector.load %arg8[%21, %c0_17] : memref<32x512xbf16, #tpu.memory_space<vmem>>, vector<16x512xbf16>
      %23 = arith.extf %22 : vector<16x512xbf16> to vector<16x512xf32>
      %24 = arith.truncf %17 : vector<16x128xf32> to vector<16x128xbf16>
      %c0_18 = arith.constant 0 : index
      %c0_19 = arith.constant 0 : index
      %25 = vector.load %arg5[%c0_18, %c0_19] : memref<128x512xbf16, #tpu.memory_space<vmem>>, vector<128x512xbf16>
      %cst_20 = arith.constant dense<0.000000e+00> : vector<16x512xf32>
      %26 = tpu.matmul %24, %25, %cst_20 {dimension_numbers = #tpu.dot_dimension_numbers<[1], [0], [0], [1], [0, 0, 1, 1], [], []>} : vector<16x128xbf16>, vector<128x512xbf16>, vector<16x512xf32> -> vector<16x512xf32>
      %27 = arith.addf %23, %26 : vector<16x512xf32>
      %28 = vector.extract_strided_slice %27 {offsets = [0, 0], sizes = [16, 128], strides = [1, 1]} : vector<16x512xf32> to vector<16x128xf32>
      %cst_21 = arith.constant 5.000000e-01 : f32
      %29 = vector.broadcast %cst_21 : f32 to vector<16x128xf32>
      %30 = arith.mulf %29, %28 : vector<16x128xf32>
      %31 = math.tanh %30 : vector<16x128xf32>
      %cst_22 = arith.constant 5.000000e-01 : f32
      %32 = vector.broadcast %cst_22 : f32 to vector<16x128xf32>
      %33 = arith.mulf %32, %31 : vector<16x128xf32>
      %cst_23 = arith.constant 5.000000e-01 : f32
      %34 = vector.broadcast %cst_23 : f32 to vector<16x128xf32>
      %35 = arith.addf %33, %34 : vector<16x128xf32>
      %36 = vector.extract_strided_slice %27 {offsets = [0, 128], sizes = [16, 128], strides = [1, 1]} : vector<16x512xf32> to vector<16x128xf32>
      %cst_24 = arith.constant 5.000000e-01 : f32
      %37 = vector.broadcast %cst_24 : f32 to vector<16x128xf32>
      %38 = arith.mulf %37, %36 : vector<16x128xf32>
      %39 = math.tanh %38 : vector<16x128xf32>
      %cst_25 = arith.constant 5.000000e-01 : f32
      %40 = vector.broadcast %cst_25 : f32 to vector<16x128xf32>
      %41 = arith.mulf %40, %39 : vector<16x128xf32>
      %cst_26 = arith.constant 5.000000e-01 : f32
      %42 = vector.broadcast %cst_26 : f32 to vector<16x128xf32>
      %43 = arith.addf %41, %42 : vector<16x128xf32>
      %44 = vector.extract_strided_slice %27 {offsets = [0, 256], sizes = [16, 128], strides = [1, 1]} : vector<16x512xf32> to vector<16x128xf32>
      %45 = math.tanh %44 : vector<16x128xf32>
      %46 = vector.extract_strided_slice %27 {offsets = [0, 384], sizes = [16, 128], strides = [1, 1]} : vector<16x512xf32> to vector<16x128xf32>
      %cst_27 = arith.constant 5.000000e-01 : f32
      %47 = vector.broadcast %cst_27 : f32 to vector<16x128xf32>
      %48 = arith.mulf %47, %46 : vector<16x128xf32>
      %49 = math.tanh %48 : vector<16x128xf32>
      %cst_28 = arith.constant 5.000000e-01 : f32
      %50 = vector.broadcast %cst_28 : f32 to vector<16x128xf32>
      %51 = arith.mulf %50, %49 : vector<16x128xf32>
      %cst_29 = arith.constant 5.000000e-01 : f32
      %52 = vector.broadcast %cst_29 : f32 to vector<16x128xf32>
      %53 = arith.addf %51, %52 : vector<16x128xf32>
      %54 = arith.mulf %43, %18 : vector<16x128xf32>
      %55 = arith.mulf %35, %45 : vector<16x128xf32>
      %56 = arith.addf %54, %55 : vector<16x128xf32>
      %57 = math.tanh %56 : vector<16x128xf32>
      %58 = arith.mulf %53, %57 : vector<16x128xf32>
      %59 = arith.addi %0, %c0_i32_16 : i32
      %60 = vector.broadcast %59 : i32 to vector<16x1xi32>
      %61 = arith.cmpi slt, %60, %16 : vector<16x1xi32>
      %62 = vector.shape_cast %61 : vector<16x1xi1> to vector<16x1xi1>
      %63 = vector.broadcast %62 : vector<16x1xi1> to vector<16x128xi1>
      %64 = arith.select %63, %58, %17 : vector<16x128xi1>, vector<16x128xf32>
      %65 = vector.shape_cast %61 : vector<16x1xi1> to vector<16x1xi1>
      %66 = vector.broadcast %65 : vector<16x1xi1> to vector<16x128xi1>
      %67 = arith.select %66, %56, %18 : vector<16x128xi1>, vector<16x128xf32>
      %68 = arith.truncf %64 : vector<16x128xf32> to vector<16x128xbf16>
      %69 = arith.index_cast %20 : i32 to index
      %c0_30 = arith.constant 0 : index
      %70 = vector.load %arg7[%69, %c0_30] : memref<32x128xbf16, #tpu.memory_space<vmem>>, vector<16x128xbf16>
      tpu.vector_store %arg7[%69, %c0_30], %68 {strides = array<i32>} : memref<32x128xbf16, #tpu.memory_space<vmem>>, vector<16x128xbf16>,
      %c1_i32 = arith.constant 1 : i32
      %c16_i32_31 = arith.constant 16 : i32
      %71 = arith.muli %c1_i32, %c16_i32_31 : i32
      %72 = tpu.assume_multiple %71, 16 : i32
      %73 = arith.index_cast %72 : i32 to index
      %c0_32 = arith.constant 0 : index
      %74 = vector.load %arg8[%73, %c0_32] : memref<32x512xbf16, #tpu.memory_space<vmem>>, vector<16x512xbf16>
      %75 = arith.extf %74 : vector<16x512xbf16> to vector<16x512xf32>
      %76 = arith.truncf %64 : vector<16x128xf32> to vector<16x128xbf16>
      %c0_33 = arith.constant 0 : index
      %c0_34 = arith.constant 0 : index
      %77 = vector.load %arg5[%c0_33, %c0_34] : memref<128x512xbf16, #tpu.memory_space<vmem>>, vector<128x512xbf16>
      %cst_35 = arith.constant dense<0.000000e+00> : vector<16x512xf32>
      %78 = tpu.matmul %76, %77, %cst_35 {dimension_numbers = #tpu.dot_dimension_numbers<[1], [0], [0], [1], [0, 0, 1, 1], [], []>} : vector<16x128xbf16>, vector<128x512xbf16>, vector<16x512xf32> -> vector<16x512xf32>
      %79 = arith.addf %75, %78 : vector<16x512xf32>
      %80 = vector.extract_strided_slice %79 {offsets = [0, 0], sizes = [16, 128], strides = [1, 1]} : vector<16x512xf32> to vector<16x128xf32>
      %cst_36 = arith.constant 5.000000e-01 : f32
      %81 = vector.broadcast %cst_36 : f32 to vector<16x128xf32>
      %82 = arith.mulf %81, %80 : vector<16x128xf32>
      %83 = math.tanh %82 : vector<16x128xf32>
      %cst_37 = arith.constant 5.000000e-01 : f32
      %84 = vector.broadcast %cst_37 : f32 to vector<16x128xf32>
      %85 = arith.mulf %84, %83 : vector<16x128xf32>
      %cst_38 = arith.constant 5.000000e-01 : f32
      %86 = vector.broadcast %cst_38 : f32 to vector<16x128xf32>
      %87 = arith.addf %85, %86 : vector<16x128xf32>
      %88 = vector.extract_strided_slice %79 {offsets = [0, 128], sizes = [16, 128], strides = [1, 1]} : vector<16x512xf32> to vector<16x128xf32>
      %cst_39 = arith.constant 5.000000e-01 : f32
      %89 = vector.broadcast %cst_39 : f32 to vector<16x128xf32>
      %90 = arith.mulf %89, %88 : vector<16x128xf32>
      %91 = math.tanh %90 : vector<16x128xf32>
      %cst_40 = arith.constant 5.000000e-01 : f32
      %92 = vector.broadcast %cst_40 : f32 to vector<16x128xf32>
      %93 = arith.mulf %92, %91 : vector<16x128xf32>
      %cst_41 = arith.constant 5.000000e-01 : f32
      %94 = vector.broadcast %cst_41 : f32 to vector<16x128xf32>
      %95 = arith.addf %93, %94 : vector<16x128xf32>
      %96 = vector.extract_strided_slice %79 {offsets = [0, 256], sizes = [16, 128], strides = [1, 1]} : vector<16x512xf32> to vector<16x128xf32>
      %97 = math.tanh %96 : vector<16x128xf32>
      %98 = vector.extract_strided_slice %79 {offsets = [0, 384], sizes = [16, 128], strides = [1, 1]} : vector<16x512xf32> to vector<16x128xf32>
      %cst_42 = arith.constant 5.000000e-01 : f32
      %99 = vector.broadcast %cst_42 : f32 to vector<16x128xf32>
      %100 = arith.mulf %99, %98 : vector<16x128xf32>
      %101 = math.tanh %100 : vector<16x128xf32>
      %cst_43 = arith.constant 5.000000e-01 : f32
      %102 = vector.broadcast %cst_43 : f32 to vector<16x128xf32>
      %103 = arith.mulf %102, %101 : vector<16x128xf32>
      %cst_44 = arith.constant 5.000000e-01 : f32
      %104 = vector.broadcast %cst_44 : f32 to vector<16x128xf32>
      %105 = arith.addf %103, %104 : vector<16x128xf32>
      %106 = arith.mulf %95, %67 : vector<16x128xf32>
      %107 = arith.mulf %87, %97 : vector<16x128xf32>
      %108 = arith.addf %106, %107 : vector<16x128xf32>
      %109 = math.tanh %108 : vector<16x128xf32>
      %110 = arith.mulf %105, %109 : vector<16x128xf32>
      %111 = arith.addi %0, %c1_i32 : i32
      %112 = vector.broadcast %111 : i32 to vector<16x1xi32>
      %113 = arith.cmpi slt, %112, %16 : vector<16x1xi32>
      %114 = vector.shape_cast %113 : vector<16x1xi1> to vector<16x1xi1>
      %115 = vector.broadcast %114 : vector<16x1xi1> to vector<16x128xi1>
      %116 = arith.select %115, %110, %64 : vector<16x128xi1>, vector<16x128xf32>
      %117 = vector.shape_cast %113 : vector<16x1xi1> to vector<16x1xi1>
      %118 = vector.broadcast %117 : vector<16x1xi1> to vector<16x128xi1>
      %119 = arith.select %118, %108, %67 : vector<16x128xi1>, vector<16x128xf32>
      %120 = arith.truncf %116 : vector<16x128xf32> to vector<16x128xbf16>
      %121 = arith.index_cast %72 : i32 to index
      %c0_45 = arith.constant 0 : index
      %122 = vector.load %arg7[%121, %c0_45] : memref<32x128xbf16, #tpu.memory_space<vmem>>, vector<16x128xbf16>
      tpu.vector_store %arg7[%121, %c0_45], %120 {strides = array<i32>} : memref<32x128xbf16, #tpu.memory_space<vmem>>, vector<16x128xbf16>,
      %c2_i32_46 = arith.constant 2 : i32
      %c0_47 = arith.constant 0 : index
      %c0_48 = arith.constant 0 : index
      %123 = vector.load %arg9[%c0_47, %c0_48] : memref<16x128xf32, #tpu.memory_space<vmem>>, vector<16x128xf32>
      tpu.vector_store %arg9[%c0_47, %c0_48], %116 {strides = array<i32>} : memref<16x128xf32, #tpu.memory_space<vmem>>, vector<16x128xf32>,
      %c0_49 = arith.constant 0 : index
      %c0_50 = arith.constant 0 : index
      %124 = vector.load %arg10[%c0_49, %c0_50] : memref<16x128xf32, #tpu.memory_space<vmem>>, vector<16x128xf32>
      tpu.vector_store %arg10[%c0_49, %c0_50], %119 {strides = array<i32>} : memref<16x128xf32, #tpu.memory_space<vmem>>, vector<16x128xf32>,
    } else {
    }
    return
  }
  func.func @transform_0(%arg0: i32, %arg1: memref<1xi32, #tpu.memory_space<smem>>) -> (i32, i32) {
    %c0_i32 = arith.constant 0 : i32
    %c0_i32_0 = arith.constant 0 : i32
    return %arg0, %c0_i32 : i32, i32
  }
  func.func @transform_1(%arg0: i32, %arg1: memref<1xi32, #tpu.memory_space<smem>>) -> (i32, i32) {
    %c0_i32 = arith.constant 0 : i32
    %c0_i32_0 = arith.constant 0 : i32
    %c0_i32_1 = arith.constant 0 : i32
    return %c0_i32, %c0_i32_0 : i32, i32
  }
  func.func @transform_2(%arg0: i32, %arg1: memref<1xi32, #tpu.memory_space<smem>>) -> (i32, i32) {
    %c0_i32 = arith.constant 0 : i32
    %c0_i32_0 = arith.constant 0 : i32
    %c0_i32_1 = arith.constant 0 : i32
    return %c0_i32, %c0_i32_0 : i32, i32
  }
  func.func @transform_3(%arg0: i32, %arg1: memref<1xi32, #tpu.memory_space<smem>>) -> (i32, i32) {
    %c0_i32 = arith.constant 0 : i32
    %c0_i32_0 = arith.constant 0 : i32
    %c0_i32_1 = arith.constant 0 : i32
    return %c0_i32, %c0_i32_0 : i32, i32
  }
  func.func @transform_4(%arg0: i32, %arg1: memref<1xi32, #tpu.memory_space<smem>>) -> (i32, i32) {
    %c0_i32 = arith.constant 0 : i32
    %c0_i32_0 = arith.constant 0 : i32
    %c0_i32_1 = arith.constant 0 : i32
    return %c0_i32, %c0_i32_0 : i32, i32
  }
  func.func @transform_5(%arg0: i32, %arg1: memref<1xi32, #tpu.memory_space<smem>>) -> (i32, i32) {
    %c0_i32 = arith.constant 0 : i32
    %c0_i32_0 = arith.constant 0 : i32
    return %arg0, %c0_i32 : i32, i32
  }
}

</mosaic_0001>

<llo_original>
// kernel: lstm_forward.2
$region0: #{lstm_forward.2}
  #allocation0 [shape = 'u32[]', space=smem, size = 0x4, offset = 0x4, fixed_abs, tag = 'smem constant byte address 0x4 - core index']
  #allocation1 [shape = 'u32[144,128]{1,0:T(1,128)}', space=vmem, size = 0x12000, scoped, tag = 'internal scratch']
  #allocation2 [shape = 'bf16[32,512]{1,0:T(16,128)(2,1)}', space=vmem, size = 0x8000, scoped, tag = 'scratch operand']
  #allocation3 [shape = 'f32[16,128]{1,0:T(8,128)}', space=vmem, size = 0x2000, scoped, tag = 'scratch operand']
  #allocation4 [shape = 'f32[16,128]{1,0:T(8,128)}', space=vmem, size = 0x2000, scoped, tag = 'scratch operand']
  #allocation5 [shape = 's32[1]{0}', space=sflag, size = 0x4, scoped, tag = 'scoped memory for lstm_forward.2']
  #allocation6 [shape = 's32[1]{0:T(128)S(6)}', space=smem, size = 0x200, scoped, tag = 'prefetched SMEM operand 0']
  %s0 = inlined_call_operand.<no memory space> [shape: s32[1], index: 0, kind: input, shape index: {}]
  %s1 = inlined_call_operand.vmem [shape: bf16[128,128], index: 1, kind: input, shape index: {}]
  %s2 = inlined_call_operand.vmem [shape: s32[16,1], index: 2, kind: input, shape index: {}]
  %s3 = inlined_call_operand.vmem [shape: bf16[128,512], index: 3, kind: input, shape index: {}]
  %s4 = inlined_call_operand.vmem [shape: bf16[128,512], index: 4, kind: input, shape index: {}]
  %s5 = inlined_call_operand.vmem [shape: f32[1,512], index: 5, kind: input, shape index: {}]
  %s6 = inlined_call_operand.vmem [shape: bf16[128,128], index: 6, kind: output, shape index: {}]
  %s7 = sld [smem:[#allocation0]]
  $region61: #{lstm_forward.2} parent=0
    _
  %s9 = ssub.s32 1, %s7
  %s10 = scalar_select 0, %s9, %s7
  %11 = sst [smem:[#allocation6]] %s0
  loop: start=0, step=1, limit=6
  $region2: #{lstm_forward.2} parent=0 // loop_pre_header
    _
  $region3: #{lstm_forward.2} parent=0 // loop_header
    %s13 = sphi 0, %s17
    %p14 = scmp.ge.s32.totalorder %s13, 6
    %s23 = sphi 0, %s25
    %s26 = sphi 0, %s23
    %s27 = sphi 0, %s26
    %s43 = sphi 0, %s27
    %s47 = sphi 0, %s47
    %s49 = sphi 0, %s47
    %s50 = sphi 0, %s49
    %s64 = sphi 0, %s50
    %s68 = sphi 0, %s68
    %s70 = sphi 0, %s68
    %s71 = sphi 0, %s70
    %s85 = sphi 0, %s71
    %s89 = sphi 0, %s89
    %s91 = sphi 0, %s89
    %s92 = sphi 0, %s91
    %s106 = sphi 0, %s92
    %s110 = sphi 0, %s110
    %s112 = sphi 0, %s110
    %s113 = sphi 0, %s112
    %s127 = sphi 0, %s113
    %s133 = sphi 0, %s135
    %s136 = sphi 0, %s133
    %s137 = sphi 0, %s136
    %s153 = sphi 0, %s137
  $region4: #{lstm_forward.2} parent=0 // loop_header_branch
    %16 = sbr.rel (%p14) target = $region8
  $region5: #{lstm_forward.2} parent=0 // loop_body
    %s18 = ssub.s32 %s13, 1
    %s19 = ssub.s32 %s13, 2
    %s20 = sadd.s32 %s13, 1
    %s21 = ssub.s32 %s13, %s20
    %p22 = scmp.eq.s32.totalorder %s21, 0
    %s24 = sadd.s32 %s23, 1
    %s25 = scalar_select %p22, %s23, %s24
    %p28 = pneg %p22
    %p29 = scmp.eq.s32.totalorder %s13, 3
    %p30 = por %p28, %p29
    %p31 = scmp.ne.s32.totalorder %s23, %s26
    %p32 = scmp.eq.s32.totalorder %s13, 0
    %p33 = por %p31, %p32
    %p34 = scmp.ne.s32.totalorder %s23, %s26
    %p35 = scmp.eq.s32.totalorder %s18, 3
    %p36 = por %p34, %p35
    %p37 = scmp.ne.s32.totalorder %s26, %s27
    %p38 = scmp.eq.s32.totalorder %s18, 0
    %p39 = por %p37, %p38
    %p40 = scmp.ne.s32.totalorder %s26, %s27
    %p41 = scmp.eq.s32.totalorder %s19, 3
    %p42 = por %p40, %p41
    %p44 = scmp.ne.s32.totalorder %s27, %s43
    %p45 = scmp.eq.s32.totalorder %s19, 0
    %p46 = por %p44, %p45
    %s48 = sadd.s32 %s47, 1
    %p51 = scmp.eq.s32.totalorder %s13, 3
    %p52 = scmp.ne.s32.totalorder %s47, %s49
    %p53 = scmp.eq.s32.totalorder %s13, 0
    %p54 = por %p52, %p53
    %p55 = scmp.ne.s32.totalorder %s47, %s49
    %p56 = scmp.eq.s32.totalorder %s18, 3
    %p57 = por %p55, %p56
    %p58 = scmp.ne.s32.totalorder %s49, %s50
    %p59 = scmp.eq.s32.totalorder %s18, 0
    %p60 = por %p58, %p59
    %p61 = scmp.ne.s32.totalorder %s49, %s50
    %p62 = scmp.eq.s32.totalorder %s19, 3
    %p63 = por %p61, %p62
    %p65 = scmp.ne.s32.totalorder %s50, %s64
    %p66 = scmp.eq.s32.totalorder %s19, 0
    %p67 = por %p65, %p66
    %s69 = sadd.s32 %s68, 1
    %p72 = scmp.eq.s32.totalorder %s13, 3
    %p73 = scmp.ne.s32.totalorder %s68, %s70
    %p74 = scmp.eq.s32.totalorder %s13, 0
    %p75 = por %p73, %p74
    %p76 = scmp.ne.s32.totalorder %s68, %s70
    %p77 = scmp.eq.s32.totalorder %s18, 3
    %p78 = por %p76, %p77
    %p79 = scmp.ne.s32.totalorder %s70, %s71
    %p80 = scmp.eq.s32.totalorder %s18, 0
    %p81 = por %p79, %p80
    %p82 = scmp.ne.s32.totalorder %s70, %s71
    %p83 = scmp.eq.s32.totalorder %s19, 3
    %p84 = por %p82, %p83
    %p86 = scmp.ne.s32.totalorder %s71, %s85
    %p87 = scmp.eq.s32.totalorder %s19, 0
    %p88 = por %p86, %p87
    %s90 = sadd.s32 %s89, 1
    %p93 = scmp.eq.s32.totalorder %s13, 3
    %p94 = scmp.ne.s32.totalorder %s89, %s91
    %p95 = scmp.eq.s32.totalorder %s13, 0
    %p96 = por %p94, %p95
    %p97 = scmp.ne.s32.totalorder %s89, %s91
    %p98 = scmp.eq.s32.totalorder %s18, 3
    %p99 = por %p97, %p98
    %p100 = scmp.ne.s32.totalorder %s91, %s92
    %p101 = scmp.eq.s32.totalorder %s18, 0
    %p102 = por %p100, %p101
    %p103 = scmp.ne.s32.totalorder %s91, %s92
    %p104 = scmp.eq.s32.totalorder %s19, 3
    %p105 = por %p103, %p104
    %p107 = scmp.ne.s32.totalorder %s92, %s106
    %p108 = scmp.eq.s32.totalorder %s19, 0
    %p109 = por %p107, %p108
    %s111 = sadd.s32 %s110, 1
    %p114 = scmp.eq.s32.totalorder %s13, 3
    %p115 = scmp.ne.s32.totalorder %s110, %s112
    %p116 = scmp.eq.s32.totalorder %s13, 0
    %p117 = por %p115, %p116
    %p118 = scmp.ne.s32.totalorder %s110, %s112
    %p119 = scmp.eq.s32.totalorder %s18, 3
    %p120 = por %p118, %p119
    %p121 = scmp.ne.s32.totalorder %s112, %s113
    %p122 = scmp.eq.s32.totalorder %s18, 0
    %p123 = por %p121, %p122
    %p124 = scmp.ne.s32.totalorder %s112, %s113
    %p125 = scmp.eq.s32.totalorder %s19, 3
    %p126 = por %p124, %p125
    %p128 = scmp.ne.s32.totalorder %s113, %s127
    %p129 = scmp.eq.s32.totalorder %s19, 0
    %p130 = por %p128, %p129
    %s131 = ssub.s32 %s13, %s20
    %p132 = scmp.eq.s32.totalorder %s131, 0
    %s134 = sadd.s32 %s133, 1
    %s135 = scalar_select %p132, %s133, %s134
    %p138 = pneg %p132
    %p139 = scmp.eq.s32.totalorder %s13, 3
    %p140 = por %p138, %p139
    %p141 = scmp.ne.s32.totalorder %s133, %s136
    %p142 = scmp.eq.s32.totalorder %s13, 0
    %p143 = por %p141, %p142
    %p144 = scmp.ne.s32.totalorder %s133, %s136
    %p145 = scmp.eq.s32.totalorder %s18, 3
    %p146 = por %p144, %p145
    %p147 = scmp.ne.s32.totalorder %s136, %s137
    %p148 = scmp.eq.s32.totalorder %s18, 0
    %p149 = por %p147, %p148
    %p150 = scmp.ne.s32.totalorder %s136, %s137
    %p151 = scmp.eq.s32.totalorder %s19, 3
    %p152 = por %p150, %p151
    %p154 = scmp.ne.s32.totalorder %s137, %s153
    %p155 = scmp.eq.s32.totalorder %s19, 0
    %p156 = por %p154, %p155
    %p157 = scmp.le.s32.totalorder 1, %s13
    %p158 = scmp.lt.s32.totalorder %s13, 5
    %p159 = pnand %p157, %p158
    %p160 = pneg %p159
    // Predicated region
    $region9: #{lstm_forward.2} parent=5 // pred_check
      _
    $region10: #{lstm_forward.2} parent=5 // pred_check_branch
      %162 = sbr.rel (%p159) target = $region12
    $region11: #{lstm_forward.2} parent=5 // pred_region
      %s163 = ssub.s32 %s13, 1
      // Predicated region
      $region13: #{lstm_forward.2} parent=11 // pred_check
        %p164 = pneg %p60
      $region14: #{lstm_forward.2} parent=11 // pred_check_branch
        %166 = sbr.rel (%p164) target = $region16
      $region15: #{lstm_forward.2} parent=11 // pred_region
        _
      $region16: #{lstm_forward.2} parent=11 // pred_fallthru
        _
      // Predicated region
      $region17: #{lstm_forward.2} parent=11 // pred_check
        %p167 = pneg %p81
      $region18: #{lstm_forward.2} parent=11 // pred_check_branch
        %169 = sbr.rel (%p167) target = $region20
      $region19: #{lstm_forward.2} parent=11 // pred_region
        _
      $region20: #{lstm_forward.2} parent=11 // pred_fallthru
        _
      // Predicated region
      $region21: #{lstm_forward.2} parent=11 // pred_check
        %p170 = pneg %p102
      $region22: #{lstm_forward.2} parent=11 // pred_check_branch
        %172 = sbr.rel (%p170) target = $region24
      $region23: #{lstm_forward.2} parent=11 // pred_region
        _
      $region24: #{lstm_forward.2} parent=11 // pred_fallthru
        _
      // Predicated region
      $region25: #{lstm_forward.2} parent=11 // pred_check
        %p173 = pneg %p123
      $region26: #{lstm_forward.2} parent=11 // pred_check_branch
        %175 = sbr.rel (%p173) target = $region28
      $region27: #{lstm_forward.2} parent=11 // pred_region
        _
      $region28: #{lstm_forward.2} parent=11 // pred_fallthru
        _
    $region12: #{lstm_forward.2} parent=5 // pred_fallthru
      _
    %p176 = scmp.lt.s32.totalorder %s13, 4
    // Predicated region
    $region29: #{lstm_forward.2} parent=5 // pred_check
      %p177 = pneg %p176
    $region30: #{lstm_forward.2} parent=5 // pred_check_branch
      %179 = sbr.rel (%p177) target = $region32
    $region31: #{lstm_forward.2} parent=5 // pred_region
      // Predicated region
      $region33: #{lstm_forward.2} parent=31 // pred_check
        %p180 = pneg %p33
      $region34: #{lstm_forward.2} parent=31 // pred_check_branch
        %182 = sbr.rel (%p180) target = $region36
      $region35: #{lstm_forward.2} parent=31 // pred_region
        %s183 = smul.u32 4, %s13
        %p184 = scmp.lt.s32.totalorder %s183, 15
        %s185 = scalar_select %p184, %s183, 15
        %s186 = smul.addr %s185, 4
        %s187 = scalar_lea.vmem %s1, %s186
        %s188 = smul.u32 4, %s13
      $region36: #{lstm_forward.2} parent=31 // pred_fallthru
        _
    $region32: #{lstm_forward.2} parent=5 // pred_fallthru
      _
    %p189 = scmp.le.s32.totalorder 1, %s13
    %p190 = scmp.lt.s32.totalorder %s13, 5
    %p191 = pnand %p189, %p190
    %p192 = pneg %p191
    // Predicated region
    $region37: #{lstm_forward.2} parent=5 // pred_check
      _
    $region38: #{lstm_forward.2} parent=5 // pred_check_branch
      %194 = sbr.rel (%p191) target = $region40
    $region39: #{lstm_forward.2} parent=5 // pred_region
      %s195 = ssub.s32 %s13, 1
      %s196 = smul.u32 4, %s18
      %p197 = scmp.lt.s32.totalorder %s196, 15
      %s198 = scalar_select %p197, %s196, 15
      %s199 = smul.addr %s198, 4
      %s200 = scalar_lea.vmem %s1, %s199
      %p201 = pneg %p39
      %p202 = pneg %p36
      %p203 = pneg %p60
      %p204 = pneg %p57
      %p205 = pneg %p81
      %p206 = pneg %p78
      %p207 = pneg %p102
      %p208 = pneg %p99
      %p209 = pneg %p123
      %p210 = pneg %p120
      %p211 = pneg %p149
      %p212 = pneg %p146
      %s213 = smul.u32 4, %s18
      %p214 = scmp.lt.s32.totalorder %s213, 15
      %s215 = scalar_select %p214, %s213, 15
      %s216 = smul.addr %s215, 4
      %s217 = scalar_lea.vmem %s6, %s216
      %s218 = smul.u32 4, %s18
      %p219 = scmp.lt.s32.totalorder %s218, 15
      %s220 = scalar_select %p219, %s218, 15
      %s221 = smul.addr %s220, 4
      %s222 = scalar_lea.vmem %s1, %s221
      %s223 = smul.u32 4, %s18
      %s224 = smul.u32 4, %s18
      %p225 = scmp.lt.s32.totalorder %s224, 15
      %s226 = scalar_select %p225, %s224, 15
      %s227 = smul.addr %s226, 4
      %s228 = scalar_lea.vmem %s6, %s227
      %s229 = smul.u32 4, %s18
      %s231 = smul.u32 %s18, 2
      %s232 = sld [smem:[#allocation6]]
      %p233 = scmp.eq.s32.totalorder %s18, 0
      // Predicated region
      $region41: #{lstm_forward.2} parent=39 // pred_check
        %p234 = pneg %p233
      $region42: #{lstm_forward.2} parent=39 // pred_check_branch
        %236 = sbr.rel (%p234) target = $region44
      $region43: #{lstm_forward.2} parent=39 // pred_region
        %237 = vst [vmem:[#allocation3] sm:$0xff] 0.0
        %238 = vst [vmem:[#allocation3 + $0x8] sm:$0xff] 0.0
        %239 = vst [vmem:[#allocation4] sm:$0xff] 0.0
        %240 = vst [vmem:[#allocation4 + $0x8] sm:$0xff] 0.0
      $region44: #{lstm_forward.2} parent=39 // pred_fallthru
        _
      %p241 = scmp.lt.s32.totalorder %s231, %s232
      // Predicated region
      $region45: #{lstm_forward.2} parent=39 // pred_check
        %p242 = pneg %p241
      $region46: #{lstm_forward.2} parent=39 // pred_check_branch
        %244 = sbr.rel (%p242) target = $region48
      $region47: #{lstm_forward.2} parent=39 // pred_region
        %v245 = vld [vmem:[%s222] sm:$0xf]
        %v246 = vld [vmem:[%s222 + $0x4] sm:$0xf]
        %v247 = vld [vmem:[%s222 + $0x8] sm:$0xf]
        %v248 = vld [vmem:[%s222 + $0xc] sm:$0xf]
        %v249 = vld [vmem:[%s3] sm:$0xff]
        %v250 = vld [vmem:[%s3 + $0x8] sm:$0xff]
        %v251 = vld [vmem:[%s3 + $0x10] sm:$0xff]
        %v252 = vld [vmem:[%s3 + $0x18] sm:$0xff]
        %v253 = vld [vmem:[%s3 + $0x20] sm:$0xff]
        %v254 = vld [vmem:[%s3 + $0x28] sm:$0xff]
        %v255 = vld [vmem:[%s3 + $0x30] sm:$0xff]
        %v256 = vld [vmem:[%s3 + $0x38] sm:$0xff]
        %v257 = vld [vmem:[%s3 + $0x40] sm:$0xff]
        %v258 = vld [vmem:[%s3 + $0x48] sm:$0xff]
        %v259 = vld [vmem:[%s3 + $0x50] sm:$0xff]
        %v260 = vld [vmem:[%s3 + $0x58] sm:$0xff]
        %v261 = vld [vmem:[%s3 + $0x60] sm:$0xff]
        %v262 = vld [vmem:[%s3 + $0x68] sm:$0xff]
        %v263 = vld [vmem:[%s3 + $0x70] sm:$0xff]
        %v264 = vld [vmem:[%s3 + $0x78] sm:$0xff]
        %v265 = vld [vmem:[%s3 + $0x80] sm:$0xff]
        %v266 = vld [vmem:[%s3 + $0x88] sm:$0xff]
        %v267 = vld [vmem:[%s3 + $0x90] sm:$0xff]
        %v268 = vld [vmem:[%s3 + $0x98] sm:$0xff]
        %v269 = vld [vmem:[%s3 + $0xa0] sm:$0xff]
        %v270 = vld [vmem:[%s3 + $0xa8] sm:$0xff]
        %v271 = vld [vmem:[%s3 + $0xb0] sm:$0xff]
        %v272 = vld [vmem:[%s3 + $0xb8] sm:$0xff]
        %v273 = vld [vmem:[%s3 + $0xc0] sm:$0xff]
        %v274 = vld [vmem:[%s3 + $0xc8] sm:$0xff]
        %v275 = vld [vmem:[%s3 + $0xd0] sm:$0xff]
        %v276 = vld [vmem:[%s3 + $0xd8] sm:$0xff]
        %v277 = vld [vmem:[%s3 + $0xe0] sm:$0xff]
        %v278 = vld [vmem:[%s3 + $0xe8] sm:$0xff]
        %v279 = vld [vmem:[%s3 + $0xf0] sm:$0xff]
        %v280 = vld [vmem:[%s3 + $0xf8] sm:$0xff]
        %v281 = vld [vmem:[%s5] sm:$0xf]
        %v283 = vlaneseq
        %v284 = vshrl.u32 %v283, 7
        %v285 = vsub.s32 0, %v284
        %v286 = vrot.slane %v281, %v285
        %v287 = vlaneseq
        %v288 = vshrl.u32 %v287, 7
        %v289 = vsub.s32 1, %v288
        %v290 = vrot.slane %v281, %v289
        %v291 = vlaneseq
        %v292 = vshrl.u32 %v291, 7
        %v293 = vsub.s32 2, %v292
        %v294 = vrot.slane %v281, %v293
        %v295 = vlaneseq
        %v296 = vshrl.u32 %v295, 7
        %v297 = vsub.s32 3, %v296
        %v298 = vrot.slane %v281, %v297
        %v307 = vunpack.c.l.b16 %v245
        %v308 = vunpack.c.l.b16 %v246
        %v309 = vunpack.c.l.b16 %v247
        %v310 = vunpack.c.l.b16 %v248
        %v311 = vpack.c.b16 %v308, %v307
        %v312 = vpack.c.b16 %v310, %v309
        %v347 = vunpack.c.l.b16 %v249
        %v348 = vunpack.c.h.b16 %v249
        %v349 = vunpack.c.l.b16 %v250
        %v350 = vunpack.c.h.b16 %v250
        %v351 = vunpack.c.l.b16 %v251
        %v352 = vunpack.c.h.b16 %v251
        %v353 = vunpack.c.l.b16 %v252
        %v354 = vunpack.c.h.b16 %v252
        %v355 = vunpack.c.l.b16 %v253
        %v356 = vunpack.c.h.b16 %v253
        %v357 = vunpack.c.l.b16 %v254
        %v358 = vunpack.c.h.b16 %v254
        %v359 = vunpack.c.l.b16 %v255
        %v360 = vunpack.c.h.b16 %v255
        %v361 = vunpack.c.l.b16 %v256
        %v362 = vunpack.c.h.b16 %v256
        %v363 = vunpack.c.l.b16 %v257
        %v364 = vunpack.c.h.b16 %v257
        %v365 = vunpack.c.l.b16 %v258
        %v366 = vunpack.c.h.b16 %v258
        %v367 = vunpack.c.l.b16 %v259
        %v368 = vunpack.c.h.b16 %v259
        %v369 = vunpack.c.l.b16 %v260
        %v370 = vunpack.c.h.b16 %v260
        %v371 = vunpack.c.l.b16 %v261
        %v372 = vunpack.c.h.b16 %v261
        %v373 = vunpack.c.l.b16 %v262
        %v374 = vunpack.c.h.b16 %v262
        %v375 = vunpack.c.l.b16 %v263
        %v376 = vunpack.c.h.b16 %v263
        %v377 = vunpack.c.l.b16 %v264
        %v378 = vunpack.c.h.b16 %v264
        %v379 = vunpack.c.l.b16 %v265
        %v380 = vunpack.c.h.b16 %v265
        %v381 = vunpack.c.l.b16 %v266
        %v382 = vunpack.c.h.b16 %v266
        %v383 = vunpack.c.l.b16 %v267
        %v384 = vunpack.c.h.b16 %v267
        %v385 = vunpack.c.l.b16 %v268
        %v386 = vunpack.c.h.b16 %v268
        %v387 = vunpack.c.l.b16 %v269
        %v388 = vunpack.c.h.b16 %v269
        %v389 = vunpack.c.l.b16 %v270
        %v390 = vunpack.c.h.b16 %v270
        %v391 = vunpack.c.l.b16 %v271
        %v392 = vunpack.c.h.b16 %v271
        %v393 = vunpack.c.l.b16 %v272
        %v394 = vunpack.c.h.b16 %v272
        %v395 = vunpack.c.l.b16 %v273
        %v396 = vunpack.c.h.b16 %v273
        %v397 = vunpack.c.l.b16 %v274
        %v398 = vunpack.c.h.b16 %v274
        %v399 = vunpack.c.l.b16 %v275
        %v400 = vunpack.c.h.b16 %v275
        %v401 = vunpack.c.l.b16 %v276
        %v402 = vunpack.c.h.b16 %v276
        %v403 = vunpack.c.l.b16 %v277
        %v404 = vunpack.c.h.b16 %v277
        %v405 = vunpack.c.l.b16 %v278
        %v406 = vunpack.c.h.b16 %v278
        %v407 = vunpack.c.l.b16 %v279
        %v408 = vunpack.c.h.b16 %v279
        %v409 = vunpack.c.l.b16 %v280
        %v410 = vunpack.c.h.b16 %v280
        %v411 = vpack.c.b16 %v351, %v347
        %v412 = vpack.c.b16 %v352, %v348
        %v413 = vpack.c.b16 %v353, %v349
        %v414 = vpack.c.b16 %v354, %v350
        %v415 = vpack.c.b16 %v359, %v355
        %v416 = vpack.c.b16 %v360, %v356
        %v417 = vpack.c.b16 %v361, %v357
        %v418 = vpack.c.b16 %v362, %v358
        %v419 = vpack.c.b16 %v367, %v363
        %v420 = vpack.c.b16 %v368, %v364
        %v421 = vpack.c.b16 %v369, %v365
        %v422 = vpack.c.b16 %v370, %v366
        %v423 = vpack.c.b16 %v375, %v371
        %v424 = vpack.c.b16 %v376, %v372
        %v425 = vpack.c.b16 %v377, %v373
        %v426 = vpack.c.b16 %v378, %v374
        %v427 = vpack.c.b16 %v383, %v379
        %v428 = vpack.c.b16 %v384, %v380
        %v429 = vpack.c.b16 %v385, %v381
        %v430 = vpack.c.b16 %v386, %v382
        %v431 = vpack.c.b16 %v391, %v387
        %v432 = vpack.c.b16 %v392, %v388
        %v433 = vpack.c.b16 %v393, %v389
        %v434 = vpack.c.b16 %v394, %v390
        %v435 = vpack.c.b16 %v399, %v395
        %v436 = vpack.c.b16 %v400, %v396
        %v437 = vpack.c.b16 %v401, %v397
        %v438 = vpack.c.b16 %v402, %v398
        %v439 = vpack.c.b16 %v407, %v403
        %v440 = vpack.c.b16 %v408, %v404
        %v441 = vpack.c.b16 %v409, %v405
        %v442 = vpack.c.b16 %v410, %v406
        %475 = vmatprep.subr.bf16.mxu0 %v412
        %476 = vmatpush1.bf16.msra.mxu0 %v411
        %477 = vmatprep.subr.bf16.mxu0 %v416
        %478 = vmatpush1.bf16.msra.mxu0 %v415
        %479 = vmatprep.subr.bf16.mxu0 %v420
        %480 = vmatpush1.bf16.msra.mxu0 %v419
        %481 = vmatprep.subr.bf16.mxu0 %v424
        %482 = vmatpush1.bf16.msra.mxu0 %v423
        %483 = vmatprep.subr.bf16.mxu0 %v428
        %484 = vmatpush1.bf16.msra.mxu0 %v427
        %485 = vmatprep.subr.bf16.mxu0 %v432
        %486 = vmatpush1.bf16.msra.mxu0 %v431
        %487 = vmatprep.subr.bf16.mxu0 %v436
        %488 = vmatpush1.bf16.msra.mxu0 %v435
        %489 = vmatprep.subr.bf16.mxu0 %v440
        %490 = vmatpush1.bf16.msra.mxu0 %v439
        %491 = vmatprep.subr.bf16.mxu0 0
        %492 = vmatpush1.bf16.msra.mxu0 0
        %493 = vmatprep.subr.bf16.mxu0 0
        %494 = vmatpush1.bf16.msra.mxu0 0
        %495 = vmatprep.subr.bf16.mxu0 0
        %496 = vmatpush1.bf16.msra.mxu0 0
        %497 = vmatprep.subr.bf16.mxu0 0
        %498 = vmatpush1.bf16.msra.mxu0 0
        %499 = vmatprep.subr.bf16.mxu0 0
        %500 = vmatpush1.bf16.msra.mxu0 0
        %501 = vmatprep.subr.bf16.mxu0 0
        %502 = vmatpush1.bf16.msra.mxu0 0
        %503 = vmatprep.subr.bf16.mxu0 0
        %504 = vmatpush1.bf16.msra.mxu0 0
        %505 = vmatprep.subr.bf16.mxu0 0
        %506 = vmatpush1.bf16.msra.mxu0 0
        %507 = vmatprep.mubr.bf16.mxu0 0
        %508 = vmatmul.mubr.bf16.gmra.mrb[0].mxu0 %v311
        %v509 = vpop.f32.mrb[0].mxu0
        %v510 = vadd.f32 %v286, %v509
        %v511 = vpop.f32.mrb[0].mxu0
        %v512 = vadd.f32 %v290, %v511
        %v513 = vpop.f32.mrb[0].mxu0
        %v514 = vadd.f32 %v286, %v513
        %v515 = vpop.f32.mrb[0].mxu0
        %v516 = vadd.f32 %v290, %v515
        %517 = vmatprep.mubr.bf16.mxu0 0
        %518 = vmatmul.mubr.bf16.gmra.mrb[0].mxu0 %v312
        %v519 = vpop.f32.mrb[0].mxu0
        %v520 = vadd.f32 %v286, %v519
        %v521 = vpop.f32.mrb[0].mxu0
        %v522 = vadd.f32 %v290, %v521
        %v523 = vpop.f32.mrb[0].mxu0
        %v524 = vadd.f32 %v286, %v523
        %v525 = vpop.f32.mrb[0].mxu0
        %v526 = vadd.f32 %v290, %v525
        %527 = vdwg.mxu0
        %528 = vmatprep.subr.bf16.mxu0 %v414
        %529 = vmatpush1.bf16.msra.mxu0 %v413
        %530 = vmatprep.subr.bf16.mxu0 %v418
        %531 = vmatpush1.bf16.msra.mxu0 %v417
        %532 = vmatprep.subr.bf16.mxu0 %v422
        %533 = vmatpush1.bf16.msra.mxu0 %v421
        %534 = vmatprep.subr.bf16.mxu0 %v426
        %535 = vmatpush1.bf16.msra.mxu0 %v425
        %536 = vmatprep.subr.bf16.mxu0 %v430
        %537 = vmatpush1.bf16.msra.mxu0 %v429
        %538 = vmatprep.subr.bf16.mxu0 %v434
        %539 = vmatpush1.bf16.msra.mxu0 %v433
        %540 = vmatprep.subr.bf16.mxu0 %v438
        %541 = vmatpush1.bf16.msra.mxu0 %v437
        %542 = vmatprep.subr.bf16.mxu0 %v442
        %543 = vmatpush1.bf16.msra.mxu0 %v441
        %544 = vmatprep.subr.bf16.mxu0 0
        %545 = vmatpush1.bf16.msra.mxu0 0
        %546 = vmatprep.subr.bf16.mxu0 0
        %547 = vmatpush1.bf16.msra.mxu0 0
        %548 = vmatprep.subr.bf16.mxu0 0
        %549 = vmatpush1.bf16.msra.mxu0 0
        %550 = vmatprep.subr.bf16.mxu0 0
        %551 = vmatpush1.bf16.msra.mxu0 0
        %552 = vmatprep.subr.bf16.mxu0 0
        %553 = vmatpush1.bf16.msra.mxu0 0
        %554 = vmatprep.subr.bf16.mxu0 0
        %555 = vmatpush1.bf16.msra.mxu0 0
        %556 = vmatprep.subr.bf16.mxu0 0
        %557 = vmatpush1.bf16.msra.mxu0 0
        %558 = vmatprep.subr.bf16.mxu0 0
        %559 = vmatpush1.bf16.msra.mxu0 0
        %560 = vmatprep.mubr.bf16.mxu0 0
        %561 = vmatmul.mubr.bf16.gmra.mrb[0].mxu0 %v311
        %v562 = vpop.f32.mrb[0].mxu0
        %v563 = vadd.f32 %v294, %v562
        %v564 = vpop.f32.mrb[0].mxu0
        %v565 = vadd.f32 %v298, %v564
        %v566 = vpop.f32.mrb[0].mxu0
        %v567 = vadd.f32 %v294, %v566
        %v568 = vpop.f32.mrb[0].mxu0
        %v569 = vadd.f32 %v298, %v568
        %570 = vmatprep.mubr.bf16.mxu0 0
        %571 = vmatmul.mubr.bf16.gmra.mrb[0].mxu0 %v312
        %v572 = vpop.f32.mrb[0].mxu0
        %v573 = vadd.f32 %v294, %v572
        %v574 = vpop.f32.mrb[0].mxu0
        %v575 = vadd.f32 %v298, %v574
        %v576 = vpop.f32.mrb[0].mxu0
        %v577 = vadd.f32 %v294, %v576
        %v578 = vpop.f32.mrb[0].mxu0
        %v579 = vadd.f32 %v298, %v578
        %580 = vdwg.mxu0
        %v581 = vpack.c.bf16 %v514, %v510
        %v582 = vpack.c.bf16 %v516, %v512
        %v583 = vpack.c.bf16 %v567, %v563
        %v584 = vpack.c.bf16 %v569, %v565
        %v585 = vpack.c.bf16 %v524, %v520
        %v586 = vpack.c.bf16 %v526, %v522
        %v587 = vpack.c.bf16 %v577, %v573
        %v588 = vpack.c.bf16 %v579, %v575
        %589 = vst [vmem:[#allocation2] sm:$0xff] %v581
        %590 = vst [vmem:[#allocation2 + $0x8] sm:$0xff] %v582
        %591 = vst [vmem:[#allocation2 + $0x10] sm:$0xff] %v583
        %592 = vst [vmem:[#allocation2 + $0x18] sm:$0xff] %v584
        %593 = vst [vmem:[#allocation2 + $0x20] sm:$0xff] %v585
        %594 = vst [vmem:[#allocation2 + $0x28] sm:$0xff] %v586
        %595 = vst [vmem:[#allocation2 + $0x30] sm:$0xff] %v587
        %596 = vst [vmem:[#allocation2 + $0x38] sm:$0xff] %v588
        %v597 = vld [vmem:[%s2] sm:$0xff]
        %v598 = vld [vmem:[%s2 + $0x8] sm:$0xff]
        %v599 = vld [vmem:[#allocation3] sm:$0xff]
        %v600 = vld [vmem:[#allocation3 + $0x8] sm:$0xff]
        %v601 = vld [vmem:[#allocation4] sm:$0xff]
        %v602 = vld [vmem:[#allocation4 + $0x8] sm:$0xff]
        %s603 = smul.u32 0, 4
        %s604 = smul.addr %s603, 8
        %s605 = scalar_lea.vmem [#allocation2], %s604
        %v606 = vld [vmem:[%s605] sm:$0xff]
        %v607 = vld [vmem:[%s605 + $0x8] sm:$0xff]
        %v608 = vld [vmem:[%s605 + $0x10] sm:$0xff]
        %v609 = vld [vmem:[%s605 + $0x18] sm:$0xff]
        %v610 = vunpack.c.l.bf16 %v606
        %v611 = vunpack.c.l.bf16 %v607
        %v612 = vunpack.c.l.bf16 %v608
        %v613 = vunpack.c.l.bf16 %v609
        %v614 = vunpack.c.h.bf16 %v606
        %v615 = vunpack.c.h.bf16 %v607
        %v616 = vunpack.c.h.bf16 %v608
        %v617 = vunpack.c.h.bf16 %v609
        %v618 = vpack.c.bf16 %v600, %v599
        %v619 = vld [vmem:[%s4] sm:$0xff]
        %v620 = vld [vmem:[%s4 + $0x8] sm:$0xff]
        %v621 = vld [vmem:[%s4 + $0x10] sm:$0xff]
        %v622 = vld [vmem:[%s4 + $0x18] sm:$0xff]
        %v623 = vld [vmem:[%s4 + $0x20] sm:$0xff]
        %v624 = vld [vmem:[%s4 + $0x28] sm:$0xff]
        %v625 = vld [vmem:[%s4 + $0x30] sm:$0xff]
        %v626 = vld [vmem:[%s4 + $0x38] sm:$0xff]
        %v627 = vld [vmem:[%s4 + $0x40] sm:$0xff]
        %v628 = vld [vmem:[%s4 + $0x48] sm:$0xff]
        %v629 = vld [vmem:[%s4 + $0x50] sm:$0xff]
        %v630 = vld [vmem:[%s4 + $0x58] sm:$0xff]
        %v631 = vld [vmem:[%s4 + $0x60] sm:$0xff]
        %v632 = vld [vmem:[%s4 + $0x68] sm:$0xff]
        %v633 = vld [vmem:[%s4 + $0x70] sm:$0xff]
        %v634 = vld [vmem:[%s4 + $0x78] sm:$0xff]
        %v635 = vld [vmem:[%s4 + $0x80] sm:$0xff]
        %v636 = vld [vmem:[%s4 + $0x88] sm:$0xff]
        %v637 = vld [vmem:[%s4 + $0x90] sm:$0xff]
        %v638 = vld [vmem:[%s4 + $0x98] sm:$0xff]
        %v639 = vld [vmem:[%s4 + $0xa0] sm:$0xff]
        %v640 = vld [vmem:[%s4 + $0xa8] sm:$0xff]
        %v641 = vld [vmem:[%s4 + $0xb0] sm:$0xff]
        %v642 = vld [vmem:[%s4 + $0xb8] sm:$0xff]
        %v643 = vld [vmem:[%s4 + $0xc0] sm:$0xff]
        %v644 = vld [vmem:[%s4 + $0xc8] sm:$0xff]
        %v645 = vld [vmem:[%s4 + $0xd0] sm:$0xff]
        %v646 = vld [vmem:[%s4 + $0xd8] sm:$0xff]
        %v647 = vld [vmem:[%s4 + $0xe0] sm:$0xff]
        %v648 = vld [vmem:[%s4 + $0xe8] sm:$0xff]
        %v649 = vld [vmem:[%s4 + $0xf0] sm:$0xff]
        %v650 = vld [vmem:[%s4 + $0xf8] sm:$0xff]
        %v683 = vunpack.c.l.b16 %v619
        %v684 = vunpack.c.h.b16 %v619
        %v685 = vunpack.c.l.b16 %v620
        %v686 = vunpack.c.h.b16 %v620
        %v687 = vunpack.c.l.b16 %v621
        %v688 = vunpack.c.h.b16 %v621
        %v689 = vunpack.c.l.b16 %v622
        %v690 = vunpack.c.h.b16 %v622
        %v691 = vunpack.c.l.b16 %v623
        %v692 = vunpack.c.h.b16 %v623
        %v693 = vunpack.c.l.b16 %v624
        %v694 = vunpack.c.h.b16 %v624
        %v695 = vunpack.c.l.b16 %v625
        %v696 = vunpack.c.h.b16 %v625
        %v697 = vunpack.c.l.b16 %v626
        %v698 = vunpack.c.h.b16 %v626
        %v699 = vunpack.c.l.b16 %v627
        %v700 = vunpack.c.h.b16 %v627
        %v701 = vunpack.c.l.b16 %v628
        %v702 = vunpack.c.h.b16 %v628
        %v703 = vunpack.c.l.b16 %v629
        %v704 = vunpack.c.h.b16 %v629
        %v705 = vunpack.c.l.b16 %v630
        %v706 = vunpack.c.h.b16 %v630
        %v707 = vunpack.c.l.b16 %v631
        %v708 = vunpack.c.h.b16 %v631
        %v709 = vunpack.c.l.b16 %v632
        %v710 = vunpack.c.h.b16 %v632
        %v711 = vunpack.c.l.b16 %v633
        %v712 = vunpack.c.h.b16 %v633
        %v713 = vunpack.c.l.b16 %v634
        %v714 = vunpack.c.h.b16 %v634
        %v715 = vunpack.c.l.b16 %v635
        %v716 = vunpack.c.h.b16 %v635
        %v717 = vunpack.c.l.b16 %v636
        %v718 = vunpack.c.h.b16 %v636
        %v719 = vunpack.c.l.b16 %v637
        %v720 = vunpack.c.h.b16 %v637
        %v721 = vunpack.c.l.b16 %v638
        %v722 = vunpack.c.h.b16 %v638
        %v723 = vunpack.c.l.b16 %v639
        %v724 = vunpack.c.h.b16 %v639
        %v725 = vunpack.c.l.b16 %v640
        %v726 = vunpack.c.h.b16 %v640
        %v727 = vunpack.c.l.b16 %v641
        %v728 = vunpack.c.h.b16 %v641
        %v729 = vunpack.c.l.b16 %v642
        %v730 = vunpack.c.h.b16 %v642
        %v731 = vunpack.c.l.b16 %v643
        %v732 = vunpack.c.h.b16 %v643
        %v733 = vunpack.c.l.b16 %v644
        %v734 = vunpack.c.h.b16 %v644
        %v735 = vunpack.c.l.b16 %v645
        %v736 = vunpack.c.h.b16 %v645
        %v737 = vunpack.c.l.b16 %v646
        %v738 = vunpack.c.h.b16 %v646
        %v739 = vunpack.c.l.b16 %v647
        %v740 = vunpack.c.h.b16 %v647
        %v741 = vunpack.c.l.b16 %v648
        %v742 = vunpack.c.h.b16 %v648
        %v743 = vunpack.c.l.b16 %v649
        %v744 = vunpack.c.h.b16 %v649
        %v745 = vunpack.c.l.b16 %v650
        %v746 = vunpack.c.h.b16 %v650
        %v747 = vpack.c.b16 %v687, %v683
        %v748 = vpack.c.b16 %v688, %v684
        %v749 = vpack.c.b16 %v689, %v685
        %v750 = vpack.c.b16 %v690, %v686
        %v751 = vpack.c.b16 %v695, %v691
        %v752 = vpack.c.b16 %v696, %v692
        %v753 = vpack.c.b16 %v697, %v693
        %v754 = vpack.c.b16 %v698, %v694
        %v755 = vpack.c.b16 %v703, %v699
        %v756 = vpack.c.b16 %v704, %v700
        %v757 = vpack.c.b16 %v705, %v701
        %v758 = vpack.c.b16 %v706, %v702
        %v759 = vpack.c.b16 %v711, %v707
        %v760 = vpack.c.b16 %v712, %v708
        %v761 = vpack.c.b16 %v713, %v709
        %v762 = vpack.c.b16 %v714, %v710
        %v763 = vpack.c.b16 %v719, %v715
        %v764 = vpack.c.b16 %v720, %v716
        %v765 = vpack.c.b16 %v721, %v717
        %v766 = vpack.c.b16 %v722, %v718
        %v767 = vpack.c.b16 %v727, %v723
        %v768 = vpack.c.b16 %v728, %v724
        %v769 = vpack.c.b16 %v729, %v725
        %v770 = vpack.c.b16 %v730, %v726
        %v771 = vpack.c.b16 %v735, %v731
        %v772 = vpack.c.b16 %v736, %v732
        %v773 = vpack.c.b16 %v737, %v733
        %v774 = vpack.c.b16 %v738, %v734
        %v775 = vpack.c.b16 %v743, %v739
        %v776 = vpack.c.b16 %v744, %v740
        %v777 = vpack.c.b16 %v745, %v741
        %v778 = vpack.c.b16 %v746, %v742
        %811 = vmatprep.subr.bf16.mxu0 %v748
        %812 = vmatpush1.bf16.msra.mxu0 %v747
        %813 = vmatprep.subr.bf16.mxu0 %v752
        %814 = vmatpush1.bf16.msra.mxu0 %v751
        %815 = vmatprep.subr.bf16.mxu0 %v756
        %816 = vmatpush1.bf16.msra.mxu0 %v755
        %817 = vmatprep.subr.bf16.mxu0 %v760
        %818 = vmatpush1.bf16.msra.mxu0 %v759
        %819 = vmatprep.subr.bf16.mxu0 %v764
        %820 = vmatpush1.bf16.msra.mxu0 %v763
        %821 = vmatprep.subr.bf16.mxu0 %v768
        %822 = vmatpush1.bf16.msra.mxu0 %v767
        %823 = vmatprep.subr.bf16.mxu0 %v772
        %824 = vmatpush1.bf16.msra.mxu0 %v771
        %825 = vmatprep.subr.bf16.mxu0 %v776
        %826 = vmatpush1.bf16.msra.mxu0 %v775
        %827 = vmatprep.subr.bf16.mxu0 0
        %828 = vmatpush1.bf16.msra.mxu0 0
        %829 = vmatprep.subr.bf16.mxu0 0
        %830 = vmatpush1.bf16.msra.mxu0 0
        %831 = vmatprep.subr.bf16.mxu0 0
        %832 = vmatpush1.bf16.msra.mxu0 0
        %833 = vmatprep.subr.bf16.mxu0 0
        %834 = vmatpush1.bf16.msra.mxu0 0
        %835 = vmatprep.subr.bf16.mxu0 0
        %836 = vmatpush1.bf16.msra.mxu0 0
        %837 = vmatprep.subr.bf16.mxu0 0
        %838 = vmatpush1.bf16.msra.mxu0 0
        %839 = vmatprep.subr.bf16.mxu0 0
        %840 = vmatpush1.bf16.msra.mxu0 0
        %841 = vmatprep.subr.bf16.mxu0 0
        %842 = vmatpush1.bf16.msra.mxu0 0
        %843 = vmatprep.mubr.bf16.mxu0 0
        %844 = vmatmul.mubr.bf16.gmra.mrb[0].mxu0 %v618
        %v845 = vpop.f32.mrb[0].mxu0
        %v846 = vadd.f32 0.0, %v845
        %v847 = vpop.f32.mrb[0].mxu0
        %v848 = vadd.f32 0.0, %v847
        %v849 = vpop.f32.mrb[0].mxu0
        %v850 = vadd.f32 0.0, %v849
        %v851 = vpop.f32.mrb[0].mxu0
        %v852 = vadd.f32 0.0, %v851
        %853 = vdwg.mxu0
        %854 = vmatprep.subr.bf16.mxu0 %v750
        %855 = vmatpush1.bf16.msra.mxu0 %v749
        %856 = vmatprep.subr.bf16.mxu0 %v754
        %857 = vmatpush1.bf16.msra.mxu0 %v753
        %858 = vmatprep.subr.bf16.mxu0 %v758
        %859 = vmatpush1.bf16.msra.mxu0 %v757
        %860 = vmatprep.subr.bf16.mxu0 %v762
        %861 = vmatpush1.bf16.msra.mxu0 %v761
        %862 = vmatprep.subr.bf16.mxu0 %v766
        %863 = vmatpush1.bf16.msra.mxu0 %v765
        %864 = vmatprep.subr.bf16.mxu0 %v770
        %865 = vmatpush1.bf16.msra.mxu0 %v769
        %866 = vmatprep.subr.bf16.mxu0 %v774
        %867 = vmatpush1.bf16.msra.mxu0 %v773
        %868 = vmatprep.subr.bf16.mxu0 %v778
        %869 = vmatpush1.bf16.msra.mxu0 %v777
        %870 = vmatprep.subr.bf16.mxu0 0
        %871 = vmatpush1.bf16.msra.mxu0 0
        %872 = vmatprep.subr.bf16.mxu0 0
        %873 = vmatpush1.bf16.msra.mxu0 0
        %874 = vmatprep.subr.bf16.mxu0 0
        %875 = vmatpush1.bf16.msra.mxu0 0
        %876 = vmatprep.subr.bf16.mxu0 0
        %877 = vmatpush1.bf16.msra.mxu0 0
        %878 = vmatprep.subr.bf16.mxu0 0
        %879 = vmatpush1.bf16.msra.mxu0 0
        %880 = vmatprep.subr.bf16.mxu0 0
        %881 = vmatpush1.bf16.msra.mxu0 0
        %882 = vmatprep.subr.bf16.mxu0 0
        %883 = vmatpush1.bf16.msra.mxu0 0
        %884 = vmatprep.subr.bf16.mxu0 0
        %885 = vmatpush1.bf16.msra.mxu0 0
        %886 = vmatprep.mubr.bf16.mxu0 0
        %887 = vmatmul.mubr.bf16.gmra.mrb[0].mxu0 %v618
        %v888 = vpop.f32.mrb[0].mxu0
        %v889 = vadd.f32 0.0, %v888
        %v890 = vpop.f32.mrb[0].mxu0
        %v891 = vadd.f32 0.0, %v890
        %v892 = vpop.f32.mrb[0].mxu0
        %v893 = vadd.f32 0.0, %v892
        %v894 = vpop.f32.mrb[0].mxu0
        %v895 = vadd.f32 0.0, %v894
        %896 = vdwg.mxu0
        %v897 = vadd.f32 %v610, %v846
        %v898 = vadd.f32 %v611, %v848
        %v899 = vadd.f32 %v612, %v889
        %v900 = vadd.f32 %v613, %v891
        %v901 = vadd.f32 %v614, %v850
        %v902 = vadd.f32 %v615, %v852
        %v903 = vadd.f32 %v616, %v893
        %v904 = vadd.f32 %v617, %v895
        %v905 = vmul.f32 %v897, 0.5
        %v906 = vmul.f32 %v901, 0.5
        %v907 = vtanh.pop %v905
        %v908 = vtanh.pop %v906
        %v909 = vmul.f32 %v907, 0.5
        %v910 = vmul.f32 %v908, 0.5
        %v911 = vadd.f32 %v909, 0.5
        %v912 = vadd.f32 %v910, 0.5
        %v913 = vmul.f32 %v898, 0.5
        %v914 = vmul.f32 %v902, 0.5
        %v915 = vtanh.pop %v913
        %v916 = vtanh.pop %v914
        %v917 = vmul.f32 %v915, 0.5
        %v918 = vmul.f32 %v916, 0.5
        %v919 = vadd.f32 %v917, 0.5
        %v920 = vadd.f32 %v918, 0.5
        %v921 = vtanh.pop %v899
        %v922 = vtanh.pop %v903
        %v923 = vmul.f32 %v900, 0.5
        %v924 = vmul.f32 %v904, 0.5
        %v925 = vtanh.pop %v923
        %v926 = vtanh.pop %v924
        %v927 = vmul.f32 %v925, 0.5
        %v928 = vmul.f32 %v926, 0.5
        %v929 = vadd.f32 %v927, 0.5
        %v930 = vadd.f32 %v928, 0.5
        %v931 = vmul.f32 %v919, %v601
        %v932 = vmul.f32 %v920, %v602
        %v933 = vmul.f32 %v911, %v921
        %v934 = vmul.f32 %v912, %v922
        %v935 = vadd.f32 %v931, %v933
        %v936 = vadd.f32 %v932, %v934
        %v937 = vtanh.pop %v935
        %v938 = vtanh.pop %v936
        %v939 = vmul.f32 %v929, %v937
        %v940 = vmul.f32 %v930, %v938
        %v941 = vstv %s231
        %vm942 = vcmp.lt.s32.totalorder %v941, %v597
        %vm943 = vcmp.lt.s32.totalorder %v941, %v598
        %v944 = vsel %vm942, 1, 0
        %v945 = vsel %vm943, 1, 0
        %946 = vset.pattern.permute.xlu0 0
        %947 = vperm.xlu0 %946, %v944
        %v948 = vpop.permute.xlu0 %947
        %949 = vset.pattern.permute.xlu0 0
        %950 = vperm.xlu0 %949, %v945
        %v951 = vpop.permute.xlu0 %950
        %vm952 = vcmp.eq.s32.totalorder %v948, 1
        %vm953 = vcmp.eq.s32.totalorder %v951, 1
        %v954 = vsel %vm952, %v939, %v599
        %v955 = vsel %vm953, %v940, %v600
        %v956 = vsel %vm952, %v935, %v601
        %v957 = vsel %vm953, %v936, %v602
        %v958 = vpack.c.bf16 %v955, %v954
        %v960 = vunpack.c.l.b16 %v958
        %v961 = vunpack.c.h.b16 %v958
        %v962 = vpack.c.b16 %v960, %v960
        %v963 = vpack.c.b16 %v961, %v961
        %966 = vst [vmem:[%s228] sm:$0xf] %v962
        %967 = vst [vmem:[%s228 + $0x4] sm:$0xf] %v963
        %s968 = smul.u32 1, 4
        %s969 = smul.addr %s968, 8
        %s970 = scalar_lea.vmem [#allocation2], %s969
        %v971 = vld [vmem:[%s970] sm:$0xff]
        %v972 = vld [vmem:[%s970 + $0x8] sm:$0xff]
        %v973 = vld [vmem:[%s970 + $0x10] sm:$0xff]
        %v974 = vld [vmem:[%s970 + $0x18] sm:$0xff]
        %v975 = vunpack.c.l.bf16 %v971
        %v976 = vunpack.c.l.bf16 %v972
        %v977 = vunpack.c.l.bf16 %v973
        %v978 = vunpack.c.l.bf16 %v974
        %v979 = vunpack.c.h.bf16 %v971
        %v980 = vunpack.c.h.bf16 %v972
        %v981 = vunpack.c.h.bf16 %v973
        %v982 = vunpack.c.h.bf16 %v974
        %v983 = vld [vmem:[%s4] sm:$0xff]
        %v984 = vld [vmem:[%s4 + $0x8] sm:$0xff]
        %v985 = vld [vmem:[%s4 + $0x10] sm:$0xff]
        %v986 = vld [vmem:[%s4 + $0x18] sm:$0xff]
        %v987 = vld [vmem:[%s4 + $0x20] sm:$0xff]
        %v988 = vld [vmem:[%s4 + $0x28] sm:$0xff]
        %v989 = vld [vmem:[%s4 + $0x30] sm:$0xff]
        %v990 = vld [vmem:[%s4 + $0x38] sm:$0xff]
        %v991 = vld [vmem:[%s4 + $0x40] sm:$0xff]
        %v992 = vld [vmem:[%s4 + $0x48] sm:$0xff]
        %v993 = vld [vmem:[%s4 + $0x50] sm:$0xff]
        %v994 = vld [vmem:[%s4 + $0x58] sm:$0xff]
        %v995 = vld [vmem:[%s4 + $0x60] sm:$0xff]
        %v996 = vld [vmem:[%s4 + $0x68] sm:$0xff]
        %v997 = vld [vmem:[%s4 + $0x70] sm:$0xff]
        %v998 = vld [vmem:[%s4 + $0x78] sm:$0xff]
        %v999 = vld [vmem:[%s4 + $0x80] sm:$0xff]
        %v1000 = vld [vmem:[%s4 + $0x88] sm:$0xff]
        %v1001 = vld [vmem:[%s4 + $0x90] sm:$0xff]
        %v1002 = vld [vmem:[%s4 + $0x98] sm:$0xff]
        %v1003 = vld [vmem:[%s4 + $0xa0] sm:$0xff]
        %v1004 = vld [vmem:[%s4 + $0xa8] sm:$0xff]
        %v1005 = vld [vmem:[%s4 + $0xb0] sm:$0xff]
        %v1006 = vld [vmem:[%s4 + $0xb8] sm:$0xff]
        %v1007 = vld [vmem:[%s4 + $0xc0] sm:$0xff]
        %v1008 = vld [vmem:[%s4 + $0xc8] sm:$0xff]
        %v1009 = vld [vmem:[%s4 + $0xd0] sm:$0xff]
        %v1010 = vld [vmem:[%s4 + $0xd8] sm:$0xff]
        %v1011 = vld [vmem:[%s4 + $0xe0] sm:$0xff]
        %v1012 = vld [vmem:[%s4 + $0xe8] sm:$0xff]
        %v1013 = vld [vmem:[%s4 + $0xf0] sm:$0xff]
        %v1014 = vld [vmem:[%s4 + $0xf8] sm:$0xff]
        %v1047 = vunpack.c.l.b16 %v983
        %v1048 = vunpack.c.h.b16 %v983
        %v1049 = vunpack.c.l.b16 %v984
        %v1050 = vunpack.c.h.b16 %v984
        %v1051 = vunpack.c.l.b16 %v985
        %v1052 = vunpack.c.h.b16 %v985
        %v1053 = vunpack.c.l.b16 %v986
        %v1054 = vunpack.c.h.b16 %v986
        %v1055 = vunpack.c.l.b16 %v987
        %v1056 = vunpack.c.h.b16 %v987
        %v1057 = vunpack.c.l.b16 %v988
        %v1058 = vunpack.c.h.b16 %v988
        %v1059 = vunpack.c.l.b16 %v989
        %v1060 = vunpack.c.h.b16 %v989
        %v1061 = vunpack.c.l.b16 %v990
        %v1062 = vunpack.c.h.b16 %v990
        %v1063 = vunpack.c.l.b16 %v991
        %v1064 = vunpack.c.h.b16 %v991
        %v1065 = vunpack.c.l.b16 %v992
        %v1066 = vunpack.c.h.b16 %v992
        %v1067 = vunpack.c.l.b16 %v993
        %v1068 = vunpack.c.h.b16 %v993
        %v1069 = vunpack.c.l.b16 %v994
        %v1070 = vunpack.c.h.b16 %v994
        %v1071 = vunpack.c.l.b16 %v995
        %v1072 = vunpack.c.h.b16 %v995
        %v1073 = vunpack.c.l.b16 %v996
        %v1074 = vunpack.c.h.b16 %v996
        %v1075 = vunpack.c.l.b16 %v997
        %v1076 = vunpack.c.h.b16 %v997
        %v1077 = vunpack.c.l.b16 %v998
        %v1078 = vunpack.c.h.b16 %v998
        %v1079 = vunpack.c.l.b16 %v999
        %v1080 = vunpack.c.h.b16 %v999
        %v1081 = vunpack.c.l.b16 %v1000
        %v1082 = vunpack.c.h.b16 %v1000
        %v1083 = vunpack.c.l.b16 %v1001
        %v1084 = vunpack.c.h.b16 %v1001
        %v1085 = vunpack.c.l.b16 %v1002
        %v1086 = vunpack.c.h.b16 %v1002
        %v1087 = vunpack.c.l.b16 %v1003
        %v1088 = vunpack.c.h.b16 %v1003
        %v1089 = vunpack.c.l.b16 %v1004
        %v1090 = vunpack.c.h.b16 %v1004
        %v1091 = vunpack.c.l.b16 %v1005
        %v1092 = vunpack.c.h.b16 %v1005
        %v1093 = vunpack.c.l.b16 %v1006
        %v1094 = vunpack.c.h.b16 %v1006
        %v1095 = vunpack.c.l.b16 %v1007
        %v1096 = vunpack.c.h.b16 %v1007
        %v1097 = vunpack.c.l.b16 %v1008
        %v1098 = vunpack.c.h.b16 %v1008
        %v1099 = vunpack.c.l.b16 %v1009
        %v1100 = vunpack.c.h.b16 %v1009
        %v1101 = vunpack.c.l.b16 %v1010
        %v1102 = vunpack.c.h.b16 %v1010
        %v1103 = vunpack.c.l.b16 %v1011
        %v1104 = vunpack.c.h.b16 %v1011
        %v1105 = vunpack.c.l.b16 %v1012
        %v1106 = vunpack.c.h.b16 %v1012
        %v1107 = vunpack.c.l.b16 %v1013
        %v1108 = vunpack.c.h.b16 %v1013
        %v1109 = vunpack.c.l.b16 %v1014
        %v1110 = vunpack.c.h.b16 %v1014
        %v1111 = vpack.c.b16 %v1051, %v1047
        %v1112 = vpack.c.b16 %v1052, %v1048
        %v1113 = vpack.c.b16 %v1053, %v1049
        %v1114 = vpack.c.b16 %v1054, %v1050
        %v1115 = vpack.c.b16 %v1059, %v1055
        %v1116 = vpack.c.b16 %v1060, %v1056
        %v1117 = vpack.c.b16 %v1061, %v1057
        %v1118 = vpack.c.b16 %v1062, %v1058
        %v1119 = vpack.c.b16 %v1067, %v1063
        %v1120 = vpack.c.b16 %v1068, %v1064
        %v1121 = vpack.c.b16 %v1069, %v1065
        %v1122 = vpack.c.b16 %v1070, %v1066
        %v1123 = vpack.c.b16 %v1075, %v1071
        %v1124 = vpack.c.b16 %v1076, %v1072
        %v1125 = vpack.c.b16 %v1077, %v1073
        %v1126 = vpack.c.b16 %v1078, %v1074
        %v1127 = vpack.c.b16 %v1083, %v1079
        %v1128 = vpack.c.b16 %v1084, %v1080
        %v1129 = vpack.c.b16 %v1085, %v1081
        %v1130 = vpack.c.b16 %v1086, %v1082
        %v1131 = vpack.c.b16 %v1091, %v1087
        %v1132 = vpack.c.b16 %v1092, %v1088
        %v1133 = vpack.c.b16 %v1093, %v1089
        %v1134 = vpack.c.b16 %v1094, %v1090
        %v1135 = vpack.c.b16 %v1099, %v1095
        %v1136 = vpack.c.b16 %v1100, %v1096
        %v1137 = vpack.c.b16 %v1101, %v1097
        %v1138 = vpack.c.b16 %v1102, %v1098
        %v1139 = vpack.c.b16 %v1107, %v1103
        %v1140 = vpack.c.b16 %v1108, %v1104
        %v1141 = vpack.c.b16 %v1109, %v1105
        %v1142 = vpack.c.b16 %v1110, %v1106
        %1175 = vmatprep.subr.bf16.mxu0 %v1112
        %1176 = vmatpush1.bf16.msra.mxu0 %v1111
        %1177 = vmatprep.subr.bf16.mxu0 %v1116
        %1178 = vmatpush1.bf16.msra.mxu0 %v1115
        %1179 = vmatprep.subr.bf16.mxu0 %v1120
        %1180 = vmatpush1.bf16.msra.mxu0 %v1119
        %1181 = vmatprep.subr.bf16.mxu0 %v1124
        %1182 = vmatpush1.bf16.msra.mxu0 %v1123
        %1183 = vmatprep.subr.bf16.mxu0 %v1128
        %1184 = vmatpush1.bf16.msra.mxu0 %v1127
        %1185 = vmatprep.subr.bf16.mxu0 %v1132
        %1186 = vmatpush1.bf16.msra.mxu0 %v1131
        %1187 = vmatprep.subr.bf16.mxu0 %v1136
        %1188 = vmatpush1.bf16.msra.mxu0 %v1135
        %1189 = vmatprep.subr.bf16.mxu0 %v1140
        %1190 = vmatpush1.bf16.msra.mxu0 %v1139
        %1191 = vmatprep.subr.bf16.mxu0 0
        %1192 = vmatpush1.bf16.msra.mxu0 0
        %1193 = vmatprep.subr.bf16.mxu0 0
        %1194 = vmatpush1.bf16.msra.mxu0 0
        %1195 = vmatprep.subr.bf16.mxu0 0
        %1196 = vmatpush1.bf16.msra.mxu0 0
        %1197 = vmatprep.subr.bf16.mxu0 0
        %1198 = vmatpush1.bf16.msra.mxu0 0
        %1199 = vmatprep.subr.bf16.mxu0 0
        %1200 = vmatpush1.bf16.msra.mxu0 0
        %1201 = vmatprep.subr.bf16.mxu0 0
        %1202 = vmatpush1.bf16.msra.mxu0 0
        %1203 = vmatprep.subr.bf16.mxu0 0
        %1204 = vmatpush1.bf16.msra.mxu0 0
        %1205 = vmatprep.subr.bf16.mxu0 0
        %1206 = vmatpush1.bf16.msra.mxu0 0
        %1207 = vmatprep.mubr.bf16.mxu0 0
        %1208 = vmatmul.mubr.bf16.gmra.mrb[0].mxu0 %v958
        %v1209 = vpop.f32.mrb[0].mxu0
        %v1210 = vadd.f32 0.0, %v1209
        %v1211 = vpop.f32.mrb[0].mxu0
        %v1212 = vadd.f32 0.0, %v1211
        %v1213 = vpop.f32.mrb[0].mxu0
        %v1214 = vadd.f32 0.0, %v1213
        %v1215 = vpop.f32.mrb[0].mxu0
        %v1216 = vadd.f32 0.0, %v1215
        %1217 = vdwg.mxu0
        %1218 = vmatprep.subr.bf16.mxu0 %v1114
        %1219 = vmatpush1.bf16.msra.mxu0 %v1113
        %1220 = vmatprep.subr.bf16.mxu0 %v1118
        %1221 = vmatpush1.bf16.msra.mxu0 %v1117
        %1222 = vmatprep.subr.bf16.mxu0 %v1122
        %1223 = vmatpush1.bf16.msra.mxu0 %v1121
        %1224 = vmatprep.subr.bf16.mxu0 %v1126
        %1225 = vmatpush1.bf16.msra.mxu0 %v1125
        %1226 = vmatprep.subr.bf16.mxu0 %v1130
        %1227 = vmatpush1.bf16.msra.mxu0 %v1129
        %1228 = vmatprep.subr.bf16.mxu0 %v1134
        %1229 = vmatpush1.bf16.msra.mxu0 %v1133
        %1230 = vmatprep.subr.bf16.mxu0 %v1138
        %1231 = vmatpush1.bf16.msra.mxu0 %v1137
        %1232 = vmatprep.subr.bf16.mxu0 %v1142
        %1233 = vmatpush1.bf16.msra.mxu0 %v1141
        %1234 = vmatprep.subr.bf16.mxu0 0
        %1235 = vmatpush1.bf16.msra.mxu0 0
        %1236 = vmatprep.subr.bf16.mxu0 0
        %1237 = vmatpush1.bf16.msra.mxu0 0
        %1238 = vmatprep.subr.bf16.mxu0 0
        %1239 = vmatpush1.bf16.msra.mxu0 0
        %1240 = vmatprep.subr.bf16.mxu0 0
        %1241 = vmatpush1.bf16.msra.mxu0 0
        %1242 = vmatprep.subr.bf16.mxu0 0
        %1243 = vmatpush1.bf16.msra.mxu0 0
        %1244 = vmatprep.subr.bf16.mxu0 0
        %1245 = vmatpush1.bf16.msra.mxu0 0
        %1246 = vmatprep.subr.bf16.mxu0 0
        %1247 = vmatpush1.bf16.msra.mxu0 0
        %1248 = vmatprep.subr.bf16.mxu0 0
        %1249 = vmatpush1.bf16.msra.mxu0 0
        %1250 = vmatprep.mubr.bf16.mxu0 0
        %1251 = vmatmul.mubr.bf16.gmra.mrb[0].mxu0 %v958
        %v1252 = vpop.f32.mrb[0].mxu0
        %v1253 = vadd.f32 0.0, %v1252
        %v1254 = vpop.f32.mrb[0].mxu0
        %v1255 = vadd.f32 0.0, %v1254
        %v1256 = vpop.f32.mrb[0].mxu0
        %v1257 = vadd.f32 0.0, %v1256
        %v1258 = vpop.f32.mrb[0].mxu0
        %v1259 = vadd.f32 0.0, %v1258
        %1260 = vdwg.mxu0
        %v1261 = vadd.f32 %v975, %v1210
        %v1262 = vadd.f32 %v976, %v1212
        %v1263 = vadd.f32 %v977, %v1253
        %v1264 = vadd.f32 %v978, %v1255
        %v1265 = vadd.f32 %v979, %v1214
        %v1266 = vadd.f32 %v980, %v1216
        %v1267 = vadd.f32 %v981, %v1257
        %v1268 = vadd.f32 %v982, %v1259
        %v1269 = vmul.f32 %v1261, 0.5
        %v1270 = vmul.f32 %v1265, 0.5
        %v1271 = vtanh.pop %v1269
        %v1272 = vtanh.pop %v1270
        %v1273 = vmul.f32 %v1271, 0.5
        %v1274 = vmul.f32 %v1272, 0.5
        %v1275 = vadd.f32 %v1273, 0.5
        %v1276 = vadd.f32 %v1274, 0.5
        %v1277 = vmul.f32 %v1262, 0.5
        %v1278 = vmul.f32 %v1266, 0.5
        %v1279 = vtanh.pop %v1277
        %v1280 = vtanh.pop %v1278
        %v1281 = vmul.f32 %v1279, 0.5
        %v1282 = vmul.f32 %v1280, 0.5
        %v1283 = vadd.f32 %v1281, 0.5
        %v1284 = vadd.f32 %v1282, 0.5
        %v1285 = vtanh.pop %v1263
        %v1286 = vtanh.pop %v1267
        %v1287 = vmul.f32 %v1264, 0.5
        %v1288 = vmul.f32 %v1268, 0.5
        %v1289 = vtanh.pop %v1287
        %v1290 = vtanh.pop %v1288
        %v1291 = vmul.f32 %v1289, 0.5
        %v1292 = vmul.f32 %v1290, 0.5
        %v1293 = vadd.f32 %v1291, 0.5
        %v1294 = vadd.f32 %v1292, 0.5
        %v1295 = vmul.f32 %v1283, %v956
        %v1296 = vmul.f32 %v1284, %v957
        %v1297 = vmul.f32 %v1275, %v1285
        %v1298 = vmul.f32 %v1276, %v1286
        %v1299 = vadd.f32 %v1295, %v1297
        %v1300 = vadd.f32 %v1296, %v1298
        %v1301 = vtanh.pop %v1299
        %v1302 = vtanh.pop %v1300
        %v1303 = vmul.f32 %v1293, %v1301
        %v1304 = vmul.f32 %v1294, %v1302
        %s1305 = sadd.s32 %s231, 1
        %v1306 = vstv %s1305
        %vm1307 = vcmp.lt.s32.totalorder %v1306, %v597
        %vm1308 = vcmp.lt.s32.totalorder %v1306, %v598
        %v1309 = vsel %vm1307, 1, 0
        %v1310 = vsel %vm1308, 1, 0
        %1311 = vset.pattern.permute.xlu0 0
        %1312 = vperm.xlu0 %1311, %v1309
        %v1313 = vpop.permute.xlu0 %1312
        %1314 = vset.pattern.permute.xlu0 0
        %1315 = vperm.xlu0 %1314, %v1310
        %v1316 = vpop.permute.xlu0 %1315
        %vm1317 = vcmp.eq.s32.totalorder %v1313, 1
        %vm1318 = vcmp.eq.s32.totalorder %v1316, 1
        %v1319 = vsel %vm1317, %v1303, %v954
        %v1320 = vsel %vm1318, %v1304, %v955
        %v1321 = vsel %vm1317, %v1299, %v956
        %v1322 = vsel %vm1318, %v1300, %v957
        %v1323 = vpack.c.bf16 %v1320, %v1319
        %v1325 = vunpack.c.l.b16 %v1323
        %v1326 = vunpack.c.h.b16 %v1323
        %v1327 = vpack.c.b16 %v1325, %v1325
        %v1328 = vpack.c.b16 %v1326, %v1326
        %s1331 = scalar_lea.vmem %s228, 8
        %1332 = vst [vmem:[%s1331] sm:$0xf] %v1327
        %1333 = vst [vmem:[%s1331 + $0x4] sm:$0xf] %v1328
        %1334 = vst [vmem:[#allocation3] sm:$0xff] %v1319
        %1335 = vst [vmem:[#allocation3 + $0x8] sm:$0xff] %v1320
        %1336 = vst [vmem:[#allocation4] sm:$0xff] %v1321
        %1337 = vst [vmem:[#allocation4 + $0x8] sm:$0xff] %v1322
      $region48: #{lstm_forward.2} parent=39 // pred_fallthru
        _
      %s1338 = smul.u32 4, %s18
      %p1339 = scmp.lt.s32.totalorder %s1338, 15
      %s1340 = scalar_select %p1339, %s1338, 15
      %s1341 = smul.addr %s1340, 4
      %s1342 = scalar_lea.vmem %s6, %s1341
      // Predicated region
      $region49: #{lstm_forward.2} parent=39 // pred_check
        %p1343 = pneg %p146
      $region50: #{lstm_forward.2} parent=39 // pred_check_branch
        %1345 = sbr.rel (%p1343) target = $region52
      $region51: #{lstm_forward.2} parent=39 // pred_region
        %s1346 = smul.u32 4, %s18
      $region52: #{lstm_forward.2} parent=39 // pred_fallthru
        _
    $region40: #{lstm_forward.2} parent=5 // pred_fallthru
      _
    %p1347 = scmp.le.s32.totalorder 2, %s13
    // Predicated region
    $region53: #{lstm_forward.2} parent=5 // pred_check
      %p1348 = pneg %p1347
    $region54: #{lstm_forward.2} parent=5 // pred_check_branch
      %1350 = sbr.rel (%p1348) target = $region56
    $region55: #{lstm_forward.2} parent=5 // pred_region
      %s1351 = ssub.s32 %s13, 2
      // Predicated region
      $region57: #{lstm_forward.2} parent=55 // pred_check
        %p1352 = pneg %p152
      $region58: #{lstm_forward.2} parent=55 // pred_check_branch
        %1354 = sbr.rel (%p1352) target = $region60
      $region59: #{lstm_forward.2} parent=55 // pred_region
        %s1355 = smul.u32 4, %s19
        %p1356 = scmp.lt.s32.totalorder %s1355, 15
        %s1357 = scalar_select %p1356, %s1355, 15
        %s1358 = smul.addr %s1357, 4
        %s1359 = scalar_lea.vmem %s6, %s1358
      $region60: #{lstm_forward.2} parent=55 // pred_fallthru
        _
    $region56: #{lstm_forward.2} parent=5 // pred_fallthru
      _
  $region6: #{lstm_forward.2} parent=0 // loop_footer
    %s17 = sadd.s32 1, %s13
  $region7: #{lstm_forward.2} parent=0 // loop_footer_branch
    %12 = sbr.rel target = $region3
  $region8: #{lstm_forward.2} parent=0 // loop_exit
    _

// kernel: lstm_forward.3
$region0: #{lstm_forward.3}
  #allocation0 [shape = 'u32[]', space=smem, size = 0x4, offset = 0x4, fixed_abs, tag = 'smem constant byte address 0x4 - core index']
  #allocation1 [shape = 'u32[144,128]{1,0:T(1,128)}', space=vmem, size = 0x12000, scoped, tag = 'internal scratch']
  #allocation2 [shape = 'bf16[32,512]{1,0:T(16,128)(2,1)}', space=vmem, size = 0x8000, scoped, tag = 'scratch operand']
  #allocation3 [shape = 'f32[16,128]{1,0:T(8,128)}', space=vmem, size = 0x2000, scoped, tag = 'scratch operand']
  #allocation4 [shape = 'f32[16,128]{1,0:T(8,128)}', space=vmem, size = 0x2000, scoped, tag = 'scratch operand']
  #allocation5 [shape = 's32[1]{0}', space=sflag, size = 0x4, scoped, tag = 'scoped memory for lstm_forward.3']
  #allocation6 [shape = 's32[1]{0:T(128)S(6)}', space=smem, size = 0x200, scoped, tag = 'prefetched SMEM operand 0']
  %s0 = inlined_call_operand.<no memory space> [shape: s32[1], index: 0, kind: input, shape index: {}]
  %s1 = inlined_call_operand.vmem [shape: bf16[128,128], index: 1, kind: input, shape index: {}]
  %s2 = inlined_call_operand.vmem [shape: s32[16,1], index: 2, kind: input, shape index: {}]
  %s3 = inlined_call_operand.vmem [shape: bf16[128,512], index: 3, kind: input, shape index: {}]
  %s4 = inlined_call_operand.vmem [shape: bf16[128,512], index: 4, kind: input, shape index: {}]
  %s5 = inlined_call_operand.vmem [shape: f32[1,512], index: 5, kind: input, shape index: {}]
  %s6 = inlined_call_operand.vmem [shape: bf16[128,128], index: 6, kind: input, shape index: {}]
  %s7 = inlined_call_operand.vmem [shape: f32[1,128], index: 7, kind: input, shape index: {}]
  %s8 = inlined_call_operand.vmem [shape: f32[16,128], index: 8, kind: output, shape index: {}]
  %s9 = sld [smem:[#allocation0]]
  $region73: #{lstm_forward.3} parent=0
    _
  %s11 = ssub.s32 1, %s9
  %s12 = scalar_select 0, %s11, %s9
  %13 = sst [smem:[#allocation6]] %s0
  loop: start=0, step=1, limit=6
  $region2: #{lstm_forward.3} parent=0 // loop_pre_header
    _
  $region3: #{lstm_forward.3} parent=0 // loop_header
    %s15 = sphi 0, %s19
    %p16 = scmp.ge.s32.totalorder %s15, 6
    %s25 = sphi 0, %s27
    %s28 = sphi 0, %s25
    %s29 = sphi 0, %s28
    %s45 = sphi 0, %s29
    %s49 = sphi 0, %s49
    %s51 = sphi 0, %s49
    %s52 = sphi 0, %s51
    %s66 = sphi 0, %s52
    %s70 = sphi 0, %s70
    %s72 = sphi 0, %s70
    %s73 = sphi 0, %s72
    %s87 = sphi 0, %s73
    %s91 = sphi 0, %s91
    %s93 = sphi 0, %s91
    %s94 = sphi 0, %s93
    %s108 = sphi 0, %s94
    %s112 = sphi 0, %s112
    %s114 = sphi 0, %s112
    %s115 = sphi 0, %s114
    %s129 = sphi 0, %s115
    %s133 = sphi 0, %s133
    %s135 = sphi 0, %s133
    %s136 = sphi 0, %s135
    %s150 = sphi 0, %s136
    %s154 = sphi 0, %s154
    %s156 = sphi 0, %s154
    %s157 = sphi 0, %s156
    %s171 = sphi 0, %s157
    %s175 = sphi 0, %s175
    %s177 = sphi 0, %s175
    %s178 = sphi 0, %s177
    %s192 = sphi 0, %s178
  $region4: #{lstm_forward.3} parent=0 // loop_header_branch
    %18 = sbr.rel (%p16) target = $region8
  $region5: #{lstm_forward.3} parent=0 // loop_body
    %s20 = ssub.s32 %s15, 1
    %s21 = ssub.s32 %s15, 2
    %s22 = sadd.s32 %s15, 1
    %s23 = ssub.s32 %s15, %s22
    %p24 = scmp.eq.s32.totalorder %s23, 0
    %s26 = sadd.s32 %s25, 1
    %s27 = scalar_select %p24, %s25, %s26
    %p30 = pneg %p24
    %p31 = scmp.eq.s32.totalorder %s15, 3
    %p32 = por %p30, %p31
    %p33 = scmp.ne.s32.totalorder %s25, %s28
    %p34 = scmp.eq.s32.totalorder %s15, 0
    %p35 = por %p33, %p34
    %p36 = scmp.ne.s32.totalorder %s25, %s28
    %p37 = scmp.eq.s32.totalorder %s20, 3
    %p38 = por %p36, %p37
    %p39 = scmp.ne.s32.totalorder %s28, %s29
    %p40 = scmp.eq.s32.totalorder %s20, 0
    %p41 = por %p39, %p40
    %p42 = scmp.ne.s32.totalorder %s28, %s29
    %p43 = scmp.eq.s32.totalorder %s21, 3
    %p44 = por %p42, %p43
    %p46 = scmp.ne.s32.totalorder %s29, %s45
    %p47 = scmp.eq.s32.totalorder %s21, 0
    %p48 = por %p46, %p47
    %s50 = sadd.s32 %s49, 1
    %p53 = scmp.eq.s32.totalorder %s15, 3
    %p54 = scmp.ne.s32.totalorder %s49, %s51
    %p55 = scmp.eq.s32.totalorder %s15, 0
    %p56 = por %p54, %p55
    %p57 = scmp.ne.s32.totalorder %s49, %s51
    %p58 = scmp.eq.s32.totalorder %s20, 3
    %p59 = por %p57, %p58
    %p60 = scmp.ne.s32.totalorder %s51, %s52
    %p61 = scmp.eq.s32.totalorder %s20, 0
    %p62 = por %p60, %p61
    %p63 = scmp.ne.s32.totalorder %s51, %s52
    %p64 = scmp.eq.s32.totalorder %s21, 3
    %p65 = por %p63, %p64
    %p67 = scmp.ne.s32.totalorder %s52, %s66
    %p68 = scmp.eq.s32.totalorder %s21, 0
    %p69 = por %p67, %p68
    %s71 = sadd.s32 %s70, 1
    %p74 = scmp.eq.s32.totalorder %s15, 3
    %p75 = scmp.ne.s32.totalorder %s70, %s72
    %p76 = scmp.eq.s32.totalorder %s15, 0
    %p77 = por %p75, %p76
    %p78 = scmp.ne.s32.totalorder %s70, %s72
    %p79 = scmp.eq.s32.totalorder %s20, 3
    %p80 = por %p78, %p79
    %p81 = scmp.ne.s32.totalorder %s72, %s73
    %p82 = scmp.eq.s32.totalorder %s20, 0
    %p83 = por %p81, %p82
    %p84 = scmp.ne.s32.totalorder %s72, %s73
    %p85 = scmp.eq.s32.totalorder %s21, 3
    %p86 = por %p84, %p85
    %p88 = scmp.ne.s32.totalorder %s73, %s87
    %p89 = scmp.eq.s32.totalorder %s21, 0
    %p90 = por %p88, %p89
    %s92 = sadd.s32 %s91, 1
    %p95 = scmp.eq.s32.totalorder %s15, 3
    %p96 = scmp.ne.s32.totalorder %s91, %s93
    %p97 = scmp.eq.s32.totalorder %s15, 0
    %p98 = por %p96, %p97
    %p99 = scmp.ne.s32.totalorder %s91, %s93
    %p100 = scmp.eq.s32.totalorder %s20, 3
    %p101 = por %p99, %p100
    %p102 = scmp.ne.s32.totalorder %s93, %s94
    %p103 = scmp.eq.s32.totalorder %s20, 0
    %p104 = por %p102, %p103
    %p105 = scmp.ne.s32.totalorder %s93, %s94
    %p106 = scmp.eq.s32.totalorder %s21, 3
    %p107 = por %p105, %p106
    %p109 = scmp.ne.s32.totalorder %s94, %s108
    %p110 = scmp.eq.s32.totalorder %s21, 0
    %p111 = por %p109, %p110
    %s113 = sadd.s32 %s112, 1
    %p116 = scmp.eq.s32.totalorder %s15, 3
    %p117 = scmp.ne.s32.totalorder %s112, %s114
    %p118 = scmp.eq.s32.totalorder %s15, 0
    %p119 = por %p117, %p118
    %p120 = scmp.ne.s32.totalorder %s112, %s114
    %p121 = scmp.eq.s32.totalorder %s20, 3
    %p122 = por %p120, %p121
    %p123 = scmp.ne.s32.totalorder %s114, %s115
    %p124 = scmp.eq.s32.totalorder %s20, 0
    %p125 = por %p123, %p124
    %p126 = scmp.ne.s32.totalorder %s114, %s115
    %p127 = scmp.eq.s32.totalorder %s21, 3
    %p128 = por %p126, %p127
    %p130 = scmp.ne.s32.totalorder %s115, %s129
    %p131 = scmp.eq.s32.totalorder %s21, 0
    %p132 = por %p130, %p131
    %s134 = sadd.s32 %s133, 1
    %p137 = scmp.eq.s32.totalorder %s15, 3
    %p138 = scmp.ne.s32.totalorder %s133, %s135
    %p139 = scmp.eq.s32.totalorder %s15, 0
    %p140 = por %p138, %p139
    %p141 = scmp.ne.s32.totalorder %s133, %s135
    %p142 = scmp.eq.s32.totalorder %s20, 3
    %p143 = por %p141, %p142
    %p144 = scmp.ne.s32.totalorder %s135, %s136
    %p145 = scmp.eq.s32.totalorder %s20, 0
    %p146 = por %p144, %p145
    %p147 = scmp.ne.s32.totalorder %s135, %s136
    %p148 = scmp.eq.s32.totalorder %s21, 3
    %p149 = por %p147, %p148
    %p151 = scmp.ne.s32.totalorder %s136, %s150
    %p152 = scmp.eq.s32.totalorder %s21, 0
    %p153 = por %p151, %p152
    %s155 = sadd.s32 %s154, 1
    %p158 = scmp.eq.s32.totalorder %s15, 3
    %p159 = scmp.ne.s32.totalorder %s154, %s156
    %p160 = scmp.eq.s32.totalorder %s15, 0
    %p161 = por %p159, %p160
    %p162 = scmp.ne.s32.totalorder %s154, %s156
    %p163 = scmp.eq.s32.totalorder %s20, 3
    %p164 = por %p162, %p163
    %p165 = scmp.ne.s32.totalorder %s156, %s157
    %p166 = scmp.eq.s32.totalorder %s20, 0
    %p167 = por %p165, %p166
    %p168 = scmp.ne.s32.totalorder %s156, %s157
    %p169 = scmp.eq.s32.totalorder %s21, 3
    %p170 = por %p168, %p169
    %p172 = scmp.ne.s32.totalorder %s157, %s171
    %p173 = scmp.eq.s32.totalorder %s21, 0
    %p174 = por %p172, %p173
    %s176 = sadd.s32 %s175, 1
    %p179 = scmp.eq.s32.totalorder %s15, 3
    %p180 = scmp.ne.s32.totalorder %s175, %s177
    %p181 = scmp.eq.s32.totalorder %s15, 0
    %p182 = por %p180, %p181
    %p183 = scmp.ne.s32.totalorder %s175, %s177
    %p184 = scmp.eq.s32.totalorder %s20, 3
    %p185 = por %p183, %p184
    %p186 = scmp.ne.s32.totalorder %s177, %s178
    %p187 = scmp.eq.s32.totalorder %s20, 0
    %p188 = por %p186, %p187
    %p189 = scmp.ne.s32.totalorder %s177, %s178
    %p190 = scmp.eq.s32.totalorder %s21, 3
    %p191 = por %p189, %p190
    %p193 = scmp.ne.s32.totalorder %s178, %s192
    %p194 = scmp.eq.s32.totalorder %s21, 0
    %p195 = por %p193, %p194
    %p196 = scmp.le.s32.totalorder 1, %s15
    %p197 = scmp.lt.s32.totalorder %s15, 5
    %p198 = pnand %p196, %p197
    %p199 = pneg %p198
    // Predicated region
    $region9: #{lstm_forward.3} parent=5 // pred_check
      _
    $region10: #{lstm_forward.3} parent=5 // pred_check_branch
      %201 = sbr.rel (%p198) target = $region12
    $region11: #{lstm_forward.3} parent=5 // pred_region
      %s202 = ssub.s32 %s15, 1
      // Predicated region
      $region13: #{lstm_forward.3} parent=11 // pred_check
        %p203 = pneg %p62
      $region14: #{lstm_forward.3} parent=11 // pred_check_branch
        %205 = sbr.rel (%p203) target = $region16
      $region15: #{lstm_forward.3} parent=11 // pred_region
        _
      $region16: #{lstm_forward.3} parent=11 // pred_fallthru
        _
      // Predicated region
      $region17: #{lstm_forward.3} parent=11 // pred_check
        %p206 = pneg %p83
      $region18: #{lstm_forward.3} parent=11 // pred_check_branch
        %208 = sbr.rel (%p206) target = $region20
      $region19: #{lstm_forward.3} parent=11 // pred_region
        _
      $region20: #{lstm_forward.3} parent=11 // pred_fallthru
        _
      // Predicated region
      $region21: #{lstm_forward.3} parent=11 // pred_check
        %p209 = pneg %p104
      $region22: #{lstm_forward.3} parent=11 // pred_check_branch
        %211 = sbr.rel (%p209) target = $region24
      $region23: #{lstm_forward.3} parent=11 // pred_region
        _
      $region24: #{lstm_forward.3} parent=11 // pred_fallthru
        _
      // Predicated region
      $region25: #{lstm_forward.3} parent=11 // pred_check
        %p212 = pneg %p125
      $region26: #{lstm_forward.3} parent=11 // pred_check_branch
        %214 = sbr.rel (%p212) target = $region28
      $region27: #{lstm_forward.3} parent=11 // pred_region
        _
      $region28: #{lstm_forward.3} parent=11 // pred_fallthru
        _
      // Predicated region
      $region29: #{lstm_forward.3} parent=11 // pred_check
        %p215 = pneg %p146
      $region30: #{lstm_forward.3} parent=11 // pred_check_branch
        %217 = sbr.rel (%p215) target = $region32
      $region31: #{lstm_forward.3} parent=11 // pred_region
        _
      $region32: #{lstm_forward.3} parent=11 // pred_fallthru
        _
      // Predicated region
      $region33: #{lstm_forward.3} parent=11 // pred_check
        %p218 = pneg %p167
      $region34: #{lstm_forward.3} parent=11 // pred_check_branch
        %220 = sbr.rel (%p218) target = $region36
      $region35: #{lstm_forward.3} parent=11 // pred_region
        _
      $region36: #{lstm_forward.3} parent=11 // pred_fallthru
        _
    $region12: #{lstm_forward.3} parent=5 // pred_fallthru
      _
    %p221 = scmp.lt.s32.totalorder %s15, 4
    // Predicated region
    $region37: #{lstm_forward.3} parent=5 // pred_check
      %p222 = pneg %p221
    $region38: #{lstm_forward.3} parent=5 // pred_check_branch
      %224 = sbr.rel (%p222) target = $region40
    $region39: #{lstm_forward.3} parent=5 // pred_region
      // Predicated region
      $region41: #{lstm_forward.3} parent=39 // pred_check
        %p225 = pneg %p35
      $region42: #{lstm_forward.3} parent=39 // pred_check_branch
        %227 = sbr.rel (%p225) target = $region44
      $region43: #{lstm_forward.3} parent=39 // pred_region
        %s228 = smul.u32 4, %s15
        %p229 = scmp.lt.s32.totalorder %s228, 15
        %s230 = scalar_select %p229, %s228, 15
        %s231 = smul.addr %s230, 4
        %s232 = scalar_lea.vmem %s1, %s231
        %s233 = smul.u32 4, %s15
      $region44: #{lstm_forward.3} parent=39 // pred_fallthru
        _
    $region40: #{lstm_forward.3} parent=5 // pred_fallthru
      _
    %p234 = scmp.le.s32.totalorder 1, %s15
    %p235 = scmp.lt.s32.totalorder %s15, 5
    %p236 = pnand %p234, %p235
    %p237 = pneg %p236
    // Predicated region
    $region45: #{lstm_forward.3} parent=5 // pred_check
      _
    $region46: #{lstm_forward.3} parent=5 // pred_check_branch
      %239 = sbr.rel (%p236) target = $region48
    $region47: #{lstm_forward.3} parent=5 // pred_region
      %s240 = ssub.s32 %s15, 1
      %s241 = smul.u32 4, %s20
      %p242 = scmp.lt.s32.totalorder %s241, 15
      %s243 = scalar_select %p242, %s241, 15
      %s244 = smul.addr %s243, 4
      %s245 = scalar_lea.vmem %s1, %s244
      %p246 = pneg %p41
      %p247 = pneg %p38
      %p248 = pneg %p62
      %p249 = pneg %p59
      %p250 = pneg %p83
      %p251 = pneg %p80
      %p252 = pneg %p104
      %p253 = pneg %p101
      %p254 = pneg %p125
      %p255 = pneg %p122
      %p256 = pneg %p146
      %p257 = pneg %p143
      %p258 = pneg %p167
      %p259 = pneg %p164
      %p260 = pneg %p188
      %p261 = pneg %p185
      %s262 = smul.u32 4, %s20
      %p263 = scmp.lt.s32.totalorder %s262, 15
      %s264 = scalar_select %p263, %s262, 15
      %s265 = smul.addr %s264, 4
      %s266 = scalar_lea.vmem %s1, %s265
      %s267 = smul.u32 4, %s20
      %s269 = smul.u32 %s20, 2
      %s270 = sld [smem:[#allocation6]]
      %p271 = scmp.eq.s32.totalorder %s20, 0
      // Predicated region
      $region49: #{lstm_forward.3} parent=47 // pred_check
        %p272 = pneg %p271
      $region50: #{lstm_forward.3} parent=47 // pred_check_branch
        %274 = sbr.rel (%p272) target = $region52
      $region51: #{lstm_forward.3} parent=47 // pred_region
        %275 = vst [vmem:[#allocation3] sm:$0xff] 0.0
        %276 = vst [vmem:[#allocation3 + $0x8] sm:$0xff] 0.0
        %277 = vst [vmem:[#allocation4] sm:$0xff] 0.0
        %278 = vst [vmem:[#allocation4 + $0x8] sm:$0xff] 0.0
      $region52: #{lstm_forward.3} parent=47 // pred_fallthru
        _
      %p279 = scmp.lt.s32.totalorder %s269, %s270
      // Predicated region
      $region53: #{lstm_forward.3} parent=47 // pred_check
        %p280 = pneg %p279
      $region54: #{lstm_forward.3} parent=47 // pred_check_branch
        %282 = sbr.rel (%p280) target = $region56
      $region55: #{lstm_forward.3} parent=47 // pred_region
        %v283 = vld [vmem:[%s266] sm:$0xf]
        %v284 = vld [vmem:[%s266 + $0x4] sm:$0xf]
        %v285 = vld [vmem:[%s266 + $0x8] sm:$0xf]
        %v286 = vld [vmem:[%s266 + $0xc] sm:$0xf]
        %v287 = vld [vmem:[%s3] sm:$0xff]
        %v288 = vld [vmem:[%s3 + $0x8] sm:$0xff]
        %v289 = vld [vmem:[%s3 + $0x10] sm:$0xff]
        %v290 = vld [vmem:[%s3 + $0x18] sm:$0xff]
        %v291 = vld [vmem:[%s3 + $0x20] sm:$0xff]
        %v292 = vld [vmem:[%s3 + $0x28] sm:$0xff]
        %v293 = vld [vmem:[%s3 + $0x30] sm:$0xff]
        %v294 = vld [vmem:[%s3 + $0x38] sm:$0xff]
        %v295 = vld [vmem:[%s3 + $0x40] sm:$0xff]
        %v296 = vld [vmem:[%s3 + $0x48] sm:$0xff]
        %v297 = vld [vmem:[%s3 + $0x50] sm:$0xff]
        %v298 = vld [vmem:[%s3 + $0x58] sm:$0xff]
        %v299 = vld [vmem:[%s3 + $0x60] sm:$0xff]
        %v300 = vld [vmem:[%s3 + $0x68] sm:$0xff]
        %v301 = vld [vmem:[%s3 + $0x70] sm:$0xff]
        %v302 = vld [vmem:[%s3 + $0x78] sm:$0xff]
        %v303 = vld [vmem:[%s3 + $0x80] sm:$0xff]
        %v304 = vld [vmem:[%s3 + $0x88] sm:$0xff]
        %v305 = vld [vmem:[%s3 + $0x90] sm:$0xff]
        %v306 = vld [vmem:[%s3 + $0x98] sm:$0xff]
        %v307 = vld [vmem:[%s3 + $0xa0] sm:$0xff]
        %v308 = vld [vmem:[%s3 + $0xa8] sm:$0xff]
        %v309 = vld [vmem:[%s3 + $0xb0] sm:$0xff]
        %v310 = vld [vmem:[%s3 + $0xb8] sm:$0xff]
        %v311 = vld [vmem:[%s3 + $0xc0] sm:$0xff]
        %v312 = vld [vmem:[%s3 + $0xc8] sm:$0xff]
        %v313 = vld [vmem:[%s3 + $0xd0] sm:$0xff]
        %v314 = vld [vmem:[%s3 + $0xd8] sm:$0xff]
        %v315 = vld [vmem:[%s3 + $0xe0] sm:$0xff]
        %v316 = vld [vmem:[%s3 + $0xe8] sm:$0xff]
        %v317 = vld [vmem:[%s3 + $0xf0] sm:$0xff]
        %v318 = vld [vmem:[%s3 + $0xf8] sm:$0xff]
        %v319 = vld [vmem:[%s5] sm:$0xf]
        %v321 = vlaneseq
        %v322 = vshrl.u32 %v321, 7
        %v323 = vsub.s32 0, %v322
        %v324 = vrot.slane %v319, %v323
        %v325 = vlaneseq
        %v326 = vshrl.u32 %v325, 7
        %v327 = vsub.s32 1, %v326
        %v328 = vrot.slane %v319, %v327
        %v329 = vlaneseq
        %v330 = vshrl.u32 %v329, 7
        %v331 = vsub.s32 2, %v330
        %v332 = vrot.slane %v319, %v331
        %v333 = vlaneseq
        %v334 = vshrl.u32 %v333, 7
        %v335 = vsub.s32 3, %v334
        %v336 = vrot.slane %v319, %v335
        %v345 = vunpack.c.l.b16 %v283
        %v346 = vunpack.c.l.b16 %v284
        %v347 = vunpack.c.l.b16 %v285
        %v348 = vunpack.c.l.b16 %v286
        %v349 = vpack.c.b16 %v346, %v345
        %v350 = vpack.c.b16 %v348, %v347
        %v385 = vunpack.c.l.b16 %v287
        %v386 = vunpack.c.h.b16 %v287
        %v387 = vunpack.c.l.b16 %v288
        %v388 = vunpack.c.h.b16 %v288
        %v389 = vunpack.c.l.b16 %v289
        %v390 = vunpack.c.h.b16 %v289
        %v391 = vunpack.c.l.b16 %v290
        %v392 = vunpack.c.h.b16 %v290
        %v393 = vunpack.c.l.b16 %v291
        %v394 = vunpack.c.h.b16 %v291
        %v395 = vunpack.c.l.b16 %v292
        %v396 = vunpack.c.h.b16 %v292
        %v397 = vunpack.c.l.b16 %v293
        %v398 = vunpack.c.h.b16 %v293
        %v399 = vunpack.c.l.b16 %v294
        %v400 = vunpack.c.h.b16 %v294
        %v401 = vunpack.c.l.b16 %v295
        %v402 = vunpack.c.h.b16 %v295
        %v403 = vunpack.c.l.b16 %v296
        %v404 = vunpack.c.h.b16 %v296
        %v405 = vunpack.c.l.b16 %v297
        %v406 = vunpack.c.h.b16 %v297
        %v407 = vunpack.c.l.b16 %v298
        %v408 = vunpack.c.h.b16 %v298
        %v409 = vunpack.c.l.b16 %v299
        %v410 = vunpack.c.h.b16 %v299
        %v411 = vunpack.c.l.b16 %v300
        %v412 = vunpack.c.h.b16 %v300
        %v413 = vunpack.c.l.b16 %v301
        %v414 = vunpack.c.h.b16 %v301
        %v415 = vunpack.c.l.b16 %v302
        %v416 = vunpack.c.h.b16 %v302
        %v417 = vunpack.c.l.b16 %v303
        %v418 = vunpack.c.h.b16 %v303
        %v419 = vunpack.c.l.b16 %v304
        %v420 = vunpack.c.h.b16 %v304
        %v421 = vunpack.c.l.b16 %v305
        %v422 = vunpack.c.h.b16 %v305
        %v423 = vunpack.c.l.b16 %v306
        %v424 = vunpack.c.h.b16 %v306
        %v425 = vunpack.c.l.b16 %v307
        %v426 = vunpack.c.h.b16 %v307
        %v427 = vunpack.c.l.b16 %v308
        %v428 = vunpack.c.h.b16 %v308
        %v429 = vunpack.c.l.b16 %v309
        %v430 = vunpack.c.h.b16 %v309
        %v431 = vunpack.c.l.b16 %v310
        %v432 = vunpack.c.h.b16 %v310
        %v433 = vunpack.c.l.b16 %v311
        %v434 = vunpack.c.h.b16 %v311
        %v435 = vunpack.c.l.b16 %v312
        %v436 = vunpack.c.h.b16 %v312
        %v437 = vunpack.c.l.b16 %v313
        %v438 = vunpack.c.h.b16 %v313
        %v439 = vunpack.c.l.b16 %v314
        %v440 = vunpack.c.h.b16 %v314
        %v441 = vunpack.c.l.b16 %v315
        %v442 = vunpack.c.h.b16 %v315
        %v443 = vunpack.c.l.b16 %v316
        %v444 = vunpack.c.h.b16 %v316
        %v445 = vunpack.c.l.b16 %v317
        %v446 = vunpack.c.h.b16 %v317
        %v447 = vunpack.c.l.b16 %v318
        %v448 = vunpack.c.h.b16 %v318
        %v449 = vpack.c.b16 %v389, %v385
        %v450 = vpack.c.b16 %v390, %v386
        %v451 = vpack.c.b16 %v391, %v387
        %v452 = vpack.c.b16 %v392, %v388
        %v453 = vpack.c.b16 %v397, %v393
        %v454 = vpack.c.b16 %v398, %v394
        %v455 = vpack.c.b16 %v399, %v395
        %v456 = vpack.c.b16 %v400, %v396
        %v457 = vpack.c.b16 %v405, %v401
        %v458 = vpack.c.b16 %v406, %v402
        %v459 = vpack.c.b16 %v407, %v403
        %v460 = vpack.c.b16 %v408, %v404
        %v461 = vpack.c.b16 %v413, %v409
        %v462 = vpack.c.b16 %v414, %v410
        %v463 = vpack.c.b16 %v415, %v411
        %v464 = vpack.c.b16 %v416, %v412
        %v465 = vpack.c.b16 %v421, %v417
        %v466 = vpack.c.b16 %v422, %v418
        %v467 = vpack.c.b16 %v423, %v419
        %v468 = vpack.c.b16 %v424, %v420
        %v469 = vpack.c.b16 %v429, %v425
        %v470 = vpack.c.b16 %v430, %v426
        %v471 = vpack.c.b16 %v431, %v427
        %v472 = vpack.c.b16 %v432, %v428
        %v473 = vpack.c.b16 %v437, %v433
        %v474 = vpack.c.b16 %v438, %v434
        %v475 = vpack.c.b16 %v439, %v435
        %v476 = vpack.c.b16 %v440, %v436
        %v477 = vpack.c.b16 %v445, %v441
        %v478 = vpack.c.b16 %v446, %v442
        %v479 = vpack.c.b16 %v447, %v443
        %v480 = vpack.c.b16 %v448, %v444
        %513 = vmatprep.subr.bf16.mxu0 %v450
        %514 = vmatpush1.bf16.msra.mxu0 %v449
        %515 = vmatprep.subr.bf16.mxu0 %v454
        %516 = vmatpush1.bf16.msra.mxu0 %v453
        %517 = vmatprep.subr.bf16.mxu0 %v458
        %518 = vmatpush1.bf16.msra.mxu0 %v457
        %519 = vmatprep.subr.bf16.mxu0 %v462
        %520 = vmatpush1.bf16.msra.mxu0 %v461
        %521 = vmatprep.subr.bf16.mxu0 %v466
        %522 = vmatpush1.bf16.msra.mxu0 %v465
        %523 = vmatprep.subr.bf16.mxu0 %v470
        %524 = vmatpush1.bf16.msra.mxu0 %v469
        %525 = vmatprep.subr.bf16.mxu0 %v474
        %526 = vmatpush1.bf16.msra.mxu0 %v473
        %527 = vmatprep.subr.bf16.mxu0 %v478
        %528 = vmatpush1.bf16.msra.mxu0 %v477
        %529 = vmatprep.subr.bf16.mxu0 0
        %530 = vmatpush1.bf16.msra.mxu0 0
        %531 = vmatprep.subr.bf16.mxu0 0
        %532 = vmatpush1.bf16.msra.mxu0 0
        %533 = vmatprep.subr.bf16.mxu0 0
        %534 = vmatpush1.bf16.msra.mxu0 0
        %535 = vmatprep.subr.bf16.mxu0 0
        %536 = vmatpush1.bf16.msra.mxu0 0
        %537 = vmatprep.subr.bf16.mxu0 0
        %538 = vmatpush1.bf16.msra.mxu0 0
        %539 = vmatprep.subr.bf16.mxu0 0
        %540 = vmatpush1.bf16.msra.mxu0 0
        %541 = vmatprep.subr.bf16.mxu0 0
        %542 = vmatpush1.bf16.msra.mxu0 0
        %543 = vmatprep.subr.bf16.mxu0 0
        %544 = vmatpush1.bf16.msra.mxu0 0
        %545 = vmatprep.mubr.bf16.mxu0 0
        %546 = vmatmul.mubr.bf16.gmra.mrb[0].mxu0 %v349
        %v547 = vpop.f32.mrb[0].mxu0
        %v548 = vadd.f32 %v324, %v547
        %v549 = vpop.f32.mrb[0].mxu0
        %v550 = vadd.f32 %v328, %v549
        %v551 = vpop.f32.mrb[0].mxu0
        %v552 = vadd.f32 %v324, %v551
        %v553 = vpop.f32.mrb[0].mxu0
        %v554 = vadd.f32 %v328, %v553
        %555 = vmatprep.mubr.bf16.mxu0 0
        %556 = vmatmul.mubr.bf16.gmra.mrb[0].mxu0 %v350
        %v557 = vpop.f32.mrb[0].mxu0
        %v558 = vadd.f32 %v324, %v557
        %v559 = vpop.f32.mrb[0].mxu0
        %v560 = vadd.f32 %v328, %v559
        %v561 = vpop.f32.mrb[0].mxu0
        %v562 = vadd.f32 %v324, %v561
        %v563 = vpop.f32.mrb[0].mxu0
        %v564 = vadd.f32 %v328, %v563
        %565 = vdwg.mxu0
        %566 = vmatprep.subr.bf16.mxu0 %v452
        %567 = vmatpush1.bf16.msra.mxu0 %v451
        %568 = vmatprep.subr.bf16.mxu0 %v456
        %569 = vmatpush1.bf16.msra.mxu0 %v455
        %570 = vmatprep.subr.bf16.mxu0 %v460
        %571 = vmatpush1.bf16.msra.mxu0 %v459
        %572 = vmatprep.subr.bf16.mxu0 %v464
        %573 = vmatpush1.bf16.msra.mxu0 %v463
        %574 = vmatprep.subr.bf16.mxu0 %v468
        %575 = vmatpush1.bf16.msra.mxu0 %v467
        %576 = vmatprep.subr.bf16.mxu0 %v472
        %577 = vmatpush1.bf16.msra.mxu0 %v471
        %578 = vmatprep.subr.bf16.mxu0 %v476
        %579 = vmatpush1.bf16.msra.mxu0 %v475
        %580 = vmatprep.subr.bf16.mxu0 %v480
        %581 = vmatpush1.bf16.msra.mxu0 %v479
        %582 = vmatprep.subr.bf16.mxu0 0
        %583 = vmatpush1.bf16.msra.mxu0 0
        %584 = vmatprep.subr.bf16.mxu0 0
        %585 = vmatpush1.bf16.msra.mxu0 0
        %586 = vmatprep.subr.bf16.mxu0 0
        %587 = vmatpush1.bf16.msra.mxu0 0
        %588 = vmatprep.subr.bf16.mxu0 0
        %589 = vmatpush1.bf16.msra.mxu0 0
        %590 = vmatprep.subr.bf16.mxu0 0
        %591 = vmatpush1.bf16.msra.mxu0 0
        %592 = vmatprep.subr.bf16.mxu0 0
        %593 = vmatpush1.bf16.msra.mxu0 0
        %594 = vmatprep.subr.bf16.mxu0 0
        %595 = vmatpush1.bf16.msra.mxu0 0
        %596 = vmatprep.subr.bf16.mxu0 0
        %597 = vmatpush1.bf16.msra.mxu0 0
        %598 = vmatprep.mubr.bf16.mxu0 0
        %599 = vmatmul.mubr.bf16.gmra.mrb[0].mxu0 %v349
        %v600 = vpop.f32.mrb[0].mxu0
        %v601 = vadd.f32 %v332, %v600
        %v602 = vpop.f32.mrb[0].mxu0
        %v603 = vadd.f32 %v336, %v602
        %v604 = vpop.f32.mrb[0].mxu0
        %v605 = vadd.f32 %v332, %v604
        %v606 = vpop.f32.mrb[0].mxu0
        %v607 = vadd.f32 %v336, %v606
        %608 = vmatprep.mubr.bf16.mxu0 0
        %609 = vmatmul.mubr.bf16.gmra.mrb[0].mxu0 %v350
        %v610 = vpop.f32.mrb[0].mxu0
        %v611 = vadd.f32 %v332, %v610
        %v612 = vpop.f32.mrb[0].mxu0
        %v613 = vadd.f32 %v336, %v612
        %v614 = vpop.f32.mrb[0].mxu0
        %v615 = vadd.f32 %v332, %v614
        %v616 = vpop.f32.mrb[0].mxu0
        %v617 = vadd.f32 %v336, %v616
        %618 = vdwg.mxu0
        %v619 = vpack.c.bf16 %v552, %v548
        %v620 = vpack.c.bf16 %v554, %v550
        %v621 = vpack.c.bf16 %v605, %v601
        %v622 = vpack.c.bf16 %v607, %v603
        %v623 = vpack.c.bf16 %v562, %v558
        %v624 = vpack.c.bf16 %v564, %v560
        %v625 = vpack.c.bf16 %v615, %v611
        %v626 = vpack.c.bf16 %v617, %v613
        %627 = vst [vmem:[#allocation2] sm:$0xff] %v619
        %628 = vst [vmem:[#allocation2 + $0x8] sm:$0xff] %v620
        %629 = vst [vmem:[#allocation2 + $0x10] sm:$0xff] %v621
        %630 = vst [vmem:[#allocation2 + $0x18] sm:$0xff] %v622
        %631 = vst [vmem:[#allocation2 + $0x20] sm:$0xff] %v623
        %632 = vst [vmem:[#allocation2 + $0x28] sm:$0xff] %v624
        %633 = vst [vmem:[#allocation2 + $0x30] sm:$0xff] %v625
        %634 = vst [vmem:[#allocation2 + $0x38] sm:$0xff] %v626
        %v635 = vld [vmem:[%s2] sm:$0xff]
        %v636 = vld [vmem:[%s2 + $0x8] sm:$0xff]
        %v637 = vld [vmem:[#allocation3] sm:$0xff]
        %v638 = vld [vmem:[#allocation3 + $0x8] sm:$0xff]
        %v639 = vld [vmem:[#allocation4] sm:$0xff]
        %v640 = vld [vmem:[#allocation4 + $0x8] sm:$0xff]
        %s641 = smul.u32 0, 4
        %s642 = smul.addr %s641, 8
        %s643 = scalar_lea.vmem [#allocation2], %s642
        %v644 = vld [vmem:[%s643] sm:$0xff]
        %v645 = vld [vmem:[%s643 + $0x8] sm:$0xff]
        %v646 = vld [vmem:[%s643 + $0x10] sm:$0xff]
        %v647 = vld [vmem:[%s643 + $0x18] sm:$0xff]
        %v648 = vunpack.c.l.bf16 %v644
        %v649 = vunpack.c.l.bf16 %v645
        %v650 = vunpack.c.l.bf16 %v646
        %v651 = vunpack.c.l.bf16 %v647
        %v652 = vunpack.c.h.bf16 %v644
        %v653 = vunpack.c.h.bf16 %v645
        %v654 = vunpack.c.h.bf16 %v646
        %v655 = vunpack.c.h.bf16 %v647
        %v656 = vpack.c.bf16 %v638, %v637
        %v657 = vld [vmem:[%s4] sm:$0xff]
        %v658 = vld [vmem:[%s4 + $0x8] sm:$0xff]
        %v659 = vld [vmem:[%s4 + $0x10] sm:$0xff]
        %v660 = vld [vmem:[%s4 + $0x18] sm:$0xff]
        %v661 = vld [vmem:[%s4 + $0x20] sm:$0xff]
        %v662 = vld [vmem:[%s4 + $0x28] sm:$0xff]
        %v663 = vld [vmem:[%s4 + $0x30] sm:$0xff]
        %v664 = vld [vmem:[%s4 + $0x38] sm:$0xff]
        %v665 = vld [vmem:[%s4 + $0x40] sm:$0xff]
        %v666 = vld [vmem:[%s4 + $0x48] sm:$0xff]
        %v667 = vld [vmem:[%s4 + $0x50] sm:$0xff]
        %v668 = vld [vmem:[%s4 + $0x58] sm:$0xff]
        %v669 = vld [vmem:[%s4 + $0x60] sm:$0xff]
        %v670 = vld [vmem:[%s4 + $0x68] sm:$0xff]
        %v671 = vld [vmem:[%s4 + $0x70] sm:$0xff]
        %v672 = vld [vmem:[%s4 + $0x78] sm:$0xff]
        %v673 = vld [vmem:[%s4 + $0x80] sm:$0xff]
        %v674 = vld [vmem:[%s4 + $0x88] sm:$0xff]
        %v675 = vld [vmem:[%s4 + $0x90] sm:$0xff]
        %v676 = vld [vmem:[%s4 + $0x98] sm:$0xff]
        %v677 = vld [vmem:[%s4 + $0xa0] sm:$0xff]
        %v678 = vld [vmem:[%s4 + $0xa8] sm:$0xff]
        %v679 = vld [vmem:[%s4 + $0xb0] sm:$0xff]
        %v680 = vld [vmem:[%s4 + $0xb8] sm:$0xff]
        %v681 = vld [vmem:[%s4 + $0xc0] sm:$0xff]
        %v682 = vld [vmem:[%s4 + $0xc8] sm:$0xff]
        %v683 = vld [vmem:[%s4 + $0xd0] sm:$0xff]
        %v684 = vld [vmem:[%s4 + $0xd8] sm:$0xff]
        %v685 = vld [vmem:[%s4 + $0xe0] sm:$0xff]
        %v686 = vld [vmem:[%s4 + $0xe8] sm:$0xff]
        %v687 = vld [vmem:[%s4 + $0xf0] sm:$0xff]
        %v688 = vld [vmem:[%s4 + $0xf8] sm:$0xff]
        %v721 = vunpack.c.l.b16 %v657
        %v722 = vunpack.c.h.b16 %v657
        %v723 = vunpack.c.l.b16 %v658
        %v724 = vunpack.c.h.b16 %v658
        %v725 = vunpack.c.l.b16 %v659
        %v726 = vunpack.c.h.b16 %v659
        %v727 = vunpack.c.l.b16 %v660
        %v728 = vunpack.c.h.b16 %v660
        %v729 = vunpack.c.l.b16 %v661
        %v730 = vunpack.c.h.b16 %v661
        %v731 = vunpack.c.l.b16 %v662
        %v732 = vunpack.c.h.b16 %v662
        %v733 = vunpack.c.l.b16 %v663
        %v734 = vunpack.c.h.b16 %v663
        %v735 = vunpack.c.l.b16 %v664
        %v736 = vunpack.c.h.b16 %v664
        %v737 = vunpack.c.l.b16 %v665
        %v738 = vunpack.c.h.b16 %v665
        %v739 = vunpack.c.l.b16 %v666
        %v740 = vunpack.c.h.b16 %v666
        %v741 = vunpack.c.l.b16 %v667
        %v742 = vunpack.c.h.b16 %v667
        %v743 = vunpack.c.l.b16 %v668
        %v744 = vunpack.c.h.b16 %v668
        %v745 = vunpack.c.l.b16 %v669
        %v746 = vunpack.c.h.b16 %v669
        %v747 = vunpack.c.l.b16 %v670
        %v748 = vunpack.c.h.b16 %v670
        %v749 = vunpack.c.l.b16 %v671
        %v750 = vunpack.c.h.b16 %v671
        %v751 = vunpack.c.l.b16 %v672
        %v752 = vunpack.c.h.b16 %v672
        %v753 = vunpack.c.l.b16 %v673
        %v754 = vunpack.c.h.b16 %v673
        %v755 = vunpack.c.l.b16 %v674
        %v756 = vunpack.c.h.b16 %v674
        %v757 = vunpack.c.l.b16 %v675
        %v758 = vunpack.c.h.b16 %v675
        %v759 = vunpack.c.l.b16 %v676
        %v760 = vunpack.c.h.b16 %v676
        %v761 = vunpack.c.l.b16 %v677
        %v762 = vunpack.c.h.b16 %v677
        %v763 = vunpack.c.l.b16 %v678
        %v764 = vunpack.c.h.b16 %v678
        %v765 = vunpack.c.l.b16 %v679
        %v766 = vunpack.c.h.b16 %v679
        %v767 = vunpack.c.l.b16 %v680
        %v768 = vunpack.c.h.b16 %v680
        %v769 = vunpack.c.l.b16 %v681
        %v770 = vunpack.c.h.b16 %v681
        %v771 = vunpack.c.l.b16 %v682
        %v772 = vunpack.c.h.b16 %v682
        %v773 = vunpack.c.l.b16 %v683
        %v774 = vunpack.c.h.b16 %v683
        %v775 = vunpack.c.l.b16 %v684
        %v776 = vunpack.c.h.b16 %v684
        %v777 = vunpack.c.l.b16 %v685
        %v778 = vunpack.c.h.b16 %v685
        %v779 = vunpack.c.l.b16 %v686
        %v780 = vunpack.c.h.b16 %v686
        %v781 = vunpack.c.l.b16 %v687
        %v782 = vunpack.c.h.b16 %v687
        %v783 = vunpack.c.l.b16 %v688
        %v784 = vunpack.c.h.b16 %v688
        %v785 = vpack.c.b16 %v725, %v721
        %v786 = vpack.c.b16 %v726, %v722
        %v787 = vpack.c.b16 %v727, %v723
        %v788 = vpack.c.b16 %v728, %v724
        %v789 = vpack.c.b16 %v733, %v729
        %v790 = vpack.c.b16 %v734, %v730
        %v791 = vpack.c.b16 %v735, %v731
        %v792 = vpack.c.b16 %v736, %v732
        %v793 = vpack.c.b16 %v741, %v737
        %v794 = vpack.c.b16 %v742, %v738
        %v795 = vpack.c.b16 %v743, %v739
        %v796 = vpack.c.b16 %v744, %v740
        %v797 = vpack.c.b16 %v749, %v745
        %v798 = vpack.c.b16 %v750, %v746
        %v799 = vpack.c.b16 %v751, %v747
        %v800 = vpack.c.b16 %v752, %v748
        %v801 = vpack.c.b16 %v757, %v753
        %v802 = vpack.c.b16 %v758, %v754
        %v803 = vpack.c.b16 %v759, %v755
        %v804 = vpack.c.b16 %v760, %v756
        %v805 = vpack.c.b16 %v765, %v761
        %v806 = vpack.c.b16 %v766, %v762
        %v807 = vpack.c.b16 %v767, %v763
        %v808 = vpack.c.b16 %v768, %v764
        %v809 = vpack.c.b16 %v773, %v769
        %v810 = vpack.c.b16 %v774, %v770
        %v811 = vpack.c.b16 %v775, %v771
        %v812 = vpack.c.b16 %v776, %v772
        %v813 = vpack.c.b16 %v781, %v777
        %v814 = vpack.c.b16 %v782, %v778
        %v815 = vpack.c.b16 %v783, %v779
        %v816 = vpack.c.b16 %v784, %v780
        %849 = vmatprep.subr.bf16.mxu0 %v786
        %850 = vmatpush1.bf16.msra.mxu0 %v785
        %851 = vmatprep.subr.bf16.mxu0 %v790
        %852 = vmatpush1.bf16.msra.mxu0 %v789
        %853 = vmatprep.subr.bf16.mxu0 %v794
        %854 = vmatpush1.bf16.msra.mxu0 %v793
        %855 = vmatprep.subr.bf16.mxu0 %v798
        %856 = vmatpush1.bf16.msra.mxu0 %v797
        %857 = vmatprep.subr.bf16.mxu0 %v802
        %858 = vmatpush1.bf16.msra.mxu0 %v801
        %859 = vmatprep.subr.bf16.mxu0 %v806
        %860 = vmatpush1.bf16.msra.mxu0 %v805
        %861 = vmatprep.subr.bf16.mxu0 %v810
        %862 = vmatpush1.bf16.msra.mxu0 %v809
        %863 = vmatprep.subr.bf16.mxu0 %v814
        %864 = vmatpush1.bf16.msra.mxu0 %v813
        %865 = vmatprep.subr.bf16.mxu0 0
        %866 = vmatpush1.bf16.msra.mxu0 0
        %867 = vmatprep.subr.bf16.mxu0 0
        %868 = vmatpush1.bf16.msra.mxu0 0
        %869 = vmatprep.subr.bf16.mxu0 0
        %870 = vmatpush1.bf16.msra.mxu0 0
        %871 = vmatprep.subr.bf16.mxu0 0
        %872 = vmatpush1.bf16.msra.mxu0 0
        %873 = vmatprep.subr.bf16.mxu0 0
        %874 = vmatpush1.bf16.msra.mxu0 0
        %875 = vmatprep.subr.bf16.mxu0 0
        %876 = vmatpush1.bf16.msra.mxu0 0
        %877 = vmatprep.subr.bf16.mxu0 0
        %878 = vmatpush1.bf16.msra.mxu0 0
        %879 = vmatprep.subr.bf16.mxu0 0
        %880 = vmatpush1.bf16.msra.mxu0 0
        %881 = vmatprep.mubr.bf16.mxu0 0
        %882 = vmatmul.mubr.bf16.gmra.mrb[0].mxu0 %v656
        %v883 = vpop.f32.mrb[0].mxu0
        %v884 = vadd.f32 0.0, %v883
        %v885 = vpop.f32.mrb[0].mxu0
        %v886 = vadd.f32 0.0, %v885
        %v887 = vpop.f32.mrb[0].mxu0
        %v888 = vadd.f32 0.0, %v887
        %v889 = vpop.f32.mrb[0].mxu0
        %v890 = vadd.f32 0.0, %v889
        %891 = vdwg.mxu0
        %892 = vmatprep.subr.bf16.mxu0 %v788
        %893 = vmatpush1.bf16.msra.mxu0 %v787
        %894 = vmatprep.subr.bf16.mxu0 %v792
        %895 = vmatpush1.bf16.msra.mxu0 %v791
        %896 = vmatprep.subr.bf16.mxu0 %v796
        %897 = vmatpush1.bf16.msra.mxu0 %v795
        %898 = vmatprep.subr.bf16.mxu0 %v800
        %899 = vmatpush1.bf16.msra.mxu0 %v799
        %900 = vmatprep.subr.bf16.mxu0 %v804
        %901 = vmatpush1.bf16.msra.mxu0 %v803
        %902 = vmatprep.subr.bf16.mxu0 %v808
        %903 = vmatpush1.bf16.msra.mxu0 %v807
        %904 = vmatprep.subr.bf16.mxu0 %v812
        %905 = vmatpush1.bf16.msra.mxu0 %v811
        %906 = vmatprep.subr.bf16.mxu0 %v816
        %907 = vmatpush1.bf16.msra.mxu0 %v815
        %908 = vmatprep.subr.bf16.mxu0 0
        %909 = vmatpush1.bf16.msra.mxu0 0
        %910 = vmatprep.subr.bf16.mxu0 0
        %911 = vmatpush1.bf16.msra.mxu0 0
        %912 = vmatprep.subr.bf16.mxu0 0
        %913 = vmatpush1.bf16.msra.mxu0 0
        %914 = vmatprep.subr.bf16.mxu0 0
        %915 = vmatpush1.bf16.msra.mxu0 0
        %916 = vmatprep.subr.bf16.mxu0 0
        %917 = vmatpush1.bf16.msra.mxu0 0
        %918 = vmatprep.subr.bf16.mxu0 0
        %919 = vmatpush1.bf16.msra.mxu0 0
        %920 = vmatprep.subr.bf16.mxu0 0
        %921 = vmatpush1.bf16.msra.mxu0 0
        %922 = vmatprep.subr.bf16.mxu0 0
        %923 = vmatpush1.bf16.msra.mxu0 0
        %924 = vmatprep.mubr.bf16.mxu0 0
        %925 = vmatmul.mubr.bf16.gmra.mrb[0].mxu0 %v656
        %v926 = vpop.f32.mrb[0].mxu0
        %v927 = vadd.f32 0.0, %v926
        %v928 = vpop.f32.mrb[0].mxu0
        %v929 = vadd.f32 0.0, %v928
        %v930 = vpop.f32.mrb[0].mxu0
        %v931 = vadd.f32 0.0, %v930
        %v932 = vpop.f32.mrb[0].mxu0
        %v933 = vadd.f32 0.0, %v932
        %934 = vdwg.mxu0
        %v935 = vadd.f32 %v648, %v884
        %v936 = vadd.f32 %v649, %v886
        %v937 = vadd.f32 %v650, %v927
        %v938 = vadd.f32 %v651, %v929
        %v939 = vadd.f32 %v652, %v888
        %v940 = vadd.f32 %v653, %v890
        %v941 = vadd.f32 %v654, %v931
        %v942 = vadd.f32 %v655, %v933
        %v943 = vmul.f32 %v935, 0.5
        %v944 = vmul.f32 %v939, 0.5
        %v945 = vtanh.pop %v943
        %v946 = vtanh.pop %v944
        %v947 = vmul.f32 %v945, 0.5
        %v948 = vmul.f32 %v946, 0.5
        %v949 = vadd.f32 %v947, 0.5
        %v950 = vadd.f32 %v948, 0.5
        %v951 = vmul.f32 %v936, 0.5
        %v952 = vmul.f32 %v940, 0.5
        %v953 = vtanh.pop %v951
        %v954 = vtanh.pop %v952
        %v955 = vmul.f32 %v953, 0.5
        %v956 = vmul.f32 %v954, 0.5
        %v957 = vadd.f32 %v955, 0.5
        %v958 = vadd.f32 %v956, 0.5
        %v959 = vtanh.pop %v937
        %v960 = vtanh.pop %v941
        %v961 = vmul.f32 %v938, 0.5
        %v962 = vmul.f32 %v942, 0.5
        %v963 = vtanh.pop %v961
        %v964 = vtanh.pop %v962
        %v965 = vmul.f32 %v963, 0.5
        %v966 = vmul.f32 %v964, 0.5
        %v967 = vadd.f32 %v965, 0.5
        %v968 = vadd.f32 %v966, 0.5
        %v969 = vmul.f32 %v957, %v639
        %v970 = vmul.f32 %v958, %v640
        %v971 = vmul.f32 %v949, %v959
        %v972 = vmul.f32 %v950, %v960
        %v973 = vadd.f32 %v969, %v971
        %v974 = vadd.f32 %v970, %v972
        %v975 = vtanh.pop %v973
        %v976 = vtanh.pop %v974
        %v977 = vmul.f32 %v967, %v975
        %v978 = vmul.f32 %v968, %v976
        %v979 = vstv %s269
        %vm980 = vcmp.lt.s32.totalorder %v979, %v635
        %vm981 = vcmp.lt.s32.totalorder %v979, %v636
        %v982 = vsel %vm980, 1, 0
        %v983 = vsel %vm981, 1, 0
        %984 = vset.pattern.permute.xlu0 0
        %985 = vperm.xlu0 %984, %v982
        %v986 = vpop.permute.xlu0 %985
        %987 = vset.pattern.permute.xlu0 0
        %988 = vperm.xlu0 %987, %v983
        %v989 = vpop.permute.xlu0 %988
        %vm990 = vcmp.eq.s32.totalorder %v986, 1
        %vm991 = vcmp.eq.s32.totalorder %v989, 1
        %v992 = vsel %vm990, %v977, %v637
        %v993 = vsel %vm991, %v978, %v638
        %v994 = vsel %vm990, %v973, %v639
        %v995 = vsel %vm991, %v974, %v640
        %s996 = smul.u32 1, 4
        %s997 = smul.addr %s996, 8
        %s998 = scalar_lea.vmem [#allocation2], %s997
        %v999 = vld [vmem:[%s998] sm:$0xff]
        %v1000 = vld [vmem:[%s998 + $0x8] sm:$0xff]
        %v1001 = vld [vmem:[%s998 + $0x10] sm:$0xff]
        %v1002 = vld [vmem:[%s998 + $0x18] sm:$0xff]
        %v1003 = vunpack.c.l.bf16 %v999
        %v1004 = vunpack.c.l.bf16 %v1000
        %v1005 = vunpack.c.l.bf16 %v1001
        %v1006 = vunpack.c.l.bf16 %v1002
        %v1007 = vunpack.c.h.bf16 %v999
        %v1008 = vunpack.c.h.bf16 %v1000
        %v1009 = vunpack.c.h.bf16 %v1001
        %v1010 = vunpack.c.h.bf16 %v1002
        %v1011 = vpack.c.bf16 %v993, %v992
        %1012 = vmatprep.subr.bf16.mxu0 %v786
        %1013 = vmatpush1.bf16.msra.mxu0 %v785
        %1014 = vmatprep.subr.bf16.mxu0 %v790
        %1015 = vmatpush1.bf16.msra.mxu0 %v789
        %1016 = vmatprep.subr.bf16.mxu0 %v794
        %1017 = vmatpush1.bf16.msra.mxu0 %v793
        %1018 = vmatprep.subr.bf16.mxu0 %v798
        %1019 = vmatpush1.bf16.msra.mxu0 %v797
        %1020 = vmatprep.subr.bf16.mxu0 %v802
        %1021 = vmatpush1.bf16.msra.mxu0 %v801
        %1022 = vmatprep.subr.bf16.mxu0 %v806
        %1023 = vmatpush1.bf16.msra.mxu0 %v805
        %1024 = vmatprep.subr.bf16.mxu0 %v810
        %1025 = vmatpush1.bf16.msra.mxu0 %v809
        %1026 = vmatprep.subr.bf16.mxu0 %v814
        %1027 = vmatpush1.bf16.msra.mxu0 %v813
        %1028 = vmatprep.subr.bf16.mxu0 0
        %1029 = vmatpush1.bf16.msra.mxu0 0
        %1030 = vmatprep.subr.bf16.mxu0 0
        %1031 = vmatpush1.bf16.msra.mxu0 0
        %1032 = vmatprep.subr.bf16.mxu0 0
        %1033 = vmatpush1.bf16.msra.mxu0 0
        %1034 = vmatprep.subr.bf16.mxu0 0
        %1035 = vmatpush1.bf16.msra.mxu0 0
        %1036 = vmatprep.subr.bf16.mxu0 0
        %1037 = vmatpush1.bf16.msra.mxu0 0
        %1038 = vmatprep.subr.bf16.mxu0 0
        %1039 = vmatpush1.bf16.msra.mxu0 0
        %1040 = vmatprep.subr.bf16.mxu0 0
        %1041 = vmatpush1.bf16.msra.mxu0 0
        %1042 = vmatprep.subr.bf16.mxu0 0
        %1043 = vmatpush1.bf16.msra.mxu0 0
        %1044 = vmatprep.mubr.bf16.mxu0 0
        %1045 = vmatmul.mubr.bf16.gmra.mrb[0].mxu0 %v1011
        %v1046 = vpop.f32.mrb[0].mxu0
        %v1047 = vadd.f32 0.0, %v1046
        %v1048 = vpop.f32.mrb[0].mxu0
        %v1049 = vadd.f32 0.0, %v1048
        %v1050 = vpop.f32.mrb[0].mxu0
        %v1051 = vadd.f32 0.0, %v1050
        %v1052 = vpop.f32.mrb[0].mxu0
        %v1053 = vadd.f32 0.0, %v1052
        %1054 = vdwg.mxu0
        %1055 = vmatprep.subr.bf16.mxu0 %v788
        %1056 = vmatpush1.bf16.msra.mxu0 %v787
        %1057 = vmatprep.subr.bf16.mxu0 %v792
        %1058 = vmatpush1.bf16.msra.mxu0 %v791
        %1059 = vmatprep.subr.bf16.mxu0 %v796
        %1060 = vmatpush1.bf16.msra.mxu0 %v795
        %1061 = vmatprep.subr.bf16.mxu0 %v800
        %1062 = vmatpush1.bf16.msra.mxu0 %v799
        %1063 = vmatprep.subr.bf16.mxu0 %v804
        %1064 = vmatpush1.bf16.msra.mxu0 %v803
        %1065 = vmatprep.subr.bf16.mxu0 %v808
        %1066 = vmatpush1.bf16.msra.mxu0 %v807
        %1067 = vmatprep.subr.bf16.mxu0 %v812
        %1068 = vmatpush1.bf16.msra.mxu0 %v811
        %1069 = vmatprep.subr.bf16.mxu0 %v816
        %1070 = vmatpush1.bf16.msra.mxu0 %v815
        %1071 = vmatprep.subr.bf16.mxu0 0
        %1072 = vmatpush1.bf16.msra.mxu0 0
        %1073 = vmatprep.subr.bf16.mxu0 0
        %1074 = vmatpush1.bf16.msra.mxu0 0
        %1075 = vmatprep.subr.bf16.mxu0 0
        %1076 = vmatpush1.bf16.msra.mxu0 0
        %1077 = vmatprep.subr.bf16.mxu0 0
        %1078 = vmatpush1.bf16.msra.mxu0 0
        %1079 = vmatprep.subr.bf16.mxu0 0
        %1080 = vmatpush1.bf16.msra.mxu0 0
        %1081 = vmatprep.subr.bf16.mxu0 0
        %1082 = vmatpush1.bf16.msra.mxu0 0
        %1083 = vmatprep.subr.bf16.mxu0 0
        %1084 = vmatpush1.bf16.msra.mxu0 0
        %1085 = vmatprep.subr.bf16.mxu0 0
        %1086 = vmatpush1.bf16.msra.mxu0 0
        %1087 = vmatprep.mubr.bf16.mxu0 0
        %1088 = vmatmul.mubr.bf16.gmra.mrb[0].mxu0 %v1011
        %v1089 = vpop.f32.mrb[0].mxu0
        %v1090 = vadd.f32 0.0, %v1089
        %v1091 = vpop.f32.mrb[0].mxu0
        %v1092 = vadd.f32 0.0, %v1091
        %v1093 = vpop.f32.mrb[0].mxu0
        %v1094 = vadd.f32 0.0, %v1093
        %v1095 = vpop.f32.mrb[0].mxu0
        %v1096 = vadd.f32 0.0, %v1095
        %1097 = vdwg.mxu0
        %v1098 = vadd.f32 %v1003, %v1047
        %v1099 = vadd.f32 %v1004, %v1049
        %v1100 = vadd.f32 %v1005, %v1090
        %v1101 = vadd.f32 %v1006, %v1092
        %v1102 = vadd.f32 %v1007, %v1051
        %v1103 = vadd.f32 %v1008, %v1053
        %v1104 = vadd.f32 %v1009, %v1094
        %v1105 = vadd.f32 %v1010, %v1096
        %v1106 = vmul.f32 %v1098, 0.5
        %v1107 = vmul.f32 %v1102, 0.5
        %v1108 = vtanh.pop %v1106
        %v1109 = vtanh.pop %v1107
        %v1110 = vmul.f32 %v1108, 0.5
        %v1111 = vmul.f32 %v1109, 0.5
        %v1112 = vadd.f32 %v1110, 0.5
        %v1113 = vadd.f32 %v1111, 0.5
        %v1114 = vmul.f32 %v1099, 0.5
        %v1115 = vmul.f32 %v1103, 0.5
        %v1116 = vtanh.pop %v1114
        %v1117 = vtanh.pop %v1115
        %v1118 = vmul.f32 %v1116, 0.5
        %v1119 = vmul.f32 %v1117, 0.5
        %v1120 = vadd.f32 %v1118, 0.5
        %v1121 = vadd.f32 %v1119, 0.5
        %v1122 = vtanh.pop %v1100
        %v1123 = vtanh.pop %v1104
        %v1124 = vmul.f32 %v1101, 0.5
        %v1125 = vmul.f32 %v1105, 0.5
        %v1126 = vtanh.pop %v1124
        %v1127 = vtanh.pop %v1125
        %v1128 = vmul.f32 %v1126, 0.5
        %v1129 = vmul.f32 %v1127, 0.5
        %v1130 = vadd.f32 %v1128, 0.5
        %v1131 = vadd.f32 %v1129, 0.5
        %v1132 = vmul.f32 %v1120, %v994
        %v1133 = vmul.f32 %v1121, %v995
        %v1134 = vmul.f32 %v1112, %v1122
        %v1135 = vmul.f32 %v1113, %v1123
        %v1136 = vadd.f32 %v1132, %v1134
        %v1137 = vadd.f32 %v1133, %v1135
        %v1138 = vtanh.pop %v1136
        %v1139 = vtanh.pop %v1137
        %v1140 = vmul.f32 %v1130, %v1138
        %v1141 = vmul.f32 %v1131, %v1139
        %s1142 = sadd.s32 %s269, 1
        %v1143 = vstv %s1142
        %vm1144 = vcmp.lt.s32.totalorder %v1143, %v635
        %vm1145 = vcmp.lt.s32.totalorder %v1143, %v636
        %v1146 = vsel %vm1144, 1, 0
        %v1147 = vsel %vm1145, 1, 0
        %1148 = vset.pattern.permute.xlu0 0
        %1149 = vperm.xlu0 %1148, %v1146
        %v1150 = vpop.permute.xlu0 %1149
        %1151 = vset.pattern.permute.xlu0 0
        %1152 = vperm.xlu0 %1151, %v1147
        %v1153 = vpop.permute.xlu0 %1152
        %vm1154 = vcmp.eq.s32.totalorder %v1150, 1
        %vm1155 = vcmp.eq.s32.totalorder %v1153, 1
        %v1156 = vsel %vm1154, %v1140, %v992
        %v1157 = vsel %vm1155, %v1141, %v993
        %v1158 = vsel %vm1154, %v1136, %v994
        %v1159 = vsel %vm1155, %v1137, %v995
        %1160 = vst [vmem:[#allocation3] sm:$0xff] %v1156
        %1161 = vst [vmem:[#allocation3 + $0x8] sm:$0xff] %v1157
        %1162 = vst [vmem:[#allocation4] sm:$0xff] %v1158
        %1163 = vst [vmem:[#allocation4 + $0x8] sm:$0xff] %v1159
      $region56: #{lstm_forward.3} parent=47 // pred_fallthru
        _
      %p1164 = scmp.eq.s32.totalorder %s20, 3
      // Predicated region
      $region57: #{lstm_forward.3} parent=47 // pred_check
        %p1165 = pneg %p1164
      $region58: #{lstm_forward.3} parent=47 // pred_check_branch
        %1167 = sbr.rel (%p1165) target = $region60
      $region59: #{lstm_forward.3} parent=47 // pred_region
        %v1168 = vld [vmem:[#allocation3] sm:$0xff]
        %v1169 = vld [vmem:[#allocation3 + $0x8] sm:$0xff]
        %v1170 = vpack.c.bf16 %v1169, %v1168
        %v1171 = vld [vmem:[%s6] sm:$0xf]
        %v1172 = vld [vmem:[%s6 + $0x4] sm:$0xf]
        %v1173 = vld [vmem:[%s6 + $0x8] sm:$0xf]
        %v1174 = vld [vmem:[%s6 + $0xc] sm:$0xf]
        %v1175 = vld [vmem:[%s6 + $0x10] sm:$0xf]
        %v1176 = vld [vmem:[%s6 + $0x14] sm:$0xf]
        %v1177 = vld [vmem:[%s6 + $0x18] sm:$0xf]
        %v1178 = vld [vmem:[%s6 + $0x1c] sm:$0xf]
        %v1179 = vld [vmem:[%s6 + $0x20] sm:$0xf]
        %v1180 = vld [vmem:[%s6 + $0x24] sm:$0xf]
        %v1181 = vld [vmem:[%s6 + $0x28] sm:$0xf]
        %v1182 = vld [vmem:[%s6 + $0x2c] sm:$0xf]
        %v1183 = vld [vmem:[%s6 + $0x30] sm:$0xf]
        %v1184 = vld [vmem:[%s6 + $0x34] sm:$0xf]
        %v1185 = vld [vmem:[%s6 + $0x38] sm:$0xf]
        %v1186 = vld [vmem:[%s6 + $0x3c] sm:$0xf]
        %v1187 = vld [vmem:[%s7] sm:$0x1]
        %v1189 = vlaneseq
        %v1190 = vshrl.u32 %v1189, 7
        %v1191 = vsub.s32 0, %v1190
        %v1192 = vrot.slane %v1187, %v1191
        %v1210 = vunpack.c.l.b16 %v1171
        %v1211 = vunpack.c.l.b16 %v1172
        %v1212 = vunpack.c.l.b16 %v1173
        %v1213 = vunpack.c.l.b16 %v1174
        %v1214 = vunpack.c.l.b16 %v1175
        %v1215 = vunpack.c.l.b16 %v1176
        %v1216 = vunpack.c.l.b16 %v1177
        %v1217 = vunpack.c.l.b16 %v1178
        %v1218 = vunpack.c.l.b16 %v1179
        %v1219 = vunpack.c.l.b16 %v1180
        %v1220 = vunpack.c.l.b16 %v1181
        %v1221 = vunpack.c.l.b16 %v1182
        %v1222 = vunpack.c.l.b16 %v1183
        %v1223 = vunpack.c.l.b16 %v1184
        %v1224 = vunpack.c.l.b16 %v1185
        %v1225 = vunpack.c.l.b16 %v1186
        %v1226 = vpack.c.b16 %v1211, %v1210
        %v1227 = vpack.c.b16 %v1213, %v1212
        %v1228 = vpack.c.b16 %v1215, %v1214
        %v1229 = vpack.c.b16 %v1217, %v1216
        %v1230 = vpack.c.b16 %v1219, %v1218
        %v1231 = vpack.c.b16 %v1221, %v1220
        %v1232 = vpack.c.b16 %v1223, %v1222
        %v1233 = vpack.c.b16 %v1225, %v1224
        %1242 = vmatprep.subr.bf16.mxu0 0
        %1243 = vmatpush1.bf16.msra.mxu0 %v1226
        %1244 = vmatprep.subr.bf16.mxu0 0
        %1245 = vmatpush1.bf16.msra.mxu0 %v1227
        %1246 = vmatprep.subr.bf16.mxu0 0
        %1247 = vmatpush1.bf16.msra.mxu0 %v1228
        %1248 = vmatprep.subr.bf16.mxu0 0
        %1249 = vmatpush1.bf16.msra.mxu0 %v1229
        %1250 = vmatprep.subr.bf16.mxu0 0
        %1251 = vmatpush1.bf16.msra.mxu0 %v1230
        %1252 = vmatprep.subr.bf16.mxu0 0
        %1253 = vmatpush1.bf16.msra.mxu0 %v1231
        %1254 = vmatprep.subr.bf16.mxu0 0
        %1255 = vmatpush1.bf16.msra.mxu0 %v1232
        %1256 = vmatprep.subr.bf16.mxu0 0
        %1257 = vmatpush1.bf16.msra.mxu0 %v1233
        %1258 = vmatprep.subr.bf16.mxu0 0
        %1259 = vmatpush1.bf16.msra.mxu0 0
        %1260 = vmatprep.subr.bf16.mxu0 0
        %1261 = vmatpush1.bf16.msra.mxu0 0
        %1262 = vmatprep.subr.bf16.mxu0 0
        %1263 = vmatpush1.bf16.msra.mxu0 0
        %1264 = vmatprep.subr.bf16.mxu0 0
        %1265 = vmatpush1.bf16.msra.mxu0 0
        %1266 = vmatprep.subr.bf16.mxu0 0
        %1267 = vmatpush1.bf16.msra.mxu0 0
        %1268 = vmatprep.subr.bf16.mxu0 0
        %1269 = vmatpush1.bf16.msra.mxu0 0
        %1270 = vmatprep.subr.bf16.mxu0 0
        %1271 = vmatpush1.bf16.msra.mxu0 0
        %1272 = vmatprep.subr.bf16.mxu0 0
        %1273 = vmatpush1.bf16.msra.mxu0 0
        %1274 = vmatprep.mubr.bf16.mxu0 0
        %1275 = vmatmul.mubr.bf16.gmra.mrb[0].mxu0 %v1170
        %v1276 = vpop.f32.mrb[0].mxu0
        %v1277 = vadd.f32 %v1192, %v1276
        %v1278 = vpop.f32.mrb[0].mxu0
        %v1279 = vpop.f32.mrb[0].mxu0
        %v1280 = vadd.f32 %v1192, %v1279
        %v1281 = vpop.f32.mrb[0].mxu0
        %1282 = vdwg.mxu0
        %1283 = vst [vmem:[%s8] sm:$0xff] %v1277
        %1284 = vst [vmem:[%s8 + $0x8] sm:$0xff] %v1280
      $region60: #{lstm_forward.3} parent=47 // pred_fallthru
        _
      // Predicated region
      $region61: #{lstm_forward.3} parent=47 // pred_check
        %p1285 = pneg %p185
      $region62: #{lstm_forward.3} parent=47 // pred_check_branch
        %1287 = sbr.rel (%p1285) target = $region64
      $region63: #{lstm_forward.3} parent=47 // pred_region
        _
      $region64: #{lstm_forward.3} parent=47 // pred_fallthru
        _
      // Predicated region
      $region65: #{lstm_forward.3} parent=47 // pred_check
        %p1288 = pneg %p185
      $region66: #{lstm_forward.3} parent=47 // pred_check_branch
        %1290 = sbr.rel (%p1288) target = $region68
      $region67: #{lstm_forward.3} parent=47 // pred_region
        _
      $region68: #{lstm_forward.3} parent=47 // pred_fallthru
        _
    $region48: #{lstm_forward.3} parent=5 // pred_fallthru
      _
    %p1291 = scmp.le.s32.totalorder 2, %s15
    // Predicated region
    $region69: #{lstm_forward.3} parent=5 // pred_check
      %p1292 = pneg %p1291
    $region70: #{lstm_forward.3} parent=5 // pred_check_branch
      %1294 = sbr.rel (%p1292) target = $region72
    $region71: #{lstm_forward.3} parent=5 // pred_region
      %s1295 = ssub.s32 %s15, 2
    $region72: #{lstm_forward.3} parent=5 // pred_fallthru
      _
  $region6: #{lstm_forward.3} parent=0 // loop_footer
    %s19 = sadd.s32 1, %s15
  $region7: #{lstm_forward.3} parent=0 // loop_footer_branch
    %14 = sbr.rel target = $region3
  $region8: #{lstm_forward.3} parent=0 // loop_exit
    _

</llo_original>
